<compile_context>
chip_gen: v6e
topology: v6e:2x2x1
jax: 0.10.0
libtpu: 0.0.40
codegen_flags: <defaults>
</compile_context>

<pallas_src>
import functools
import math

import jax
import jax.numpy as jnp
from jax.experimental import pallas as pl
from jax.experimental.pallas import tpu as pltpu

# Module constants (from figure.py)
N1 = 320
N2 = 320
Nc = 16
factor = 8
reso = 4
snr = 3
SIGMA = 0.12 * math.sqrt(8) / snr

# Analytic mask: constant value inside a centered window, zero outside.
_WEIGHT = factor * N1 / (N1 - 32 * reso) * N2 / (N2 - 32 * reso)
CENTER_VAL = 1.0 / math.sqrt(_WEIGHT)          # mask value inside the window
R0, R1 = 16 * reso, N1 - 16 * reso             # window rows    [64, 256)
C0, C1 = 16 * reso, N2 - 16 * reso             # window columns [64, 256)
WIN_R = R1 - R0                                # 192  (multiple of 8)
LANE = 2 * N2                                  # 640  (flattened real/imag, 5*128)
L0, L1 = 2 * C0, 2 * C1                        # window lanes [128, 512)
WIN_L = L1 - L0                                # 384  (multiple of 128)


def _zero_complement(o_ref):
    """Zero only the four rectangles outside the window (no double write)."""
    blk = o_ref.shape[0]
    dt = o_ref.dtype
    o_ref[:, :R0, :] = jnp.zeros((blk, R0, LANE), dt)
    o_ref[:, R1:, :] = jnp.zeros((blk, N1 - R1, LANE), dt)
    o_ref[:, R0:R1, :L0] = jnp.zeros((blk, WIN_R, L0), dt)
    o_ref[:, R0:R1, L1:] = jnp.zeros((blk, WIN_R, LANE - L1), dt)


def _window_dma_kernel(x_hbm, n_ref, o_ref, xwin, sem, *, blk, cs):
    """out = 0 outside the window; kspace + cs*noise inside.

    kspace stays in HBM (pl.ANY); only the (blk, 192, 384) window slice is
    DMA'd per grid step (1536 B contiguous per row).  The complement zero
    stores run while that DMA is in flight.
    """
    b = pl.program_id(0)
    cp = pltpu.make_async_copy(
        x_hbm.at[pl.ds(b * blk, blk), R0:R1, L0:L1], xwin, sem)
    cp.start()
    _zero_complement(o_ref)                    # overlaps with the window DMA
    cp.wait()
    o_ref[:, R0:R1, L0:L1] = xwin[...] + cs * n_ref[...]


def _blocked_kernel(x_ref, n_ref, o_ref, *, cs):
    """Fallback: full kspace block auto-pipelined (no manual DMA)."""
    _zero_complement(o_ref)
    o_ref[:, R0:R1, L0:L1] = x_ref[:, R0:R1, L0:L1] + cs * n_ref[...]


def sample_opt_forward(kspace, sigma=SIGMA, *, seed=0, noise=None, blk=None):
    """kspace: (B, Nc, N1, N2, 2) float32.

    If `noise` (same shape, standard normal) is given, it is used (exact match
    with the PyTorch formula).  Otherwise window-only standard-normal noise is
    drawn from jax.random with PRNGKey(seed).
    """
    B, C, H, W, T = kspace.shape
    assert (H, W, T) == (N1, N2, 2) and C == Nc
    BC = B * C
    if blk is None:
        # blk=4 -> fewest grid steps (best for v5e/v6e); blk=2 gives 4 steps
        # per TensorCore on v7x -- sweepable.
        blk = 4 if BC % 4 == 0 else (2 if BC % 2 == 0 else 1)
    assert BC % blk == 0
    cs = float(CENTER_VAL * sigma)             # fold mask value and sigma

    x = kspace.reshape(BC, H, LANE).astype(jnp.float32)

    if noise is None:
        nz_win = jax.random.normal(
            jax.random.PRNGKey(seed), (BC, WIN_R, WIN_L), dtype=jnp.float32)
    else:
        nz_win = (noise.reshape(BC, H, W, 2)[:, R0:R1, C0:C1, :]
                  .reshape(BC, WIN_R, WIN_L).astype(jnp.float32))

    out_shape = jax.ShapeDtypeStruct((BC, H, LANE), jnp.float32)
    noise_spec = pl.BlockSpec((blk, WIN_R, WIN_L), lambda b: (b, 0, 0))
    out_spec = pl.BlockSpec((blk, H, LANE), lambda b: (b, 0, 0))

    win_bytes = BC * WIN_R * WIN_L * 4
    full_bytes = BC * H * LANE * 4
    flops = 2 * BC * WIN_R * WIN_L

    def _call_window_dma():
        return pl.pallas_call(
            functools.partial(_window_dma_kernel, blk=blk, cs=cs),
            out_shape=out_shape,
            grid_spec=pltpu.PrefetchScalarGridSpec(
                num_scalar_prefetch=0,
                grid=(BC // blk,),
                in_specs=[pl.BlockSpec(memory_space=pl.ANY),   # kspace, raw HBM
                          noise_spec],
                out_specs=out_spec,
                scratch_shapes=[pltpu.VMEM((blk, WIN_R, WIN_L), jnp.float32),
                                pltpu.SemaphoreType.DMA],
            ),
            compiler_params=pltpu.CompilerParams(
                dimension_semantics=("parallel",)),
            cost_estimate=pl.CostEstimate(
                flops=flops, transcendentals=0,
                bytes_accessed=2 * win_bytes + full_bytes),
        )(x, nz_win)

    def _call_blocked():
        return pl.pallas_call(
            functools.partial(_blocked_kernel, cs=cs),
            out_shape=out_shape,
            grid_spec=pltpu.PrefetchScalarGridSpec(
                num_scalar_prefetch=0,
                grid=(BC // blk,),
                in_specs=[pl.BlockSpec((blk, H, LANE), lambda b: (b, 0, 0)),
                          noise_spec],
                out_specs=out_spec,
            ),
            compiler_params=pltpu.CompilerParams(
                dimension_semantics=("parallel",),
                vmem_limit_bytes=32 * 1024 * 1024),
            cost_estimate=pl.CostEstimate(
                flops=flops, transcendentals=0,
                bytes_accessed=win_bytes + 2 * full_bytes),
        )(x, nz_win)

    try:
        out = _call_window_dma()
    except Exception:
        # TODO(synk): backend could not lower the manual HBM->VMEM window DMA;
        # falling back to the plain auto-pipelined (full input read) kernel.
        out = _call_blocked()

    return out.reshape(B, C, H, W, T)


def reference_forward(kspace, noise, sigma=SIGMA):
    """Pure-JAX mirror of the PyTorch forward (host-provided standard-normal noise)."""
    weight = (factor * N1 / (N1 - 32 * reso) * N2 / (N2 - 32 * reso)) * jnp.ones(
        (N2 - 32 * reso,), dtype=jnp.float32)
    row = 1.0 / jnp.sqrt(weight)
    mask2d = jnp.zeros((N1, N2), dtype=jnp.float32)
    mask2d = mask2d.at[R0:R1, C0:C1].set(
        jnp.broadcast_to(row[None, :], (WIN_R, C1 - C0)))
    mask = mask2d[None, None, :, :, None]
    return jnp.where(mask > 0, kspace, 0.0) + mask * (sigma * noise)


if __name__ == "__main__":
    key = jax.random.PRNGKey(0)
    k_ks, k_nz = jax.random.split(key)
    B = 1  # N1, N2, Nc are fixed by the module constants
    kspace = jax.random.normal(k_ks, (B, Nc, N1, N2, 2), dtype=jnp.float32)

    # --- default path: window-only jax.random noise ---------------------------
    out = sample_opt_forward(kspace, seed=0)
    out = jax.block_until_ready(out)
    assert out.shape == kspace.shape and out.dtype == jnp.float32

    # Outside the window the output must be exactly zero.
    outside = out.at[:, :, R0:R1, C0:C1, :].set(0.0)
    assert bool(jnp.all(outside == 0.0))
    # Inside the window, (out - kspace)/(c*sigma) must look standard-normal.
    z = (out[:, :, R0:R1, C0:C1, :] - kspace[:, :, R0:R1, C0:C1, :]) / (CENTER_VAL * SIGMA)
    assert bool(jnp.all(jnp.isfinite(z)))
    assert abs(float(jnp.mean(z))) < 0.05
    assert 0.8 < float(jnp.std(z)) < 1.2

    # --- exact check vs the PyTorch formula using host-provided noise --------
    noise = jax.random.normal(k_nz, kspace.shape, dtype=jnp.float32)
    out2 = jax.block_until_ready(sample_opt_forward(kspace, noise=noise))
    ref = reference_forward(kspace, noise)
    assert jnp.allclose(out2, ref, atol=1e-5, rtol=1e-5)

    print("KERNEL_OK")
</pallas_src>

<mosaic_0001>
module attributes {stable_mosaic.version = 11 : i64} {
  func.func @_window_dma_kernel(%arg0: i32, %arg1: memref<16x320x640xf32, #tpu.memory_space<any>>, %arg2: memref<4x192x384xf32, #tpu.memory_space<vmem>>, %arg3: memref<4x320x640xf32, #tpu.memory_space<vmem>>, %arg4: memref<4x192x384xf32, #tpu.memory_space<vmem>>, %arg5: memref<!tpu.dma_semaphore, #tpu.memory_space<semaphore_mem>>) attributes {dimension_semantics = [#tpu.dimension_semantics<parallel>], iteration_bounds = array<i64: 4>, scalar_prefetch = 0 : i64, scratch_operands = 2 : i64, tpu.core_type = #tpu.core_type<tc>, window_params = [{}, {transform_indices = @transform_1, window_bounds = array<i64: 4, 192, 384>}, {transform_indices = @transform_2, window_bounds = array<i64: 4, 320, 640>}]} {
    %c4_i32 = arith.constant 4 : i32
    %0 = arith.muli %arg0, %c4_i32 : i32
    %c64_i32 = arith.constant 64 : i32
    %c128_i32 = arith.constant 128 : i32
    %1 = tpu.memref_slice %arg1[%0, %c64_i32, %c128_i32] : memref<16x320x640xf32, #tpu.memory_space<any>> -> memref<4x192x384xf32, #tpu.memory_space<any>>
    tpu.enqueue_dma source(%1 : memref<4x192x384xf32, #tpu.memory_space<any>>) target(%arg4 : memref<4x192x384xf32, #tpu.memory_space<vmem>>) target_semaphore(%arg5 : memref<!tpu.dma_semaphore, #tpu.memory_space<semaphore_mem>>)
    %cst = arith.constant 0.000000e+00 : f32
    %2 = vector.broadcast %cst : f32 to vector<4x64x640xf32>
    %c0 = arith.constant 0 : index
    %c0_0 = arith.constant 0 : index
    %c0_1 = arith.constant 0 : index
    %3 = vector.load %arg3[%c0, %c0_0, %c0_1] : memref<4x320x640xf32, #tpu.memory_space<vmem>>, vector<4x64x640xf32>
    tpu.vector_store %arg3[%c0, %c0_0, %c0_1], %2 {strides = array<i32>} : memref<4x320x640xf32, #tpu.memory_space<vmem>>, vector<4x64x640xf32>,
    %cst_2 = arith.constant 0.000000e+00 : f32
    %4 = vector.broadcast %cst_2 : f32 to vector<4x64x640xf32>
    %c0_3 = arith.constant 0 : index
    %c256 = arith.constant 256 : index
    %c0_4 = arith.constant 0 : index
    %5 = vector.load %arg3[%c0_3, %c256, %c0_4] : memref<4x320x640xf32, #tpu.memory_space<vmem>>, vector<4x64x640xf32>
    tpu.vector_store %arg3[%c0_3, %c256, %c0_4], %4 {strides = array<i32>} : memref<4x320x640xf32, #tpu.memory_space<vmem>>, vector<4x64x640xf32>,
    %cst_5 = arith.constant 0.000000e+00 : f32
    %6 = vector.broadcast %cst_5 : f32 to vector<4x192x128xf32>
    %c0_6 = arith.constant 0 : index
    %c64 = arith.constant 64 : index
    %c0_7 = arith.constant 0 : index
    %7 = vector.load %arg3[%c0_6, %c64, %c0_7] : memref<4x320x640xf32, #tpu.memory_space<vmem>>, vector<4x192x128xf32>
    tpu.vector_store %arg3[%c0_6, %c64, %c0_7], %6 {strides = array<i32>} : memref<4x320x640xf32, #tpu.memory_space<vmem>>, vector<4x192x128xf32>,
    %cst_8 = arith.constant 0.000000e+00 : f32
    %8 = vector.broadcast %cst_8 : f32 to vector<4x192x128xf32>
    %c0_9 = arith.constant 0 : index
    %c64_10 = arith.constant 64 : index
    %c512 = arith.constant 512 : index
    %9 = vector.load %arg3[%c0_9, %c64_10, %c512] : memref<4x320x640xf32, #tpu.memory_space<vmem>>, vector<4x192x128xf32>
    tpu.vector_store %arg3[%c0_9, %c64_10, %c512], %8 {strides = array<i32>} : memref<4x320x640xf32, #tpu.memory_space<vmem>>, vector<4x192x128xf32>,
    %c64_i32_11 = arith.constant 64 : i32
    %c128_i32_12 = arith.constant 128 : i32
    %10 = tpu.memref_slice %arg1[%0, %c64_i32_11, %c128_i32_12] : memref<16x320x640xf32, #tpu.memory_space<any>> -> memref<4x192x384xf32, #tpu.memory_space<any>>
    tpu.wait_dma2 semaphore(%arg5 : memref<!tpu.dma_semaphore, #tpu.memory_space<semaphore_mem>>) src(%10 : memref<4x192x384xf32, #tpu.memory_space<any>>) dst(%arg4 : memref<4x192x384xf32, #tpu.memory_space<vmem>>)
    %c0_13 = arith.constant 0 : index
    %c0_14 = arith.constant 0 : index
    %c0_15 = arith.constant 0 : index
    %11 = vector.load %arg4[%c0_13, %c0_14, %c0_15] : memref<4x192x384xf32, #tpu.memory_space<vmem>>, vector<4x192x384xf32>
    %c0_16 = arith.constant 0 : index
    %c0_17 = arith.constant 0 : index
    %c0_18 = arith.constant 0 : index
    %12 = vector.load %arg2[%c0_16, %c0_17, %c0_18] : memref<4x192x384xf32, #tpu.memory_space<vmem>>, vector<4x192x384xf32>
    %cst_19 = arith.constant 2.400000e-02 : f32
    %13 = vector.broadcast %cst_19 : f32 to vector<4x192x384xf32>
    %14 = arith.mulf %13, %12 : vector<4x192x384xf32>
    %15 = arith.addf %11, %14 : vector<4x192x384xf32>
    %c0_20 = arith.constant 0 : index
    %c64_21 = arith.constant 64 : index
    %c128 = arith.constant 128 : index
    %16 = vector.load %arg3[%c0_20, %c64_21, %c128] : memref<4x320x640xf32, #tpu.memory_space<vmem>>, vector<4x192x384xf32>
    tpu.vector_store %arg3[%c0_20, %c64_21, %c128], %15 {strides = array<i32>} : memref<4x320x640xf32, #tpu.memory_space<vmem>>, vector<4x192x384xf32>,
    return
  }
  func.func @transform_1(%arg0: i32) -> (i32, i32, i32) {
    %c0_i32 = arith.constant 0 : i32
    %c0_i32_0 = arith.constant 0 : i32
    %c0_i32_1 = arith.constant 0 : i32
    return %arg0, %c0_i32, %c0_i32_0 : i32, i32, i32
  }
  func.func @transform_2(%arg0: i32) -> (i32, i32, i32) {
    %c0_i32 = arith.constant 0 : i32
    %c0_i32_0 = arith.constant 0 : i32
    %c0_i32_1 = arith.constant 0 : i32
    return %arg0, %c0_i32, %c0_i32_0 : i32, i32, i32
  }
}

module attributes {stable_mosaic.version = 11 : i64} {
  func.func @_blocked_kernel(%arg0: i32, %arg1: memref<4x320x640xf32, #tpu.memory_space<vmem>>, %arg2: memref<4x192x384xf32, #tpu.memory_space<vmem>>, %arg3: memref<4x320x640xf32, #tpu.memory_space<vmem>>) attributes {dimension_semantics = [#tpu.dimension_semantics<parallel>], iteration_bounds = array<i64: 4>, scalar_prefetch = 0 : i64, scratch_operands = 0 : i64, tpu.core_type = #tpu.core_type<tc>, window_params = [{transform_indices = @transform_0, window_bounds = array<i64: 4, 320, 640>}, {transform_indices = @transform_1, window_bounds = array<i64: 4, 192, 384>}, {transform_indices = @transform_2, window_bounds = array<i64: 4, 320, 640>}]} {
    %cst = arith.constant 0.000000e+00 : f32
    %0 = vector.broadcast %cst : f32 to vector<4x64x640xf32>
    %c0 = arith.constant 0 : index
    %c0_0 = arith.constant 0 : index
    %c0_1 = arith.constant 0 : index
    %1 = vector.load %arg3[%c0, %c0_0, %c0_1] : memref<4x320x640xf32, #tpu.memory_space<vmem>>, vector<4x64x640xf32>
    tpu.vector_store %arg3[%c0, %c0_0, %c0_1], %0 {strides = array<i32>} : memref<4x320x640xf32, #tpu.memory_space<vmem>>, vector<4x64x640xf32>,
    %cst_2 = arith.constant 0.000000e+00 : f32
    %2 = vector.broadcast %cst_2 : f32 to vector<4x64x640xf32>
    %c0_3 = arith.constant 0 : index
    %c256 = arith.constant 256 : index
    %c0_4 = arith.constant 0 : index
    %3 = vector.load %arg3[%c0_3, %c256, %c0_4] : memref<4x320x640xf32, #tpu.memory_space<vmem>>, vector<4x64x640xf32>
    tpu.vector_store %arg3[%c0_3, %c256, %c0_4], %2 {strides = array<i32>} : memref<4x320x640xf32, #tpu.memory_space<vmem>>, vector<4x64x640xf32>,
    %cst_5 = arith.constant 0.000000e+00 : f32
    %4 = vector.broadcast %cst_5 : f32 to vector<4x192x128xf32>
    %c0_6 = arith.constant 0 : index
    %c64 = arith.constant 64 : index
    %c0_7 = arith.constant 0 : index
    %5 = vector.load %arg3[%c0_6, %c64, %c0_7] : memref<4x320x640xf32, #tpu.memory_space<vmem>>, vector<4x192x128xf32>
    tpu.vector_store %arg3[%c0_6, %c64, %c0_7], %4 {strides = array<i32>} : memref<4x320x640xf32, #tpu.memory_space<vmem>>, vector<4x192x128xf32>,
    %cst_8 = arith.constant 0.000000e+00 : f32
    %6 = vector.broadcast %cst_8 : f32 to vector<4x192x128xf32>
    %c0_9 = arith.constant 0 : index
    %c64_10 = arith.constant 64 : index
    %c512 = arith.constant 512 : index
    %7 = vector.load %arg3[%c0_9, %c64_10, %c512] : memref<4x320x640xf32, #tpu.memory_space<vmem>>, vector<4x192x128xf32>
    tpu.vector_store %arg3[%c0_9, %c64_10, %c512], %6 {strides = array<i32>} : memref<4x320x640xf32, #tpu.memory_space<vmem>>, vector<4x192x128xf32>,
    %c0_11 = arith.constant 0 : index
    %c64_12 = arith.constant 64 : index
    %c128 = arith.constant 128 : index
    %8 = vector.load %arg1[%c0_11, %c64_12, %c128] : memref<4x320x640xf32, #tpu.memory_space<vmem>>, vector<4x192x384xf32>
    %c0_13 = arith.constant 0 : index
    %c0_14 = arith.constant 0 : index
    %c0_15 = arith.constant 0 : index
    %9 = vector.load %arg2[%c0_13, %c0_14, %c0_15] : memref<4x192x384xf32, #tpu.memory_space<vmem>>, vector<4x192x384xf32>
    %cst_16 = arith.constant 2.400000e-02 : f32
    %10 = vector.broadcast %cst_16 : f32 to vector<4x192x384xf32>
    %11 = arith.mulf %10, %9 : vector<4x192x384xf32>
    %12 = arith.addf %8, %11 : vector<4x192x384xf32>
    %c0_17 = arith.constant 0 : index
    %c64_18 = arith.constant 64 : index
    %c128_19 = arith.constant 128 : index
    %13 = vector.load %arg3[%c0_17, %c64_18, %c128_19] : memref<4x320x640xf32, #tpu.memory_space<vmem>>, vector<4x192x384xf32>
    tpu.vector_store %arg3[%c0_17, %c64_18, %c128_19], %12 {strides = array<i32>} : memref<4x320x640xf32, #tpu.memory_space<vmem>>, vector<4x192x384xf32>,
    return
  }
  func.func @transform_0(%arg0: i32) -> (i32, i32, i32) {
    %c0_i32 = arith.constant 0 : i32
    %c0_i32_0 = arith.constant 0 : i32
    %c0_i32_1 = arith.constant 0 : i32
    return %arg0, %c0_i32, %c0_i32_0 : i32, i32, i32
  }
  func.func @transform_1(%arg0: i32) -> (i32, i32, i32) {
    %c0_i32 = arith.constant 0 : i32
    %c0_i32_0 = arith.constant 0 : i32
    %c0_i32_1 = arith.constant 0 : i32
    return %arg0, %c0_i32, %c0_i32_0 : i32, i32, i32
  }
  func.func @transform_2(%arg0: i32) -> (i32, i32, i32) {
    %c0_i32 = arith.constant 0 : i32
    %c0_i32_0 = arith.constant 0 : i32
    %c0_i32_1 = arith.constant 0 : i32
    return %arg0, %c0_i32, %c0_i32_0 : i32, i32, i32
  }
}

</mosaic_0001>

<llo_original>
// kernel: tpu_custom_call.1
$region0: #{tpu_custom_call.1}
  #allocation0 [shape = 'u32[]', space=smem, size = 0x4, offset = 0x4, fixed_abs, tag = 'smem constant byte address 0x4 - core index']
  #allocation1 [shape = 'u32[144,128]{1,0:T(1,128)}', space=vmem, size = 0x12000, scoped, tag = 'internal scratch']
  #allocation2 [shape = 'f32[4,192,384]{2,1,0:T(8,128)}', space=vmem, size = 0x120000, scoped, tag = 'scratch operand']
  #allocation3 [shape = 's32[1]{0}', space=sflag, size = 0x4, scoped, tag = 'scratch operand']
  #allocation8 [shape = 's32[]', space=sflag, size = 0x4, offset = 0, fixed_abs, tag = 'sflag constant byte address 0x0 - dummy sync flag']
  %s0 = inlined_call_operand.hbm [shape: f32[16,320,640], index: 0, kind: input, shape index: {}]
  %s1 = inlined_call_operand.hbm [shape: f32[16,192,384], index: 1, kind: input, shape index: {}]
  %s2 = inlined_call_operand.hbm [shape: f32[16,320,640], index: 2, kind: output, shape index: {}]
  %s3 = sld [smem:[#allocation0]]
  $region41: #{tpu_custom_call.1} parent=0
    _
  %s5 = ssub.s32 1, %s3
  %s6 = scalar_select 0, %s5, %s3
  $region1: #{tpu_custom_call.1} parent=0
    #allocation4 [shape = 'u8[2359296]{0}', space=vmem, size = 0x240000, scoped, tag = 'input window, operand 1']
    #allocation5 [shape = 's32[2]{0}', space=sflag, size = 0x8, scoped, tag = 'scoped memory for tpu_custom_call.1']
    #allocation6 [shape = 's32[2]{0}', space=sflag, size = 0x8, scoped, tag = 'scoped memory for tpu_custom_call.1']
    #allocation7 [shape = 'u8[6553600]{0}', space=vmem, size = 0x640000, scoped, tag = 'output window, operand 0']
    %7 = vsyncpa [#allocation5], 0
    %s8 = scalar_lea.sflag [#allocation5], 1
    %9 = vsyncpa %s8, 0
    %10 = vsyncpa [#allocation6], 0
    %s11 = scalar_lea.sflag [#allocation6], 1
    %12 = vsyncpa %s11, 0
    loop: start=0, step=1, limit=6
    $region2: #{tpu_custom_call.1} parent=1 // loop_pre_header
      _
    $region3: #{tpu_custom_call.1} parent=1 // loop_header
      %s14 = sphi 0, %s18
      %p15 = scmp.ge.s32.totalorder %s14, 6
      %s24 = sphi 0, %s26
      %s27 = sphi 0, %s24
      %s28 = sphi 0, %s27
      %s44 = sphi 0, %s28
      %s50 = sphi 0, %s52
      %s53 = sphi 0, %s50
      %s54 = sphi 0, %s53
      %s70 = sphi 0, %s54
    $region4: #{tpu_custom_call.1} parent=1 // loop_header_branch
      %17 = sbr.rel (%p15) target = $region8
    $region5: #{tpu_custom_call.1} parent=1 // loop_body
      %s19 = ssub.s32 %s14, 1
      %s20 = ssub.s32 %s14, 2
      %s21 = sadd.s32 %s14, 1
      %s22 = ssub.s32 %s14, %s21
      %p23 = scmp.eq.s32.totalorder %s22, 0
      %s25 = sadd.s32 %s24, 1
      %s26 = scalar_select %p23, %s24, %s25
      %p29 = pneg %p23
      %p30 = scmp.eq.s32.totalorder %s14, 3
      %p31 = por %p29, %p30
      %p32 = scmp.ne.s32.totalorder %s24, %s27
      %p33 = scmp.eq.s32.totalorder %s14, 0
      %p34 = por %p32, %p33
      %p35 = scmp.ne.s32.totalorder %s24, %s27
      %p36 = scmp.eq.s32.totalorder %s19, 3
      %p37 = por %p35, %p36
      %p38 = scmp.ne.s32.totalorder %s27, %s28
      %p39 = scmp.eq.s32.totalorder %s19, 0
      %p40 = por %p38, %p39
      %p41 = scmp.ne.s32.totalorder %s27, %s28
      %p42 = scmp.eq.s32.totalorder %s20, 3
      %p43 = por %p41, %p42
      %p45 = scmp.ne.s32.totalorder %s28, %s44
      %p46 = scmp.eq.s32.totalorder %s20, 0
      %p47 = por %p45, %p46
      %s48 = ssub.s32 %s14, %s21
      %p49 = scmp.eq.s32.totalorder %s48, 0
      %s51 = sadd.s32 %s50, 1
      %s52 = scalar_select %p49, %s50, %s51
      %p55 = pneg %p49
      %p56 = scmp.eq.s32.totalorder %s14, 3
      %p57 = por %p55, %p56
      %p58 = scmp.ne.s32.totalorder %s50, %s53
      %p59 = scmp.eq.s32.totalorder %s14, 0
      %p60 = por %p58, %p59
      %p61 = scmp.ne.s32.totalorder %s50, %s53
      %p62 = scmp.eq.s32.totalorder %s19, 3
      %p63 = por %p61, %p62
      %p64 = scmp.ne.s32.totalorder %s53, %s54
      %p65 = scmp.eq.s32.totalorder %s19, 0
      %p66 = por %p64, %p65
      %p67 = scmp.ne.s32.totalorder %s53, %s54
      %p68 = scmp.eq.s32.totalorder %s20, 3
      %p69 = por %p67, %p68
      %p71 = scmp.ne.s32.totalorder %s54, %s70
      %p72 = scmp.eq.s32.totalorder %s20, 0
      %p73 = por %p71, %p72
      %p74 = scmp.le.s32.totalorder 1, %s14
      %p75 = scmp.lt.s32.totalorder %s14, 5
      %p76 = pnand %p74, %p75
      %p77 = pneg %p76
      // Predicated region
      $region9: #{tpu_custom_call.1} parent=5 // pred_check
        _
      $region10: #{tpu_custom_call.1} parent=5 // pred_check_branch
        %79 = sbr.rel (%p76) target = $region12
      $region11: #{tpu_custom_call.1} parent=5 // pred_region
        %s80 = ssub.s32 %s14, 1
      $region12: #{tpu_custom_call.1} parent=5 // pred_fallthru
        _
      %p81 = scmp.lt.s32.totalorder %s14, 4
      // Predicated region
      $region13: #{tpu_custom_call.1} parent=5 // pred_check
        %p82 = pneg %p81
      $region14: #{tpu_custom_call.1} parent=5 // pred_check_branch
        %84 = sbr.rel (%p82) target = $region16
      $region15: #{tpu_custom_call.1} parent=5 // pred_region
        // Predicated region
        $region17: #{tpu_custom_call.1} parent=15 // pred_check
          %p85 = pneg %p34
        $region18: #{tpu_custom_call.1} parent=15 // pred_check_branch
          %87 = sbr.rel (%p85) target = $region20
        $region19: #{tpu_custom_call.1} parent=15 // pred_region
          %s88 = sand.u32 %s24, 1
          %s89 = scalar_lea.sflag [#allocation5], %s88
          %s90 = sand.u32 %s24, 1
          %s91 = smul.addr %s90, 2304
          %s92 = scalar_lea.vmem [#allocation4], %s91
          %s93 = smul.u32 4, %s14
          %s95 = ssub.s32 36864, 36864
          %96 = vsyncadd %s89, %s95
          %s97 = smul.addr %s93, 72
          %s98 = smul.addr %s97, 128
          %s99 = scalar_lea.hbm %s1, %s98
          %s100 = sshll.u32 %s92, 4
          %s101 = int_to_ptr.vmem [resolvable:$true] %s100
          %106 = dma.hbm_to_vmem [thread:$0]  %s99, 36864, %s101, %s89, 384, 384, 24
        $region20: #{tpu_custom_call.1} parent=15 // pred_fallthru
          _
      $region16: #{tpu_custom_call.1} parent=5 // pred_fallthru
        _
      %p107 = scmp.le.s32.totalorder 1, %s14
      %p108 = scmp.lt.s32.totalorder %s14, 5
      %p109 = pnand %p107, %p108
      %p110 = pneg %p109
      // Predicated region
      $region21: #{tpu_custom_call.1} parent=5 // pred_check
        _
      $region22: #{tpu_custom_call.1} parent=5 // pred_check_branch
        %112 = sbr.rel (%p109) target = $region24
      $region23: #{tpu_custom_call.1} parent=5 // pred_region
        #allocation9 [shape = 'u32[6]{0}', space=smem, size = 0x18, scoped, tag = 'DMA stride descriptor']
        %s113 = ssub.s32 %s14, 1
        %s114 = sand.u32 %s27, 1
        %s115 = scalar_lea.sflag [#allocation5], %s114
        %s116 = sand.u32 %s27, 1
        %s117 = smul.addr %s116, 2304
        %s118 = scalar_lea.vmem [#allocation4], %s117
        // Predicated region
        $region25: #{tpu_custom_call.1} parent=23 // pred_check
          %p119 = pneg %p40
        $region26: #{tpu_custom_call.1} parent=23 // pred_check_branch
          %121 = sbr.rel (%p119) target = $region28
        $region27: #{tpu_custom_call.1} parent=23 // pred_region
          %122 = dma.done %s115, 36864
        $region28: #{tpu_custom_call.1} parent=23 // pred_fallthru
          _
        %s123 = sand.u32 %s27, 1
        %s124 = scalar_lea.sflag [#allocation5], %s123
        %s125 = sand.u32 %s27, 1
        %s126 = smul.addr %s125, 2304
        %s127 = scalar_lea.vmem [#allocation4], %s126
        %p128 = pneg %p40
        %p129 = pneg %p37
        %p130 = pneg %p66
        %p131 = pneg %p63
        %s132 = sand.u32 %s53, 1
        %s133 = scalar_lea.sflag [#allocation6], %s132
        %s134 = sand.u32 %s53, 1
        %s135 = smul.addr %s134, 6400
        %s136 = scalar_lea.vmem [#allocation7], %s135
        %s137 = smul.u32 4, %s19
        %s138 = smul.u32 4, %s19
        %s139 = smul.u32 %s19, 4
        %s140 = smul.u32 %s139, 200
        %s141 = sadd.s32 41, %s140
        %s142 = smul.addr %s141, 128
        %s143 = scalar_lea.hbm %s0, %s142
        %s145 = sshll.u32 1, 14
        %s146 = sxor.u32 4294967295, %s145
        %s148 = sld [smem:[#allocation0]]
        %s149 = sadd.s32 2, %s148
        %s151 = sshll.u32 7, 26
        %s152 = sxor.u32 4294967295, %s151
        %s153 = sand.u32 0, %s152
        %s154 = sshll.u32 %s149, 26
        %s155 = sor.u32 %s153, %s154
        %s156 = sshll.u32 [#allocation2], 4
        %s157 = int_to_ptr.vmem [resolvable:$true] %s156
        %160 = sst [smem:[#allocation9]] 25600
        %s161 = scalar_lea.smem [#allocation9], 1
        %162 = sst [smem:[%s161]] 9216
        %s163 = scalar_lea.smem [#allocation9], 2
        %164 = sst [smem:[%s163]] 24
        %s165 = scalar_lea.smem [#allocation9], 3
        %166 = sst [smem:[%s165]] 640
        %s167 = scalar_lea.smem [#allocation9], 4
        %168 = sst [smem:[%s167]] 384
        %s169 = scalar_lea.smem [#allocation9], 5
        %170 = sst [smem:[%s169]] 24
        %172 = dma.general %s143, 36864, %s157, [#allocation3], 131072, [#allocation9], %s155, 0
        %173 = vst [vmem:[%s136] sm:$0xff] 0.0
        %174 = vst [vmem:[%s136 + $0x8] sm:$0xff] 0.0
        %175 = vst [vmem:[%s136 + $0x10] sm:$0xff] 0.0
        %176 = vst [vmem:[%s136 + $0x18] sm:$0xff] 0.0
        %177 = vst [vmem:[%s136 + $0x20] sm:$0xff] 0.0
        %178 = vst [vmem:[%s136 + $0x28] sm:$0xff] 0.0
        %179 = vst [vmem:[%s136 + $0x30] sm:$0xff] 0.0
        %180 = vst [vmem:[%s136 + $0x38] sm:$0xff] 0.0
        %181 = vst [vmem:[%s136 + $0x40] sm:$0xff] 0.0
        %182 = vst [vmem:[%s136 + $0x48] sm:$0xff] 0.0
        %183 = vst [vmem:[%s136 + $0x50] sm:$0xff] 0.0
        %184 = vst [vmem:[%s136 + $0x58] sm:$0xff] 0.0
        %185 = vst [vmem:[%s136 + $0x60] sm:$0xff] 0.0
        %186 = vst [vmem:[%s136 + $0x68] sm:$0xff] 0.0
        %187 = vst [vmem:[%s136 + $0x70] sm:$0xff] 0.0
        %188 = vst [vmem:[%s136 + $0x78] sm:$0xff] 0.0
        %189 = vst [vmem:[%s136 + $0x80] sm:$0xff] 0.0
        %190 = vst [vmem:[%s136 + $0x88] sm:$0xff] 0.0
        %191 = vst [vmem:[%s136 + $0x90] sm:$0xff] 0.0
        %192 = vst [vmem:[%s136 + $0x98] sm:$0xff] 0.0
        %193 = vst [vmem:[%s136 + $0xa0] sm:$0xff] 0.0
        %194 = vst [vmem:[%s136 + $0xa8] sm:$0xff] 0.0
        %195 = vst [vmem:[%s136 + $0xb0] sm:$0xff] 0.0
        %196 = vst [vmem:[%s136 + $0xb8] sm:$0xff] 0.0
        %197 = vst [vmem:[%s136 + $0xc0] sm:$0xff] 0.0
        %198 = vst [vmem:[%s136 + $0xc8] sm:$0xff] 0.0
        %199 = vst [vmem:[%s136 + $0xd0] sm:$0xff] 0.0
        %200 = vst [vmem:[%s136 + $0xd8] sm:$0xff] 0.0
        %201 = vst [vmem:[%s136 + $0xe0] sm:$0xff] 0.0
        %202 = vst [vmem:[%s136 + $0xe8] sm:$0xff] 0.0
        %203 = vst [vmem:[%s136 + $0xf0] sm:$0xff] 0.0
        %204 = vst [vmem:[%s136 + $0xf8] sm:$0xff] 0.0
        %205 = vst [vmem:[%s136 + $0x100] sm:$0xff] 0.0
        %206 = vst [vmem:[%s136 + $0x108] sm:$0xff] 0.0
        %207 = vst [vmem:[%s136 + $0x110] sm:$0xff] 0.0
        %208 = vst [vmem:[%s136 + $0x118] sm:$0xff] 0.0
        %209 = vst [vmem:[%s136 + $0x120] sm:$0xff] 0.0
        %210 = vst [vmem:[%s136 + $0x128] sm:$0xff] 0.0
        %211 = vst [vmem:[%s136 + $0x130] sm:$0xff] 0.0
        %212 = vst [vmem:[%s136 + $0x138] sm:$0xff] 0.0
        %213 = vst [vmem:[%s136 + $0x640] sm:$0xff] 0.0
        %214 = vst [vmem:[%s136 + $0x648] sm:$0xff] 0.0
        %215 = vst [vmem:[%s136 + $0x650] sm:$0xff] 0.0
        %216 = vst [vmem:[%s136 + $0x658] sm:$0xff] 0.0
        %217 = vst [vmem:[%s136 + $0x660] sm:$0xff] 0.0
        %218 = vst [vmem:[%s136 + $0x668] sm:$0xff] 0.0
        %219 = vst [vmem:[%s136 + $0x670] sm:$0xff] 0.0
        %220 = vst [vmem:[%s136 + $0x678] sm:$0xff] 0.0
        %221 = vst [vmem:[%s136 + $0x680] sm:$0xff] 0.0
        %222 = vst [vmem:[%s136 + $0x688] sm:$0xff] 0.0
        %223 = vst [vmem:[%s136 + $0x690] sm:$0xff] 0.0
        %224 = vst [vmem:[%s136 + $0x698] sm:$0xff] 0.0
        %225 = vst [vmem:[%s136 + $0x6a0] sm:$0xff] 0.0
        %226 = vst [vmem:[%s136 + $0x6a8] sm:$0xff] 0.0
        %227 = vst [vmem:[%s136 + $0x6b0] sm:$0xff] 0.0
        %228 = vst [vmem:[%s136 + $0x6b8] sm:$0xff] 0.0
        %229 = vst [vmem:[%s136 + $0x6c0] sm:$0xff] 0.0
        %230 = vst [vmem:[%s136 + $0x6c8] sm:$0xff] 0.0
        %231 = vst [vmem:[%s136 + $0x6d0] sm:$0xff] 0.0
        %232 = vst [vmem:[%s136 + $0x6d8] sm:$0xff] 0.0
        %233 = vst [vmem:[%s136 + $0x6e0] sm:$0xff] 0.0
        %234 = vst [vmem:[%s136 + $0x6e8] sm:$0xff] 0.0
        %235 = vst [vmem:[%s136 + $0x6f0] sm:$0xff] 0.0
        %236 = vst [vmem:[%s136 + $0x6f8] sm:$0xff] 0.0
        %237 = vst [vmem:[%s136 + $0x700] sm:$0xff] 0.0
        %238 = vst [vmem:[%s136 + $0x708] sm:$0xff] 0.0
        %239 = vst [vmem:[%s136 + $0x710] sm:$0xff] 0.0
        %240 = vst [vmem:[%s136 + $0x718] sm:$0xff] 0.0
        %241 = vst [vmem:[%s136 + $0x720] sm:$0xff] 0.0
        %242 = vst [vmem:[%s136 + $0x728] sm:$0xff] 0.0
        %243 = vst [vmem:[%s136 + $0x730] sm:$0xff] 0.0
        %244 = vst [vmem:[%s136 + $0x738] sm:$0xff] 0.0
        %245 = vst [vmem:[%s136 + $0x740] sm:$0xff] 0.0
        %246 = vst [vmem:[%s136 + $0x748] sm:$0xff] 0.0
        %247 = vst [vmem:[%s136 + $0x750] sm:$0xff] 0.0
        %248 = vst [vmem:[%s136 + $0x758] sm:$0xff] 0.0
        %249 = vst [vmem:[%s136 + $0x760] sm:$0xff] 0.0
        %250 = vst [vmem:[%s136 + $0x768] sm:$0xff] 0.0
        %251 = vst [vmem:[%s136 + $0x770] sm:$0xff] 0.0
        %252 = vst [vmem:[%s136 + $0x778] sm:$0xff] 0.0
        %253 = vst [vmem:[%s136 + $0xc80] sm:$0xff] 0.0
        %254 = vst [vmem:[%s136 + $0xc88] sm:$0xff] 0.0
        %255 = vst [vmem:[%s136 + $0xc90] sm:$0xff] 0.0
        %256 = vst [vmem:[%s136 + $0xc98] sm:$0xff] 0.0
        %257 = vst [vmem:[%s136 + $0xca0] sm:$0xff] 0.0
        %258 = vst [vmem:[%s136 + $0xca8] sm:$0xff] 0.0
        %259 = vst [vmem:[%s136 + $0xcb0] sm:$0xff] 0.0
        %260 = vst [vmem:[%s136 + $0xcb8] sm:$0xff] 0.0
        %261 = vst [vmem:[%s136 + $0xcc0] sm:$0xff] 0.0
        %262 = vst [vmem:[%s136 + $0xcc8] sm:$0xff] 0.0
        %263 = vst [vmem:[%s136 + $0xcd0] sm:$0xff] 0.0
        %264 = vst [vmem:[%s136 + $0xcd8] sm:$0xff] 0.0
        %265 = vst [vmem:[%s136 + $0xce0] sm:$0xff] 0.0
        %266 = vst [vmem:[%s136 + $0xce8] sm:$0xff] 0.0
        %267 = vst [vmem:[%s136 + $0xcf0] sm:$0xff] 0.0
        %268 = vst [vmem:[%s136 + $0xcf8] sm:$0xff] 0.0
        %269 = vst [vmem:[%s136 + $0xd00] sm:$0xff] 0.0
        %270 = vst [vmem:[%s136 + $0xd08] sm:$0xff] 0.0
        %271 = vst [vmem:[%s136 + $0xd10] sm:$0xff] 0.0
        %272 = vst [vmem:[%s136 + $0xd18] sm:$0xff] 0.0
        %273 = vst [vmem:[%s136 + $0xd20] sm:$0xff] 0.0
        %274 = vst [vmem:[%s136 + $0xd28] sm:$0xff] 0.0
        %275 = vst [vmem:[%s136 + $0xd30] sm:$0xff] 0.0
        %276 = vst [vmem:[%s136 + $0xd38] sm:$0xff] 0.0
        %277 = vst [vmem:[%s136 + $0xd40] sm:$0xff] 0.0
        %278 = vst [vmem:[%s136 + $0xd48] sm:$0xff] 0.0
        %279 = vst [vmem:[%s136 + $0xd50] sm:$0xff] 0.0
        %280 = vst [vmem:[%s136 + $0xd58] sm:$0xff] 0.0
        %281 = vst [vmem:[%s136 + $0xd60] sm:$0xff] 0.0
        %282 = vst [vmem:[%s136 + $0xd68] sm:$0xff] 0.0
        %283 = vst [vmem:[%s136 + $0xd70] sm:$0xff] 0.0
        %284 = vst [vmem:[%s136 + $0xd78] sm:$0xff] 0.0
        %285 = vst [vmem:[%s136 + $0xd80] sm:$0xff] 0.0
        %286 = vst [vmem:[%s136 + $0xd88] sm:$0xff] 0.0
        %287 = vst [vmem:[%s136 + $0xd90] sm:$0xff] 0.0
        %288 = vst [vmem:[%s136 + $0xd98] sm:$0xff] 0.0
        %289 = vst [vmem:[%s136 + $0xda0] sm:$0xff] 0.0
        %290 = vst [vmem:[%s136 + $0xda8] sm:$0xff] 0.0
        %291 = vst [vmem:[%s136 + $0xdb0] sm:$0xff] 0.0
        %292 = vst [vmem:[%s136 + $0xdb8] sm:$0xff] 0.0
        %293 = vst [vmem:[%s136 + $0x12c0] sm:$0xff] 0.0
        %294 = vst [vmem:[%s136 + $0x12c8] sm:$0xff] 0.0
        %295 = vst [vmem:[%s136 + $0x12d0] sm:$0xff] 0.0
        %296 = vst [vmem:[%s136 + $0x12d8] sm:$0xff] 0.0
        %297 = vst [vmem:[%s136 + $0x12e0] sm:$0xff] 0.0
        %298 = vst [vmem:[%s136 + $0x12e8] sm:$0xff] 0.0
        %299 = vst [vmem:[%s136 + $0x12f0] sm:$0xff] 0.0
        %300 = vst [vmem:[%s136 + $0x12f8] sm:$0xff] 0.0
        %301 = vst [vmem:[%s136 + $0x1300] sm:$0xff] 0.0
        %302 = vst [vmem:[%s136 + $0x1308] sm:$0xff] 0.0
        %303 = vst [vmem:[%s136 + $0x1310] sm:$0xff] 0.0
        %304 = vst [vmem:[%s136 + $0x1318] sm:$0xff] 0.0
        %305 = vst [vmem:[%s136 + $0x1320] sm:$0xff] 0.0
        %306 = vst [vmem:[%s136 + $0x1328] sm:$0xff] 0.0
        %307 = vst [vmem:[%s136 + $0x1330] sm:$0xff] 0.0
        %308 = vst [vmem:[%s136 + $0x1338] sm:$0xff] 0.0
        %309 = vst [vmem:[%s136 + $0x1340] sm:$0xff] 0.0
        %310 = vst [vmem:[%s136 + $0x1348] sm:$0xff] 0.0
        %311 = vst [vmem:[%s136 + $0x1350] sm:$0xff] 0.0
        %312 = vst [vmem:[%s136 + $0x1358] sm:$0xff] 0.0
        %313 = vst [vmem:[%s136 + $0x1360] sm:$0xff] 0.0
        %314 = vst [vmem:[%s136 + $0x1368] sm:$0xff] 0.0
        %315 = vst [vmem:[%s136 + $0x1370] sm:$0xff] 0.0
        %316 = vst [vmem:[%s136 + $0x1378] sm:$0xff] 0.0
        %317 = vst [vmem:[%s136 + $0x1380] sm:$0xff] 0.0
        %318 = vst [vmem:[%s136 + $0x1388] sm:$0xff] 0.0
        %319 = vst [vmem:[%s136 + $0x1390] sm:$0xff] 0.0
        %320 = vst [vmem:[%s136 + $0x1398] sm:$0xff] 0.0
        %321 = vst [vmem:[%s136 + $0x13a0] sm:$0xff] 0.0
        %322 = vst [vmem:[%s136 + $0x13a8] sm:$0xff] 0.0
        %323 = vst [vmem:[%s136 + $0x13b0] sm:$0xff] 0.0
        %324 = vst [vmem:[%s136 + $0x13b8] sm:$0xff] 0.0
        %325 = vst [vmem:[%s136 + $0x13c0] sm:$0xff] 0.0
        %326 = vst [vmem:[%s136 + $0x13c8] sm:$0xff] 0.0
        %327 = vst [vmem:[%s136 + $0x13d0] sm:$0xff] 0.0
        %328 = vst [vmem:[%s136 + $0x13d8] sm:$0xff] 0.0
        %329 = vst [vmem:[%s136 + $0x13e0] sm:$0xff] 0.0
        %330 = vst [vmem:[%s136 + $0x13e8] sm:$0xff] 0.0
        %331 = vst [vmem:[%s136 + $0x13f0] sm:$0xff] 0.0
        %332 = vst [vmem:[%s136 + $0x13f8] sm:$0xff] 0.0
        %333 = vst [vmem:[%s136 + $0x500] sm:$0xff] 0.0
        %334 = vst [vmem:[%s136 + $0x508] sm:$0xff] 0.0
        %335 = vst [vmem:[%s136 + $0x510] sm:$0xff] 0.0
        %336 = vst [vmem:[%s136 + $0x518] sm:$0xff] 0.0
        %337 = vst [vmem:[%s136 + $0x520] sm:$0xff] 0.0
        %338 = vst [vmem:[%s136 + $0x528] sm:$0xff] 0.0
        %339 = vst [vmem:[%s136 + $0x530] sm:$0xff] 0.0
        %340 = vst [vmem:[%s136 + $0x538] sm:$0xff] 0.0
        %341 = vst [vmem:[%s136 + $0x540] sm:$0xff] 0.0
        %342 = vst [vmem:[%s136 + $0x548] sm:$0xff] 0.0
        %343 = vst [vmem:[%s136 + $0x550] sm:$0xff] 0.0
        %344 = vst [vmem:[%s136 + $0x558] sm:$0xff] 0.0
        %345 = vst [vmem:[%s136 + $0x560] sm:$0xff] 0.0
        %346 = vst [vmem:[%s136 + $0x568] sm:$0xff] 0.0
        %347 = vst [vmem:[%s136 + $0x570] sm:$0xff] 0.0
        %348 = vst [vmem:[%s136 + $0x578] sm:$0xff] 0.0
        %349 = vst [vmem:[%s136 + $0x580] sm:$0xff] 0.0
        %350 = vst [vmem:[%s136 + $0x588] sm:$0xff] 0.0
        %351 = vst [vmem:[%s136 + $0x590] sm:$0xff] 0.0
        %352 = vst [vmem:[%s136 + $0x598] sm:$0xff] 0.0
        %353 = vst [vmem:[%s136 + $0x5a0] sm:$0xff] 0.0
        %354 = vst [vmem:[%s136 + $0x5a8] sm:$0xff] 0.0
        %355 = vst [vmem:[%s136 + $0x5b0] sm:$0xff] 0.0
        %356 = vst [vmem:[%s136 + $0x5b8] sm:$0xff] 0.0
        %357 = vst [vmem:[%s136 + $0x5c0] sm:$0xff] 0.0
        %358 = vst [vmem:[%s136 + $0x5c8] sm:$0xff] 0.0
        %359 = vst [vmem:[%s136 + $0x5d0] sm:$0xff] 0.0
        %360 = vst [vmem:[%s136 + $0x5d8] sm:$0xff] 0.0
        %361 = vst [vmem:[%s136 + $0x5e0] sm:$0xff] 0.0
        %362 = vst [vmem:[%s136 + $0x5e8] sm:$0xff] 0.0
        %363 = vst [vmem:[%s136 + $0x5f0] sm:$0xff] 0.0
        %364 = vst [vmem:[%s136 + $0x5f8] sm:$0xff] 0.0
        %365 = vst [vmem:[%s136 + $0x600] sm:$0xff] 0.0
        %366 = vst [vmem:[%s136 + $0x608] sm:$0xff] 0.0
        %367 = vst [vmem:[%s136 + $0x610] sm:$0xff] 0.0
        %368 = vst [vmem:[%s136 + $0x618] sm:$0xff] 0.0
        %369 = vst [vmem:[%s136 + $0x620] sm:$0xff] 0.0
        %370 = vst [vmem:[%s136 + $0x628] sm:$0xff] 0.0
        %371 = vst [vmem:[%s136 + $0x630] sm:$0xff] 0.0
        %372 = vst [vmem:[%s136 + $0x638] sm:$0xff] 0.0
        %373 = vst [vmem:[%s136 + $0xb40] sm:$0xff] 0.0
        %374 = vst [vmem:[%s136 + $0xb48] sm:$0xff] 0.0
        %375 = vst [vmem:[%s136 + $0xb50] sm:$0xff] 0.0
        %376 = vst [vmem:[%s136 + $0xb58] sm:$0xff] 0.0
        %377 = vst [vmem:[%s136 + $0xb60] sm:$0xff] 0.0
        %378 = vst [vmem:[%s136 + $0xb68] sm:$0xff] 0.0
        %379 = vst [vmem:[%s136 + $0xb70] sm:$0xff] 0.0
        %380 = vst [vmem:[%s136 + $0xb78] sm:$0xff] 0.0
        %381 = vst [vmem:[%s136 + $0xb80] sm:$0xff] 0.0
        %382 = vst [vmem:[%s136 + $0xb88] sm:$0xff] 0.0
        %383 = vst [vmem:[%s136 + $0xb90] sm:$0xff] 0.0
        %384 = vst [vmem:[%s136 + $0xb98] sm:$0xff] 0.0
        %385 = vst [vmem:[%s136 + $0xba0] sm:$0xff] 0.0
        %386 = vst [vmem:[%s136 + $0xba8] sm:$0xff] 0.0
        %387 = vst [vmem:[%s136 + $0xbb0] sm:$0xff] 0.0
        %388 = vst [vmem:[%s136 + $0xbb8] sm:$0xff] 0.0
        %389 = vst [vmem:[%s136 + $0xbc0] sm:$0xff] 0.0
        %390 = vst [vmem:[%s136 + $0xbc8] sm:$0xff] 0.0
        %391 = vst [vmem:[%s136 + $0xbd0] sm:$0xff] 0.0
        %392 = vst [vmem:[%s136 + $0xbd8] sm:$0xff] 0.0
        %393 = vst [vmem:[%s136 + $0xbe0] sm:$0xff] 0.0
        %394 = vst [vmem:[%s136 + $0xbe8] sm:$0xff] 0.0
        %395 = vst [vmem:[%s136 + $0xbf0] sm:$0xff] 0.0
        %396 = vst [vmem:[%s136 + $0xbf8] sm:$0xff] 0.0
        %397 = vst [vmem:[%s136 + $0xc00] sm:$0xff] 0.0
        %398 = vst [vmem:[%s136 + $0xc08] sm:$0xff] 0.0
        %399 = vst [vmem:[%s136 + $0xc10] sm:$0xff] 0.0
        %400 = vst [vmem:[%s136 + $0xc18] sm:$0xff] 0.0
        %401 = vst [vmem:[%s136 + $0xc20] sm:$0xff] 0.0
        %402 = vst [vmem:[%s136 + $0xc28] sm:$0xff] 0.0
        %403 = vst [vmem:[%s136 + $0xc30] sm:$0xff] 0.0
        %404 = vst [vmem:[%s136 + $0xc38] sm:$0xff] 0.0
        %405 = vst [vmem:[%s136 + $0xc40] sm:$0xff] 0.0
        %406 = vst [vmem:[%s136 + $0xc48] sm:$0xff] 0.0
        %407 = vst [vmem:[%s136 + $0xc50] sm:$0xff] 0.0
        %408 = vst [vmem:[%s136 + $0xc58] sm:$0xff] 0.0
        %409 = vst [vmem:[%s136 + $0xc60] sm:$0xff] 0.0
        %410 = vst [vmem:[%s136 + $0xc68] sm:$0xff] 0.0
        %411 = vst [vmem:[%s136 + $0xc70] sm:$0xff] 0.0
        %412 = vst [vmem:[%s136 + $0xc78] sm:$0xff] 0.0
        %413 = vst [vmem:[%s136 + $0x1180] sm:$0xff] 0.0
        %414 = vst [vmem:[%s136 + $0x1188] sm:$0xff] 0.0
        %415 = vst [vmem:[%s136 + $0x1190] sm:$0xff] 0.0
        %416 = vst [vmem:[%s136 + $0x1198] sm:$0xff] 0.0
        %417 = vst [vmem:[%s136 + $0x11a0] sm:$0xff] 0.0
        %418 = vst [vmem:[%s136 + $0x11a8] sm:$0xff] 0.0
        %419 = vst [vmem:[%s136 + $0x11b0] sm:$0xff] 0.0
        %420 = vst [vmem:[%s136 + $0x11b8] sm:$0xff] 0.0
        %421 = vst [vmem:[%s136 + $0x11c0] sm:$0xff] 0.0
        %422 = vst [vmem:[%s136 + $0x11c8] sm:$0xff] 0.0
        %423 = vst [vmem:[%s136 + $0x11d0] sm:$0xff] 0.0
        %424 = vst [vmem:[%s136 + $0x11d8] sm:$0xff] 0.0
        %425 = vst [vmem:[%s136 + $0x11e0] sm:$0xff] 0.0
        %426 = vst [vmem:[%s136 + $0x11e8] sm:$0xff] 0.0
        %427 = vst [vmem:[%s136 + $0x11f0] sm:$0xff] 0.0
        %428 = vst [vmem:[%s136 + $0x11f8] sm:$0xff] 0.0
        %429 = vst [vmem:[%s136 + $0x1200] sm:$0xff] 0.0
        %430 = vst [vmem:[%s136 + $0x1208] sm:$0xff] 0.0
        %431 = vst [vmem:[%s136 + $0x1210] sm:$0xff] 0.0
        %432 = vst [vmem:[%s136 + $0x1218] sm:$0xff] 0.0
        %433 = vst [vmem:[%s136 + $0x1220] sm:$0xff] 0.0
        %434 = vst [vmem:[%s136 + $0x1228] sm:$0xff] 0.0
        %435 = vst [vmem:[%s136 + $0x1230] sm:$0xff] 0.0
        %436 = vst [vmem:[%s136 + $0x1238] sm:$0xff] 0.0
        %437 = vst [vmem:[%s136 + $0x1240] sm:$0xff] 0.0
        %438 = vst [vmem:[%s136 + $0x1248] sm:$0xff] 0.0
        %439 = vst [vmem:[%s136 + $0x1250] sm:$0xff] 0.0
        %440 = vst [vmem:[%s136 + $0x1258] sm:$0xff] 0.0
        %441 = vst [vmem:[%s136 + $0x1260] sm:$0xff] 0.0
        %442 = vst [vmem:[%s136 + $0x1268] sm:$0xff] 0.0
        %443 = vst [vmem:[%s136 + $0x1270] sm:$0xff] 0.0
        %444 = vst [vmem:[%s136 + $0x1278] sm:$0xff] 0.0
        %445 = vst [vmem:[%s136 + $0x1280] sm:$0xff] 0.0
        %446 = vst [vmem:[%s136 + $0x1288] sm:$0xff] 0.0
        %447 = vst [vmem:[%s136 + $0x1290] sm:$0xff] 0.0
        %448 = vst [vmem:[%s136 + $0x1298] sm:$0xff] 0.0
        %449 = vst [vmem:[%s136 + $0x12a0] sm:$0xff] 0.0
        %450 = vst [vmem:[%s136 + $0x12a8] sm:$0xff] 0.0
        %451 = vst [vmem:[%s136 + $0x12b0] sm:$0xff] 0.0
        %452 = vst [vmem:[%s136 + $0x12b8] sm:$0xff] 0.0
        %453 = vst [vmem:[%s136 + $0x17c0] sm:$0xff] 0.0
        %454 = vst [vmem:[%s136 + $0x17c8] sm:$0xff] 0.0
        %455 = vst [vmem:[%s136 + $0x17d0] sm:$0xff] 0.0
        %456 = vst [vmem:[%s136 + $0x17d8] sm:$0xff] 0.0
        %457 = vst [vmem:[%s136 + $0x17e0] sm:$0xff] 0.0
        %458 = vst [vmem:[%s136 + $0x17e8] sm:$0xff] 0.0
        %459 = vst [vmem:[%s136 + $0x17f0] sm:$0xff] 0.0
        %460 = vst [vmem:[%s136 + $0x17f8] sm:$0xff] 0.0
        %461 = vst [vmem:[%s136 + $0x1800] sm:$0xff] 0.0
        %462 = vst [vmem:[%s136 + $0x1808] sm:$0xff] 0.0
        %463 = vst [vmem:[%s136 + $0x1810] sm:$0xff] 0.0
        %464 = vst [vmem:[%s136 + $0x1818] sm:$0xff] 0.0
        %465 = vst [vmem:[%s136 + $0x1820] sm:$0xff] 0.0
        %466 = vst [vmem:[%s136 + $0x1828] sm:$0xff] 0.0
        %467 = vst [vmem:[%s136 + $0x1830] sm:$0xff] 0.0
        %468 = vst [vmem:[%s136 + $0x1838] sm:$0xff] 0.0
        %469 = vst [vmem:[%s136 + $0x1840] sm:$0xff] 0.0
        %470 = vst [vmem:[%s136 + $0x1848] sm:$0xff] 0.0
        %471 = vst [vmem:[%s136 + $0x1850] sm:$0xff] 0.0
        %472 = vst [vmem:[%s136 + $0x1858] sm:$0xff] 0.0
        %473 = vst [vmem:[%s136 + $0x1860] sm:$0xff] 0.0
        %474 = vst [vmem:[%s136 + $0x1868] sm:$0xff] 0.0
        %475 = vst [vmem:[%s136 + $0x1870] sm:$0xff] 0.0
        %476 = vst [vmem:[%s136 + $0x1878] sm:$0xff] 0.0
        %477 = vst [vmem:[%s136 + $0x1880] sm:$0xff] 0.0
        %478 = vst [vmem:[%s136 + $0x1888] sm:$0xff] 0.0
        %479 = vst [vmem:[%s136 + $0x1890] sm:$0xff] 0.0
        %480 = vst [vmem:[%s136 + $0x1898] sm:$0xff] 0.0
        %481 = vst [vmem:[%s136 + $0x18a0] sm:$0xff] 0.0
        %482 = vst [vmem:[%s136 + $0x18a8] sm:$0xff] 0.0
        %483 = vst [vmem:[%s136 + $0x18b0] sm:$0xff] 0.0
        %484 = vst [vmem:[%s136 + $0x18b8] sm:$0xff] 0.0
        %485 = vst [vmem:[%s136 + $0x18c0] sm:$0xff] 0.0
        %486 = vst [vmem:[%s136 + $0x18c8] sm:$0xff] 0.0
        %487 = vst [vmem:[%s136 + $0x18d0] sm:$0xff] 0.0
        %488 = vst [vmem:[%s136 + $0x18d8] sm:$0xff] 0.0
        %489 = vst [vmem:[%s136 + $0x18e0] sm:$0xff] 0.0
        %490 = vst [vmem:[%s136 + $0x18e8] sm:$0xff] 0.0
        %491 = vst [vmem:[%s136 + $0x18f0] sm:$0xff] 0.0
        %492 = vst [vmem:[%s136 + $0x18f8] sm:$0xff] 0.0
        %493 = vst [vmem:[%s136 + $0x140] sm:$0xff] 0.0
        %494 = vst [vmem:[%s136 + $0x168] sm:$0xff] 0.0
        %495 = vst [vmem:[%s136 + $0x190] sm:$0xff] 0.0
        %496 = vst [vmem:[%s136 + $0x1b8] sm:$0xff] 0.0
        %497 = vst [vmem:[%s136 + $0x1e0] sm:$0xff] 0.0
        %498 = vst [vmem:[%s136 + $0x208] sm:$0xff] 0.0
        %499 = vst [vmem:[%s136 + $0x230] sm:$0xff] 0.0
        %500 = vst [vmem:[%s136 + $0x258] sm:$0xff] 0.0
        %501 = vst [vmem:[%s136 + $0x280] sm:$0xff] 0.0
        %502 = vst [vmem:[%s136 + $0x2a8] sm:$0xff] 0.0
        %503 = vst [vmem:[%s136 + $0x2d0] sm:$0xff] 0.0
        %504 = vst [vmem:[%s136 + $0x2f8] sm:$0xff] 0.0
        %505 = vst [vmem:[%s136 + $0x320] sm:$0xff] 0.0
        %506 = vst [vmem:[%s136 + $0x348] sm:$0xff] 0.0
        %507 = vst [vmem:[%s136 + $0x370] sm:$0xff] 0.0
        %508 = vst [vmem:[%s136 + $0x398] sm:$0xff] 0.0
        %509 = vst [vmem:[%s136 + $0x3c0] sm:$0xff] 0.0
        %510 = vst [vmem:[%s136 + $0x3e8] sm:$0xff] 0.0
        %511 = vst [vmem:[%s136 + $0x410] sm:$0xff] 0.0
        %512 = vst [vmem:[%s136 + $0x438] sm:$0xff] 0.0
        %513 = vst [vmem:[%s136 + $0x460] sm:$0xff] 0.0
        %514 = vst [vmem:[%s136 + $0x488] sm:$0xff] 0.0
        %515 = vst [vmem:[%s136 + $0x4b0] sm:$0xff] 0.0
        %516 = vst [vmem:[%s136 + $0x4d8] sm:$0xff] 0.0
        %517 = vst [vmem:[%s136 + $0x780] sm:$0xff] 0.0
        %518 = vst [vmem:[%s136 + $0x7a8] sm:$0xff] 0.0
        %519 = vst [vmem:[%s136 + $0x7d0] sm:$0xff] 0.0
        %520 = vst [vmem:[%s136 + $0x7f8] sm:$0xff] 0.0
        %521 = vst [vmem:[%s136 + $0x820] sm:$0xff] 0.0
        %522 = vst [vmem:[%s136 + $0x848] sm:$0xff] 0.0
        %523 = vst [vmem:[%s136 + $0x870] sm:$0xff] 0.0
        %524 = vst [vmem:[%s136 + $0x898] sm:$0xff] 0.0
        %525 = vst [vmem:[%s136 + $0x8c0] sm:$0xff] 0.0
        %526 = vst [vmem:[%s136 + $0x8e8] sm:$0xff] 0.0
        %527 = vst [vmem:[%s136 + $0x910] sm:$0xff] 0.0
        %528 = vst [vmem:[%s136 + $0x938] sm:$0xff] 0.0
        %529 = vst [vmem:[%s136 + $0x960] sm:$0xff] 0.0
        %530 = vst [vmem:[%s136 + $0x988] sm:$0xff] 0.0
        %531 = vst [vmem:[%s136 + $0x9b0] sm:$0xff] 0.0
        %532 = vst [vmem:[%s136 + $0x9d8] sm:$0xff] 0.0
        %533 = vst [vmem:[%s136 + $0xa00] sm:$0xff] 0.0
        %534 = vst [vmem:[%s136 + $0xa28] sm:$0xff] 0.0
        %535 = vst [vmem:[%s136 + $0xa50] sm:$0xff] 0.0
        %536 = vst [vmem:[%s136 + $0xa78] sm:$0xff] 0.0
        %537 = vst [vmem:[%s136 + $0xaa0] sm:$0xff] 0.0
        %538 = vst [vmem:[%s136 + $0xac8] sm:$0xff] 0.0
        %539 = vst [vmem:[%s136 + $0xaf0] sm:$0xff] 0.0
        %540 = vst [vmem:[%s136 + $0xb18] sm:$0xff] 0.0
        %541 = vst [vmem:[%s136 + $0xdc0] sm:$0xff] 0.0
        %542 = vst [vmem:[%s136 + $0xde8] sm:$0xff] 0.0
        %543 = vst [vmem:[%s136 + $0xe10] sm:$0xff] 0.0
        %544 = vst [vmem:[%s136 + $0xe38] sm:$0xff] 0.0
        %545 = vst [vmem:[%s136 + $0xe60] sm:$0xff] 0.0
        %546 = vst [vmem:[%s136 + $0xe88] sm:$0xff] 0.0
        %547 = vst [vmem:[%s136 + $0xeb0] sm:$0xff] 0.0
        %548 = vst [vmem:[%s136 + $0xed8] sm:$0xff] 0.0
        %549 = vst [vmem:[%s136 + $0xf00] sm:$0xff] 0.0
        %550 = vst [vmem:[%s136 + $0xf28] sm:$0xff] 0.0
        %551 = vst [vmem:[%s136 + $0xf50] sm:$0xff] 0.0
        %552 = vst [vmem:[%s136 + $0xf78] sm:$0xff] 0.0
        %553 = vst [vmem:[%s136 + $0xfa0] sm:$0xff] 0.0
        %554 = vst [vmem:[%s136 + $0xfc8] sm:$0xff] 0.0
        %555 = vst [vmem:[%s136 + $0xff0] sm:$0xff] 0.0
        %556 = vst [vmem:[%s136 + $0x1018] sm:$0xff] 0.0
        %557 = vst [vmem:[%s136 + $0x1040] sm:$0xff] 0.0
        %558 = vst [vmem:[%s136 + $0x1068] sm:$0xff] 0.0
        %559 = vst [vmem:[%s136 + $0x1090] sm:$0xff] 0.0
        %560 = vst [vmem:[%s136 + $0x10b8] sm:$0xff] 0.0
        %561 = vst [vmem:[%s136 + $0x10e0] sm:$0xff] 0.0
        %562 = vst [vmem:[%s136 + $0x1108] sm:$0xff] 0.0
        %563 = vst [vmem:[%s136 + $0x1130] sm:$0xff] 0.0
        %564 = vst [vmem:[%s136 + $0x1158] sm:$0xff] 0.0
        %565 = vst [vmem:[%s136 + $0x1400] sm:$0xff] 0.0
        %566 = vst [vmem:[%s136 + $0x1428] sm:$0xff] 0.0
        %567 = vst [vmem:[%s136 + $0x1450] sm:$0xff] 0.0
        %568 = vst [vmem:[%s136 + $0x1478] sm:$0xff] 0.0
        %569 = vst [vmem:[%s136 + $0x14a0] sm:$0xff] 0.0
        %570 = vst [vmem:[%s136 + $0x14c8] sm:$0xff] 0.0
        %571 = vst [vmem:[%s136 + $0x14f0] sm:$0xff] 0.0
        %572 = vst [vmem:[%s136 + $0x1518] sm:$0xff] 0.0
        %573 = vst [vmem:[%s136 + $0x1540] sm:$0xff] 0.0
        %574 = vst [vmem:[%s136 + $0x1568] sm:$0xff] 0.0
        %575 = vst [vmem:[%s136 + $0x1590] sm:$0xff] 0.0
        %576 = vst [vmem:[%s136 + $0x15b8] sm:$0xff] 0.0
        %577 = vst [vmem:[%s136 + $0x15e0] sm:$0xff] 0.0
        %578 = vst [vmem:[%s136 + $0x1608] sm:$0xff] 0.0
        %579 = vst [vmem:[%s136 + $0x1630] sm:$0xff] 0.0
        %580 = vst [vmem:[%s136 + $0x1658] sm:$0xff] 0.0
        %581 = vst [vmem:[%s136 + $0x1680] sm:$0xff] 0.0
        %582 = vst [vmem:[%s136 + $0x16a8] sm:$0xff] 0.0
        %583 = vst [vmem:[%s136 + $0x16d0] sm:$0xff] 0.0
        %584 = vst [vmem:[%s136 + $0x16f8] sm:$0xff] 0.0
        %585 = vst [vmem:[%s136 + $0x1720] sm:$0xff] 0.0
        %586 = vst [vmem:[%s136 + $0x1748] sm:$0xff] 0.0
        %587 = vst [vmem:[%s136 + $0x1770] sm:$0xff] 0.0
        %588 = vst [vmem:[%s136 + $0x1798] sm:$0xff] 0.0
        %589 = vst [vmem:[%s136 + $0x160] sm:$0xff] 0.0
        %590 = vst [vmem:[%s136 + $0x188] sm:$0xff] 0.0
        %591 = vst [vmem:[%s136 + $0x1b0] sm:$0xff] 0.0
        %592 = vst [vmem:[%s136 + $0x1d8] sm:$0xff] 0.0
        %593 = vst [vmem:[%s136 + $0x200] sm:$0xff] 0.0
        %594 = vst [vmem:[%s136 + $0x228] sm:$0xff] 0.0
        %595 = vst [vmem:[%s136 + $0x250] sm:$0xff] 0.0
        %596 = vst [vmem:[%s136 + $0x278] sm:$0xff] 0.0
        %597 = vst [vmem:[%s136 + $0x2a0] sm:$0xff] 0.0
        %598 = vst [vmem:[%s136 + $0x2c8] sm:$0xff] 0.0
        %599 = vst [vmem:[%s136 + $0x2f0] sm:$0xff] 0.0
        %600 = vst [vmem:[%s136 + $0x318] sm:$0xff] 0.0
        %601 = vst [vmem:[%s136 + $0x340] sm:$0xff] 0.0
        %602 = vst [vmem:[%s136 + $0x368] sm:$0xff] 0.0
        %603 = vst [vmem:[%s136 + $0x390] sm:$0xff] 0.0
        %604 = vst [vmem:[%s136 + $0x3b8] sm:$0xff] 0.0
        %605 = vst [vmem:[%s136 + $0x3e0] sm:$0xff] 0.0
        %606 = vst [vmem:[%s136 + $0x408] sm:$0xff] 0.0
        %607 = vst [vmem:[%s136 + $0x430] sm:$0xff] 0.0
        %608 = vst [vmem:[%s136 + $0x458] sm:$0xff] 0.0
        %609 = vst [vmem:[%s136 + $0x480] sm:$0xff] 0.0
        %610 = vst [vmem:[%s136 + $0x4a8] sm:$0xff] 0.0
        %611 = vst [vmem:[%s136 + $0x4d0] sm:$0xff] 0.0
        %612 = vst [vmem:[%s136 + $0x4f8] sm:$0xff] 0.0
        %613 = vst [vmem:[%s136 + $0x7a0] sm:$0xff] 0.0
        %614 = vst [vmem:[%s136 + $0x7c8] sm:$0xff] 0.0
        %615 = vst [vmem:[%s136 + $0x7f0] sm:$0xff] 0.0
        %616 = vst [vmem:[%s136 + $0x818] sm:$0xff] 0.0
        %617 = vst [vmem:[%s136 + $0x840] sm:$0xff] 0.0
        %618 = vst [vmem:[%s136 + $0x868] sm:$0xff] 0.0
        %619 = vst [vmem:[%s136 + $0x890] sm:$0xff] 0.0
        %620 = vst [vmem:[%s136 + $0x8b8] sm:$0xff] 0.0
        %621 = vst [vmem:[%s136 + $0x8e0] sm:$0xff] 0.0
        %622 = vst [vmem:[%s136 + $0x908] sm:$0xff] 0.0
        %623 = vst [vmem:[%s136 + $0x930] sm:$0xff] 0.0
        %624 = vst [vmem:[%s136 + $0x958] sm:$0xff] 0.0
        %625 = vst [vmem:[%s136 + $0x980] sm:$0xff] 0.0
        %626 = vst [vmem:[%s136 + $0x9a8] sm:$0xff] 0.0
        %627 = vst [vmem:[%s136 + $0x9d0] sm:$0xff] 0.0
        %628 = vst [vmem:[%s136 + $0x9f8] sm:$0xff] 0.0
        %629 = vst [vmem:[%s136 + $0xa20] sm:$0xff] 0.0
        %630 = vst [vmem:[%s136 + $0xa48] sm:$0xff] 0.0
        %631 = vst [vmem:[%s136 + $0xa70] sm:$0xff] 0.0
        %632 = vst [vmem:[%s136 + $0xa98] sm:$0xff] 0.0
        %633 = vst [vmem:[%s136 + $0xac0] sm:$0xff] 0.0
        %634 = vst [vmem:[%s136 + $0xae8] sm:$0xff] 0.0
        %635 = vst [vmem:[%s136 + $0xb10] sm:$0xff] 0.0
        %636 = vst [vmem:[%s136 + $0xb38] sm:$0xff] 0.0
        %637 = vst [vmem:[%s136 + $0xde0] sm:$0xff] 0.0
        %638 = vst [vmem:[%s136 + $0xe08] sm:$0xff] 0.0
        %639 = vst [vmem:[%s136 + $0xe30] sm:$0xff] 0.0
        %640 = vst [vmem:[%s136 + $0xe58] sm:$0xff] 0.0
        %641 = vst [vmem:[%s136 + $0xe80] sm:$0xff] 0.0
        %642 = vst [vmem:[%s136 + $0xea8] sm:$0xff] 0.0
        %643 = vst [vmem:[%s136 + $0xed0] sm:$0xff] 0.0
        %644 = vst [vmem:[%s136 + $0xef8] sm:$0xff] 0.0
        %645 = vst [vmem:[%s136 + $0xf20] sm:$0xff] 0.0
        %646 = vst [vmem:[%s136 + $0xf48] sm:$0xff] 0.0
        %647 = vst [vmem:[%s136 + $0xf70] sm:$0xff] 0.0
        %648 = vst [vmem:[%s136 + $0xf98] sm:$0xff] 0.0
        %649 = vst [vmem:[%s136 + $0xfc0] sm:$0xff] 0.0
        %650 = vst [vmem:[%s136 + $0xfe8] sm:$0xff] 0.0
        %651 = vst [vmem:[%s136 + $0x1010] sm:$0xff] 0.0
        %652 = vst [vmem:[%s136 + $0x1038] sm:$0xff] 0.0
        %653 = vst [vmem:[%s136 + $0x1060] sm:$0xff] 0.0
        %654 = vst [vmem:[%s136 + $0x1088] sm:$0xff] 0.0
        %655 = vst [vmem:[%s136 + $0x10b0] sm:$0xff] 0.0
        %656 = vst [vmem:[%s136 + $0x10d8] sm:$0xff] 0.0
        %657 = vst [vmem:[%s136 + $0x1100] sm:$0xff] 0.0
        %658 = vst [vmem:[%s136 + $0x1128] sm:$0xff] 0.0
        %659 = vst [vmem:[%s136 + $0x1150] sm:$0xff] 0.0
        %660 = vst [vmem:[%s136 + $0x1178] sm:$0xff] 0.0
        %661 = vst [vmem:[%s136 + $0x1420] sm:$0xff] 0.0
        %662 = vst [vmem:[%s136 + $0x1448] sm:$0xff] 0.0
        %663 = vst [vmem:[%s136 + $0x1470] sm:$0xff] 0.0
        %664 = vst [vmem:[%s136 + $0x1498] sm:$0xff] 0.0
        %665 = vst [vmem:[%s136 + $0x14c0] sm:$0xff] 0.0
        %666 = vst [vmem:[%s136 + $0x14e8] sm:$0xff] 0.0
        %667 = vst [vmem:[%s136 + $0x1510] sm:$0xff] 0.0
        %668 = vst [vmem:[%s136 + $0x1538] sm:$0xff] 0.0
        %669 = vst [vmem:[%s136 + $0x1560] sm:$0xff] 0.0
        %670 = vst [vmem:[%s136 + $0x1588] sm:$0xff] 0.0
        %671 = vst [vmem:[%s136 + $0x15b0] sm:$0xff] 0.0
        %672 = vst [vmem:[%s136 + $0x15d8] sm:$0xff] 0.0
        %673 = vst [vmem:[%s136 + $0x1600] sm:$0xff] 0.0
        %674 = vst [vmem:[%s136 + $0x1628] sm:$0xff] 0.0
        %675 = vst [vmem:[%s136 + $0x1650] sm:$0xff] 0.0
        %676 = vst [vmem:[%s136 + $0x1678] sm:$0xff] 0.0
        %677 = vst [vmem:[%s136 + $0x16a0] sm:$0xff] 0.0
        %678 = vst [vmem:[%s136 + $0x16c8] sm:$0xff] 0.0
        %679 = vst [vmem:[%s136 + $0x16f0] sm:$0xff] 0.0
        %680 = vst [vmem:[%s136 + $0x1718] sm:$0xff] 0.0
        %681 = vst [vmem:[%s136 + $0x1740] sm:$0xff] 0.0
        %682 = vst [vmem:[%s136 + $0x1768] sm:$0xff] 0.0
        %683 = vst [vmem:[%s136 + $0x1790] sm:$0xff] 0.0
        %684 = vst [vmem:[%s136 + $0x17b8] sm:$0xff] 0.0
        %s685 = smul.u32 8, 4
        %s686 = smul.u32 %s685, 24
        %s687 = smul.u32 %s686, 3
        %s688 = sshll.u32 %s687, 4
        %689 = dma.done [#allocation3], %s688
        %v690 = vld [vmem:[#allocation2] sm:$0xff]
        %v691 = vld [vmem:[#allocation2 + $0x8] sm:$0xff]
        %v692 = vld [vmem:[#allocation2 + $0x10] sm:$0xff]
        %v693 = vld [vmem:[#allocation2 + $0x18] sm:$0xff]
        %v694 = vld [vmem:[#allocation2 + $0x20] sm:$0xff]
        %v695 = vld [vmem:[#allocation2 + $0x28] sm:$0xff]
        %v696 = vld [vmem:[#allocation2 + $0x30] sm:$0xff]
        %v697 = vld [vmem:[#allocation2 + $0x38] sm:$0xff]
        %v698 = vld [vmem:[#allocation2 + $0x40] sm:$0xff]
        %v699 = vld [vmem:[#allocation2 + $0x48] sm:$0xff]
        %v700 = vld [vmem:[#allocation2 + $0x50] sm:$0xff]
        %v701 = vld [vmem:[#allocation2 + $0x58] sm:$0xff]
        %v702 = vld [vmem:[#allocation2 + $0x60] sm:$0xff]
        %v703 = vld [vmem:[#allocation2 + $0x68] sm:$0xff]
        %v704 = vld [vmem:[#allocation2 + $0x70] sm:$0xff]
        %v705 = vld [vmem:[#allocation2 + $0x78] sm:$0xff]
        %v706 = vld [vmem:[#allocation2 + $0x80] sm:$0xff]
        %v707 = vld [vmem:[#allocation2 + $0x88] sm:$0xff]
        %v708 = vld [vmem:[#allocation2 + $0x90] sm:$0xff]
        %v709 = vld [vmem:[#allocation2 + $0x98] sm:$0xff]
        %v710 = vld [vmem:[#allocation2 + $0xa0] sm:$0xff]
        %v711 = vld [vmem:[#allocation2 + $0xa8] sm:$0xff]
        %v712 = vld [vmem:[#allocation2 + $0xb0] sm:$0xff]
        %v713 = vld [vmem:[#allocation2 + $0xb8] sm:$0xff]
        %v714 = vld [vmem:[#allocation2 + $0xc0] sm:$0xff]
        %v715 = vld [vmem:[#allocation2 + $0xc8] sm:$0xff]
        %v716 = vld [vmem:[#allocation2 + $0xd0] sm:$0xff]
        %v717 = vld [vmem:[#allocation2 + $0xd8] sm:$0xff]
        %v718 = vld [vmem:[#allocation2 + $0xe0] sm:$0xff]
        %v719 = vld [vmem:[#allocation2 + $0xe8] sm:$0xff]
        %v720 = vld [vmem:[#allocation2 + $0xf0] sm:$0xff]
        %v721 = vld [vmem:[#allocation2 + $0xf8] sm:$0xff]
        %v722 = vld [vmem:[#allocation2 + $0x100] sm:$0xff]
        %v723 = vld [vmem:[#allocation2 + $0x108] sm:$0xff]
        %v724 = vld [vmem:[#allocation2 + $0x110] sm:$0xff]
        %v725 = vld [vmem:[#allocation2 + $0x118] sm:$0xff]
        %v726 = vld [vmem:[#allocation2 + $0x120] sm:$0xff]
        %v727 = vld [vmem:[#allocation2 + $0x128] sm:$0xff]
        %v728 = vld [vmem:[#allocation2 + $0x130] sm:$0xff]
        %v729 = vld [vmem:[#allocation2 + $0x138] sm:$0xff]
        %v730 = vld [vmem:[#allocation2 + $0x140] sm:$0xff]
        %v731 = vld [vmem:[#allocation2 + $0x148] sm:$0xff]
        %v732 = vld [vmem:[#allocation2 + $0x150] sm:$0xff]
        %v733 = vld [vmem:[#allocation2 + $0x158] sm:$0xff]
        %v734 = vld [vmem:[#allocation2 + $0x160] sm:$0xff]
        %v735 = vld [vmem:[#allocation2 + $0x168] sm:$0xff]
        %v736 = vld [vmem:[#allocation2 + $0x170] sm:$0xff]
        %v737 = vld [vmem:[#allocation2 + $0x178] sm:$0xff]
        %v738 = vld [vmem:[#allocation2 + $0x180] sm:$0xff]
        %v739 = vld [vmem:[#allocation2 + $0x188] sm:$0xff]
        %v740 = vld [vmem:[#allocation2 + $0x190] sm:$0xff]
        %v741 = vld [vmem:[#allocation2 + $0x198] sm:$0xff]
        %v742 = vld [vmem:[#allocation2 + $0x1a0] sm:$0xff]
        %v743 = vld [vmem:[#allocation2 + $0x1a8] sm:$0xff]
        %v744 = vld [vmem:[#allocation2 + $0x1b0] sm:$0xff]
        %v745 = vld [vmem:[#allocation2 + $0x1b8] sm:$0xff]
        %v746 = vld [vmem:[#allocation2 + $0x1c0] sm:$0xff]
        %v747 = vld [vmem:[#allocation2 + $0x1c8] sm:$0xff]
        %v748 = vld [vmem:[#allocation2 + $0x1d0] sm:$0xff]
        %v749 = vld [vmem:[#allocation2 + $0x1d8] sm:$0xff]
        %v750 = vld [vmem:[#allocation2 + $0x1e0] sm:$0xff]
        %v751 = vld [vmem:[#allocation2 + $0x1e8] sm:$0xff]
        %v752 = vld [vmem:[#allocation2 + $0x1f0] sm:$0xff]
        %v753 = vld [vmem:[#allocation2 + $0x1f8] sm:$0xff]
        %v754 = vld [vmem:[#allocation2 + $0x200] sm:$0xff]
        %v755 = vld [vmem:[#allocation2 + $0x208] sm:$0xff]
        %v756 = vld [vmem:[#allocation2 + $0x210] sm:$0xff]
        %v757 = vld [vmem:[#allocation2 + $0x218] sm:$0xff]
        %v758 = vld [vmem:[#allocation2 + $0x220] sm:$0xff]
        %v759 = vld [vmem:[#allocation2 + $0x228] sm:$0xff]
        %v760 = vld [vmem:[#allocation2 + $0x230] sm:$0xff]
        %v761 = vld [vmem:[#allocation2 + $0x238] sm:$0xff]
        %v762 = vld [vmem:[#allocation2 + $0x240] sm:$0xff]
        %v763 = vld [vmem:[#allocation2 + $0x248] sm:$0xff]
        %v764 = vld [vmem:[#allocation2 + $0x250] sm:$0xff]
        %v765 = vld [vmem:[#allocation2 + $0x258] sm:$0xff]
        %v766 = vld [vmem:[#allocation2 + $0x260] sm:$0xff]
        %v767 = vld [vmem:[#allocation2 + $0x268] sm:$0xff]
        %v768 = vld [vmem:[#allocation2 + $0x270] sm:$0xff]
        %v769 = vld [vmem:[#allocation2 + $0x278] sm:$0xff]
        %v770 = vld [vmem:[#allocation2 + $0x280] sm:$0xff]
        %v771 = vld [vmem:[#allocation2 + $0x288] sm:$0xff]
        %v772 = vld [vmem:[#allocation2 + $0x290] sm:$0xff]
        %v773 = vld [vmem:[#allocation2 + $0x298] sm:$0xff]
        %v774 = vld [vmem:[#allocation2 + $0x2a0] sm:$0xff]
        %v775 = vld [vmem:[#allocation2 + $0x2a8] sm:$0xff]
        %v776 = vld [vmem:[#allocation2 + $0x2b0] sm:$0xff]
        %v777 = vld [vmem:[#allocation2 + $0x2b8] sm:$0xff]
        %v778 = vld [vmem:[#allocation2 + $0x2c0] sm:$0xff]
        %v779 = vld [vmem:[#allocation2 + $0x2c8] sm:$0xff]
        %v780 = vld [vmem:[#allocation2 + $0x2d0] sm:$0xff]
        %v781 = vld [vmem:[#allocation2 + $0x2d8] sm:$0xff]
        %v782 = vld [vmem:[#allocation2 + $0x2e0] sm:$0xff]
        %v783 = vld [vmem:[#allocation2 + $0x2e8] sm:$0xff]
        %v784 = vld [vmem:[#allocation2 + $0x2f0] sm:$0xff]
        %v785 = vld [vmem:[#allocation2 + $0x2f8] sm:$0xff]
        %v786 = vld [vmem:[#allocation2 + $0x300] sm:$0xff]
        %v787 = vld [vmem:[#allocation2 + $0x308] sm:$0xff]
        %v788 = vld [vmem:[#allocation2 + $0x310] sm:$0xff]
        %v789 = vld [vmem:[#allocation2 + $0x318] sm:$0xff]
        %v790 = vld [vmem:[#allocation2 + $0x320] sm:$0xff]
        %v791 = vld [vmem:[#allocation2 + $0x328] sm:$0xff]
        %v792 = vld [vmem:[#allocation2 + $0x330] sm:$0xff]
        %v793 = vld [vmem:[#allocation2 + $0x338] sm:$0xff]
        %v794 = vld [vmem:[#allocation2 + $0x340] sm:$0xff]
        %v795 = vld [vmem:[#allocation2 + $0x348] sm:$0xff]
        %v796 = vld [vmem:[#allocation2 + $0x350] sm:$0xff]
        %v797 = vld [vmem:[#allocation2 + $0x358] sm:$0xff]
        %v798 = vld [vmem:[#allocation2 + $0x360] sm:$0xff]
        %v799 = vld [vmem:[#allocation2 + $0x368] sm:$0xff]
        %v800 = vld [vmem:[#allocation2 + $0x370] sm:$0xff]
        %v801 = vld [vmem:[#allocation2 + $0x378] sm:$0xff]
        %v802 = vld [vmem:[#allocation2 + $0x380] sm:$0xff]
        %v803 = vld [vmem:[#allocation2 + $0x388] sm:$0xff]
        %v804 = vld [vmem:[#allocation2 + $0x390] sm:$0xff]
        %v805 = vld [vmem:[#allocation2 + $0x398] sm:$0xff]
        %v806 = vld [vmem:[#allocation2 + $0x3a0] sm:$0xff]
        %v807 = vld [vmem:[#allocation2 + $0x3a8] sm:$0xff]
        %v808 = vld [vmem:[#allocation2 + $0x3b0] sm:$0xff]
        %v809 = vld [vmem:[#allocation2 + $0x3b8] sm:$0xff]
        %v810 = vld [vmem:[#allocation2 + $0x3c0] sm:$0xff]
        %v811 = vld [vmem:[#allocation2 + $0x3c8] sm:$0xff]
        %v812 = vld [vmem:[#allocation2 + $0x3d0] sm:$0xff]
        %v813 = vld [vmem:[#allocation2 + $0x3d8] sm:$0xff]
        %v814 = vld [vmem:[#allocation2 + $0x3e0] sm:$0xff]
        %v815 = vld [vmem:[#allocation2 + $0x3e8] sm:$0xff]
        %v816 = vld [vmem:[#allocation2 + $0x3f0] sm:$0xff]
        %v817 = vld [vmem:[#allocation2 + $0x3f8] sm:$0xff]
        %v818 = vld [vmem:[#allocation2 + $0x400] sm:$0xff]
        %v819 = vld [vmem:[#allocation2 + $0x408] sm:$0xff]
        %v820 = vld [vmem:[#allocation2 + $0x410] sm:$0xff]
        %v821 = vld [vmem:[#allocation2 + $0x418] sm:$0xff]
        %v822 = vld [vmem:[#allocation2 + $0x420] sm:$0xff]
        %v823 = vld [vmem:[#allocation2 + $0x428] sm:$0xff]
        %v824 = vld [vmem:[#allocation2 + $0x430] sm:$0xff]
        %v825 = vld [vmem:[#allocation2 + $0x438] sm:$0xff]
        %v826 = vld [vmem:[#allocation2 + $0x440] sm:$0xff]
        %v827 = vld [vmem:[#allocation2 + $0x448] sm:$0xff]
        %v828 = vld [vmem:[#allocation2 + $0x450] sm:$0xff]
        %v829 = vld [vmem:[#allocation2 + $0x458] sm:$0xff]
        %v830 = vld [vmem:[#allocation2 + $0x460] sm:$0xff]
        %v831 = vld [vmem:[#allocation2 + $0x468] sm:$0xff]
        %v832 = vld [vmem:[#allocation2 + $0x470] sm:$0xff]
        %v833 = vld [vmem:[#allocation2 + $0x478] sm:$0xff]
        %v834 = vld [vmem:[#allocation2 + $0x480] sm:$0xff]
        %v835 = vld [vmem:[#allocation2 + $0x488] sm:$0xff]
        %v836 = vld [vmem:[#allocation2 + $0x490] sm:$0xff]
        %v837 = vld [vmem:[#allocation2 + $0x498] sm:$0xff]
        %v838 = vld [vmem:[#allocation2 + $0x4a0] sm:$0xff]
        %v839 = vld [vmem:[#allocation2 + $0x4a8] sm:$0xff]
        %v840 = vld [vmem:[#allocation2 + $0x4b0] sm:$0xff]
        %v841 = vld [vmem:[#allocation2 + $0x4b8] sm:$0xff]
        %v842 = vld [vmem:[#allocation2 + $0x4c0] sm:$0xff]
        %v843 = vld [vmem:[#allocation2 + $0x4c8] sm:$0xff]
        %v844 = vld [vmem:[#allocation2 + $0x4d0] sm:$0xff]
        %v845 = vld [vmem:[#allocation2 + $0x4d8] sm:$0xff]
        %v846 = vld [vmem:[#allocation2 + $0x4e0] sm:$0xff]
        %v847 = vld [vmem:[#allocation2 + $0x4e8] sm:$0xff]
        %v848 = vld [vmem:[#allocation2 + $0x4f0] sm:$0xff]
        %v849 = vld [vmem:[#allocation2 + $0x4f8] sm:$0xff]
        %v850 = vld [vmem:[#allocation2 + $0x500] sm:$0xff]
        %v851 = vld [vmem:[#allocation2 + $0x508] sm:$0xff]
        %v852 = vld [vmem:[#allocation2 + $0x510] sm:$0xff]
        %v853 = vld [vmem:[#allocation2 + $0x518] sm:$0xff]
        %v854 = vld [vmem:[#allocation2 + $0x520] sm:$0xff]
        %v855 = vld [vmem:[#allocation2 + $0x528] sm:$0xff]
        %v856 = vld [vmem:[#allocation2 + $0x530] sm:$0xff]
        %v857 = vld [vmem:[#allocation2 + $0x538] sm:$0xff]
        %v858 = vld [vmem:[#allocation2 + $0x540] sm:$0xff]
        %v859 = vld [vmem:[#allocation2 + $0x548] sm:$0xff]
        %v860 = vld [vmem:[#allocation2 + $0x550] sm:$0xff]
        %v861 = vld [vmem:[#allocation2 + $0x558] sm:$0xff]
        %v862 = vld [vmem:[#allocation2 + $0x560] sm:$0xff]
        %v863 = vld [vmem:[#allocation2 + $0x568] sm:$0xff]
        %v864 = vld [vmem:[#allocation2 + $0x570] sm:$0xff]
        %v865 = vld [vmem:[#allocation2 + $0x578] sm:$0xff]
        %v866 = vld [vmem:[#allocation2 + $0x580] sm:$0xff]
        %v867 = vld [vmem:[#allocation2 + $0x588] sm:$0xff]
        %v868 = vld [vmem:[#allocation2 + $0x590] sm:$0xff]
        %v869 = vld [vmem:[#allocation2 + $0x598] sm:$0xff]
        %v870 = vld [vmem:[#allocation2 + $0x5a0] sm:$0xff]
        %v871 = vld [vmem:[#allocation2 + $0x5a8] sm:$0xff]
        %v872 = vld [vmem:[#allocation2 + $0x5b0] sm:$0xff]
        %v873 = vld [vmem:[#allocation2 + $0x5b8] sm:$0xff]
        %v874 = vld [vmem:[#allocation2 + $0x5c0] sm:$0xff]
        %v875 = vld [vmem:[#allocation2 + $0x5c8] sm:$0xff]
        %v876 = vld [vmem:[#allocation2 + $0x5d0] sm:$0xff]
        %v877 = vld [vmem:[#allocation2 + $0x5d8] sm:$0xff]
        %v878 = vld [vmem:[#allocation2 + $0x5e0] sm:$0xff]
        %v879 = vld [vmem:[#allocation2 + $0x5e8] sm:$0xff]
        %v880 = vld [vmem:[#allocation2 + $0x5f0] sm:$0xff]
        %v881 = vld [vmem:[#allocation2 + $0x5f8] sm:$0xff]
        %v882 = vld [vmem:[#allocation2 + $0x600] sm:$0xff]
        %v883 = vld [vmem:[#allocation2 + $0x608] sm:$0xff]
        %v884 = vld [vmem:[#allocation2 + $0x610] sm:$0xff]
        %v885 = vld [vmem:[#allocation2 + $0x618] sm:$0xff]
        %v886 = vld [vmem:[#allocation2 + $0x620] sm:$0xff]
        %v887 = vld [vmem:[#allocation2 + $0x628] sm:$0xff]
        %v888 = vld [vmem:[#allocation2 + $0x630] sm:$0xff]
        %v889 = vld [vmem:[#allocation2 + $0x638] sm:$0xff]
        %v890 = vld [vmem:[#allocation2 + $0x640] sm:$0xff]
        %v891 = vld [vmem:[#allocation2 + $0x648] sm:$0xff]
        %v892 = vld [vmem:[#allocation2 + $0x650] sm:$0xff]
        %v893 = vld [vmem:[#allocation2 + $0x658] sm:$0xff]
        %v894 = vld [vmem:[#allocation2 + $0x660] sm:$0xff]
        %v895 = vld [vmem:[#allocation2 + $0x668] sm:$0xff]
        %v896 = vld [vmem:[#allocation2 + $0x670] sm:$0xff]
        %v897 = vld [vmem:[#allocation2 + $0x678] sm:$0xff]
        %v898 = vld [vmem:[#allocation2 + $0x680] sm:$0xff]
        %v899 = vld [vmem:[#allocation2 + $0x688] sm:$0xff]
        %v900 = vld [vmem:[#allocation2 + $0x690] sm:$0xff]
        %v901 = vld [vmem:[#allocation2 + $0x698] sm:$0xff]
        %v902 = vld [vmem:[#allocation2 + $0x6a0] sm:$0xff]
        %v903 = vld [vmem:[#allocation2 + $0x6a8] sm:$0xff]
        %v904 = vld [vmem:[#allocation2 + $0x6b0] sm:$0xff]
        %v905 = vld [vmem:[#allocation2 + $0x6b8] sm:$0xff]
        %v906 = vld [vmem:[#allocation2 + $0x6c0] sm:$0xff]
        %v907 = vld [vmem:[#allocation2 + $0x6c8] sm:$0xff]
        %v908 = vld [vmem:[#allocation2 + $0x6d0] sm:$0xff]
        %v909 = vld [vmem:[#allocation2 + $0x6d8] sm:$0xff]
        %v910 = vld [vmem:[#allocation2 + $0x6e0] sm:$0xff]
        %v911 = vld [vmem:[#allocation2 + $0x6e8] sm:$0xff]
        %v912 = vld [vmem:[#allocation2 + $0x6f0] sm:$0xff]
        %v913 = vld [vmem:[#allocation2 + $0x6f8] sm:$0xff]
        %v914 = vld [vmem:[#allocation2 + $0x700] sm:$0xff]
        %v915 = vld [vmem:[#allocation2 + $0x708] sm:$0xff]
        %v916 = vld [vmem:[#allocation2 + $0x710] sm:$0xff]
        %v917 = vld [vmem:[#allocation2 + $0x718] sm:$0xff]
        %v918 = vld [vmem:[#allocation2 + $0x720] sm:$0xff]
        %v919 = vld [vmem:[#allocation2 + $0x728] sm:$0xff]
        %v920 = vld [vmem:[#allocation2 + $0x730] sm:$0xff]
        %v921 = vld [vmem:[#allocation2 + $0x738] sm:$0xff]
        %v922 = vld [vmem:[#allocation2 + $0x740] sm:$0xff]
        %v923 = vld [vmem:[#allocation2 + $0x748] sm:$0xff]
        %v924 = vld [vmem:[#allocation2 + $0x750] sm:$0xff]
        %v925 = vld [vmem:[#allocation2 + $0x758] sm:$0xff]
        %v926 = vld [vmem:[#allocation2 + $0x760] sm:$0xff]
        %v927 = vld [vmem:[#allocation2 + $0x768] sm:$0xff]
        %v928 = vld [vmem:[#allocation2 + $0x770] sm:$0xff]
        %v929 = vld [vmem:[#allocation2 + $0x778] sm:$0xff]
        %v930 = vld [vmem:[#allocation2 + $0x780] sm:$0xff]
        %v931 = vld [vmem:[#allocation2 + $0x788] sm:$0xff]
        %v932 = vld [vmem:[#allocation2 + $0x790] sm:$0xff]
        %v933 = vld [vmem:[#allocation2 + $0x798] sm:$0xff]
        %v934 = vld [vmem:[#allocation2 + $0x7a0] sm:$0xff]
        %v935 = vld [vmem:[#allocation2 + $0x7a8] sm:$0xff]
        %v936 = vld [vmem:[#allocation2 + $0x7b0] sm:$0xff]
        %v937 = vld [vmem:[#allocation2 + $0x7b8] sm:$0xff]
        %v938 = vld [vmem:[#allocation2 + $0x7c0] sm:$0xff]
        %v939 = vld [vmem:[#allocation2 + $0x7c8] sm:$0xff]
        %v940 = vld [vmem:[#allocation2 + $0x7d0] sm:$0xff]
        %v941 = vld [vmem:[#allocation2 + $0x7d8] sm:$0xff]
        %v942 = vld [vmem:[#allocation2 + $0x7e0] sm:$0xff]
        %v943 = vld [vmem:[#allocation2 + $0x7e8] sm:$0xff]
        %v944 = vld [vmem:[#allocation2 + $0x7f0] sm:$0xff]
        %v945 = vld [vmem:[#allocation2 + $0x7f8] sm:$0xff]
        %v946 = vld [vmem:[#allocation2 + $0x800] sm:$0xff]
        %v947 = vld [vmem:[#allocation2 + $0x808] sm:$0xff]
        %v948 = vld [vmem:[#allocation2 + $0x810] sm:$0xff]
        %v949 = vld [vmem:[#allocation2 + $0x818] sm:$0xff]
        %v950 = vld [vmem:[#allocation2 + $0x820] sm:$0xff]
        %v951 = vld [vmem:[#allocation2 + $0x828] sm:$0xff]
        %v952 = vld [vmem:[#allocation2 + $0x830] sm:$0xff]
        %v953 = vld [vmem:[#allocation2 + $0x838] sm:$0xff]
        %v954 = vld [vmem:[#allocation2 + $0x840] sm:$0xff]
        %v955 = vld [vmem:[#allocation2 + $0x848] sm:$0xff]
        %v956 = vld [vmem:[#allocation2 + $0x850] sm:$0xff]
        %v957 = vld [vmem:[#allocation2 + $0x858] sm:$0xff]
        %v958 = vld [vmem:[#allocation2 + $0x860] sm:$0xff]
        %v959 = vld [vmem:[#allocation2 + $0x868] sm:$0xff]
        %v960 = vld [vmem:[#allocation2 + $0x870] sm:$0xff]
        %v961 = vld [vmem:[#allocation2 + $0x878] sm:$0xff]
        %v962 = vld [vmem:[#allocation2 + $0x880] sm:$0xff]
        %v963 = vld [vmem:[#allocation2 + $0x888] sm:$0xff]
        %v964 = vld [vmem:[#allocation2 + $0x890] sm:$0xff]
        %v965 = vld [vmem:[#allocation2 + $0x898] sm:$0xff]
        %v966 = vld [vmem:[#allocation2 + $0x8a0] sm:$0xff]
        %v967 = vld [vmem:[#allocation2 + $0x8a8] sm:$0xff]
        %v968 = vld [vmem:[#allocation2 + $0x8b0] sm:$0xff]
        %v969 = vld [vmem:[#allocation2 + $0x8b8] sm:$0xff]
        %v970 = vld [vmem:[#allocation2 + $0x8c0] sm:$0xff]
        %v971 = vld [vmem:[#allocation2 + $0x8c8] sm:$0xff]
        %v972 = vld [vmem:[#allocation2 + $0x8d0] sm:$0xff]
        %v973 = vld [vmem:[#allocation2 + $0x8d8] sm:$0xff]
        %v974 = vld [vmem:[#allocation2 + $0x8e0] sm:$0xff]
        %v975 = vld [vmem:[#allocation2 + $0x8e8] sm:$0xff]
        %v976 = vld [vmem:[#allocation2 + $0x8f0] sm:$0xff]
        %v977 = vld [vmem:[#allocation2 + $0x8f8] sm:$0xff]
        %v978 = vld [vmem:[%s118] sm:$0xff]
        %v979 = vld [vmem:[%s118 + $0x8] sm:$0xff]
        %v980 = vld [vmem:[%s118 + $0x10] sm:$0xff]
        %v981 = vld [vmem:[%s118 + $0x18] sm:$0xff]
        %v982 = vld [vmem:[%s118 + $0x20] sm:$0xff]
        %v983 = vld [vmem:[%s118 + $0x28] sm:$0xff]
        %v984 = vld [vmem:[%s118 + $0x30] sm:$0xff]
        %v985 = vld [vmem:[%s118 + $0x38] sm:$0xff]
        %v986 = vld [vmem:[%s118 + $0x40] sm:$0xff]
        %v987 = vld [vmem:[%s118 + $0x48] sm:$0xff]
        %v988 = vld [vmem:[%s118 + $0x50] sm:$0xff]
        %v989 = vld [vmem:[%s118 + $0x58] sm:$0xff]
        %v990 = vld [vmem:[%s118 + $0x60] sm:$0xff]
        %v991 = vld [vmem:[%s118 + $0x68] sm:$0xff]
        %v992 = vld [vmem:[%s118 + $0x70] sm:$0xff]
        %v993 = vld [vmem:[%s118 + $0x78] sm:$0xff]
        %v994 = vld [vmem:[%s118 + $0x80] sm:$0xff]
        %v995 = vld [vmem:[%s118 + $0x88] sm:$0xff]
        %v996 = vld [vmem:[%s118 + $0x90] sm:$0xff]
        %v997 = vld [vmem:[%s118 + $0x98] sm:$0xff]
        %v998 = vld [vmem:[%s118 + $0xa0] sm:$0xff]
        %v999 = vld [vmem:[%s118 + $0xa8] sm:$0xff]
        %v1000 = vld [vmem:[%s118 + $0xb0] sm:$0xff]
        %v1001 = vld [vmem:[%s118 + $0xb8] sm:$0xff]
        %v1002 = vld [vmem:[%s118 + $0xc0] sm:$0xff]
        %v1003 = vld [vmem:[%s118 + $0xc8] sm:$0xff]
        %v1004 = vld [vmem:[%s118 + $0xd0] sm:$0xff]
        %v1005 = vld [vmem:[%s118 + $0xd8] sm:$0xff]
        %v1006 = vld [vmem:[%s118 + $0xe0] sm:$0xff]
        %v1007 = vld [vmem:[%s118 + $0xe8] sm:$0xff]
        %v1008 = vld [vmem:[%s118 + $0xf0] sm:$0xff]
        %v1009 = vld [vmem:[%s118 + $0xf8] sm:$0xff]
        %v1010 = vld [vmem:[%s118 + $0x100] sm:$0xff]
        %v1011 = vld [vmem:[%s118 + $0x108] sm:$0xff]
        %v1012 = vld [vmem:[%s118 + $0x110] sm:$0xff]
        %v1013 = vld [vmem:[%s118 + $0x118] sm:$0xff]
        %v1014 = vld [vmem:[%s118 + $0x120] sm:$0xff]
        %v1015 = vld [vmem:[%s118 + $0x128] sm:$0xff]
        %v1016 = vld [vmem:[%s118 + $0x130] sm:$0xff]
        %v1017 = vld [vmem:[%s118 + $0x138] sm:$0xff]
        %v1018 = vld [vmem:[%s118 + $0x140] sm:$0xff]
        %v1019 = vld [vmem:[%s118 + $0x148] sm:$0xff]
        %v1020 = vld [vmem:[%s118 + $0x150] sm:$0xff]
        %v1021 = vld [vmem:[%s118 + $0x158] sm:$0xff]
        %v1022 = vld [vmem:[%s118 + $0x160] sm:$0xff]
        %v1023 = vld [vmem:[%s118 + $0x168] sm:$0xff]
        %v1024 = vld [vmem:[%s118 + $0x170] sm:$0xff]
        %v1025 = vld [vmem:[%s118 + $0x178] sm:$0xff]
        %v1026 = vld [vmem:[%s118 + $0x180] sm:$0xff]
        %v1027 = vld [vmem:[%s118 + $0x188] sm:$0xff]
        %v1028 = vld [vmem:[%s118 + $0x190] sm:$0xff]
        %v1029 = vld [vmem:[%s118 + $0x198] sm:$0xff]
        %v1030 = vld [vmem:[%s118 + $0x1a0] sm:$0xff]
        %v1031 = vld [vmem:[%s118 + $0x1a8] sm:$0xff]
        %v1032 = vld [vmem:[%s118 + $0x1b0] sm:$0xff]
        %v1033 = vld [vmem:[%s118 + $0x1b8] sm:$0xff]
        %v1034 = vld [vmem:[%s118 + $0x1c0] sm:$0xff]
        %v1035 = vld [vmem:[%s118 + $0x1c8] sm:$0xff]
        %v1036 = vld [vmem:[%s118 + $0x1d0] sm:$0xff]
        %v1037 = vld [vmem:[%s118 + $0x1d8] sm:$0xff]
        %v1038 = vld [vmem:[%s118 + $0x1e0] sm:$0xff]
        %v1039 = vld [vmem:[%s118 + $0x1e8] sm:$0xff]
        %v1040 = vld [vmem:[%s118 + $0x1f0] sm:$0xff]
        %v1041 = vld [vmem:[%s118 + $0x1f8] sm:$0xff]
        %v1042 = vld [vmem:[%s118 + $0x200] sm:$0xff]
        %v1043 = vld [vmem:[%s118 + $0x208] sm:$0xff]
        %v1044 = vld [vmem:[%s118 + $0x210] sm:$0xff]
        %v1045 = vld [vmem:[%s118 + $0x218] sm:$0xff]
        %v1046 = vld [vmem:[%s118 + $0x220] sm:$0xff]
        %v1047 = vld [vmem:[%s118 + $0x228] sm:$0xff]
        %v1048 = vld [vmem:[%s118 + $0x230] sm:$0xff]
        %v1049 = vld [vmem:[%s118 + $0x238] sm:$0xff]
        %v1050 = vld [vmem:[%s118 + $0x240] sm:$0xff]
        %v1051 = vld [vmem:[%s118 + $0x248] sm:$0xff]
        %v1052 = vld [vmem:[%s118 + $0x250] sm:$0xff]
        %v1053 = vld [vmem:[%s118 + $0x258] sm:$0xff]
        %v1054 = vld [vmem:[%s118 + $0x260] sm:$0xff]
        %v1055 = vld [vmem:[%s118 + $0x268] sm:$0xff]
        %v1056 = vld [vmem:[%s118 + $0x270] sm:$0xff]
        %v1057 = vld [vmem:[%s118 + $0x278] sm:$0xff]
        %v1058 = vld [vmem:[%s118 + $0x280] sm:$0xff]
        %v1059 = vld [vmem:[%s118 + $0x288] sm:$0xff]
        %v1060 = vld [vmem:[%s118 + $0x290] sm:$0xff]
        %v1061 = vld [vmem:[%s118 + $0x298] sm:$0xff]
        %v1062 = vld [vmem:[%s118 + $0x2a0] sm:$0xff]
        %v1063 = vld [vmem:[%s118 + $0x2a8] sm:$0xff]
        %v1064 = vld [vmem:[%s118 + $0x2b0] sm:$0xff]
        %v1065 = vld [vmem:[%s118 + $0x2b8] sm:$0xff]
        %v1066 = vld [vmem:[%s118 + $0x2c0] sm:$0xff]
        %v1067 = vld [vmem:[%s118 + $0x2c8] sm:$0xff]
        %v1068 = vld [vmem:[%s118 + $0x2d0] sm:$0xff]
        %v1069 = vld [vmem:[%s118 + $0x2d8] sm:$0xff]
        %v1070 = vld [vmem:[%s118 + $0x2e0] sm:$0xff]
        %v1071 = vld [vmem:[%s118 + $0x2e8] sm:$0xff]
        %v1072 = vld [vmem:[%s118 + $0x2f0] sm:$0xff]
        %v1073 = vld [vmem:[%s118 + $0x2f8] sm:$0xff]
        %v1074 = vld [vmem:[%s118 + $0x300] sm:$0xff]
        %v1075 = vld [vmem:[%s118 + $0x308] sm:$0xff]
        %v1076 = vld [vmem:[%s118 + $0x310] sm:$0xff]
        %v1077 = vld [vmem:[%s118 + $0x318] sm:$0xff]
        %v1078 = vld [vmem:[%s118 + $0x320] sm:$0xff]
        %v1079 = vld [vmem:[%s118 + $0x328] sm:$0xff]
        %v1080 = vld [vmem:[%s118 + $0x330] sm:$0xff]
        %v1081 = vld [vmem:[%s118 + $0x338] sm:$0xff]
        %v1082 = vld [vmem:[%s118 + $0x340] sm:$0xff]
        %v1083 = vld [vmem:[%s118 + $0x348] sm:$0xff]
        %v1084 = vld [vmem:[%s118 + $0x350] sm:$0xff]
        %v1085 = vld [vmem:[%s118 + $0x358] sm:$0xff]
        %v1086 = vld [vmem:[%s118 + $0x360] sm:$0xff]
        %v1087 = vld [vmem:[%s118 + $0x368] sm:$0xff]
        %v1088 = vld [vmem:[%s118 + $0x370] sm:$0xff]
        %v1089 = vld [vmem:[%s118 + $0x378] sm:$0xff]
        %v1090 = vld [vmem:[%s118 + $0x380] sm:$0xff]
        %v1091 = vld [vmem:[%s118 + $0x388] sm:$0xff]
        %v1092 = vld [vmem:[%s118 + $0x390] sm:$0xff]
        %v1093 = vld [vmem:[%s118 + $0x398] sm:$0xff]
        %v1094 = vld [vmem:[%s118 + $0x3a0] sm:$0xff]
        %v1095 = vld [vmem:[%s118 + $0x3a8] sm:$0xff]
        %v1096 = vld [vmem:[%s118 + $0x3b0] sm:$0xff]
        %v1097 = vld [vmem:[%s118 + $0x3b8] sm:$0xff]
        %v1098 = vld [vmem:[%s118 + $0x3c0] sm:$0xff]
        %v1099 = vld [vmem:[%s118 + $0x3c8] sm:$0xff]
        %v1100 = vld [vmem:[%s118 + $0x3d0] sm:$0xff]
        %v1101 = vld [vmem:[%s118 + $0x3d8] sm:$0xff]
        %v1102 = vld [vmem:[%s118 + $0x3e0] sm:$0xff]
        %v1103 = vld [vmem:[%s118 + $0x3e8] sm:$0xff]
        %v1104 = vld [vmem:[%s118 + $0x3f0] sm:$0xff]
        %v1105 = vld [vmem:[%s118 + $0x3f8] sm:$0xff]
        %v1106 = vld [vmem:[%s118 + $0x400] sm:$0xff]
        %v1107 = vld [vmem:[%s118 + $0x408] sm:$0xff]
        %v1108 = vld [vmem:[%s118 + $0x410] sm:$0xff]
        %v1109 = vld [vmem:[%s118 + $0x418] sm:$0xff]
        %v1110 = vld [vmem:[%s118 + $0x420] sm:$0xff]
        %v1111 = vld [vmem:[%s118 + $0x428] sm:$0xff]
        %v1112 = vld [vmem:[%s118 + $0x430] sm:$0xff]
        %v1113 = vld [vmem:[%s118 + $0x438] sm:$0xff]
        %v1114 = vld [vmem:[%s118 + $0x440] sm:$0xff]
        %v1115 = vld [vmem:[%s118 + $0x448] sm:$0xff]
        %v1116 = vld [vmem:[%s118 + $0x450] sm:$0xff]
        %v1117 = vld [vmem:[%s118 + $0x458] sm:$0xff]
        %v1118 = vld [vmem:[%s118 + $0x460] sm:$0xff]
        %v1119 = vld [vmem:[%s118 + $0x468] sm:$0xff]
        %v1120 = vld [vmem:[%s118 + $0x470] sm:$0xff]
        %v1121 = vld [vmem:[%s118 + $0x478] sm:$0xff]
        %v1122 = vld [vmem:[%s118 + $0x480] sm:$0xff]
        %v1123 = vld [vmem:[%s118 + $0x488] sm:$0xff]
        %v1124 = vld [vmem:[%s118 + $0x490] sm:$0xff]
        %v1125 = vld [vmem:[%s118 + $0x498] sm:$0xff]
        %v1126 = vld [vmem:[%s118 + $0x4a0] sm:$0xff]
        %v1127 = vld [vmem:[%s118 + $0x4a8] sm:$0xff]
        %v1128 = vld [vmem:[%s118 + $0x4b0] sm:$0xff]
        %v1129 = vld [vmem:[%s118 + $0x4b8] sm:$0xff]
        %v1130 = vld [vmem:[%s118 + $0x4c0] sm:$0xff]
        %v1131 = vld [vmem:[%s118 + $0x4c8] sm:$0xff]
        %v1132 = vld [vmem:[%s118 + $0x4d0] sm:$0xff]
        %v1133 = vld [vmem:[%s118 + $0x4d8] sm:$0xff]
        %v1134 = vld [vmem:[%s118 + $0x4e0] sm:$0xff]
        %v1135 = vld [vmem:[%s118 + $0x4e8] sm:$0xff]
        %v1136 = vld [vmem:[%s118 + $0x4f0] sm:$0xff]
        %v1137 = vld [vmem:[%s118 + $0x4f8] sm:$0xff]
        %v1138 = vld [vmem:[%s118 + $0x500] sm:$0xff]
        %v1139 = vld [vmem:[%s118 + $0x508] sm:$0xff]
        %v1140 = vld [vmem:[%s118 + $0x510] sm:$0xff]
        %v1141 = vld [vmem:[%s118 + $0x518] sm:$0xff]
        %v1142 = vld [vmem:[%s118 + $0x520] sm:$0xff]
        %v1143 = vld [vmem:[%s118 + $0x528] sm:$0xff]
        %v1144 = vld [vmem:[%s118 + $0x530] sm:$0xff]
        %v1145 = vld [vmem:[%s118 + $0x538] sm:$0xff]
        %v1146 = vld [vmem:[%s118 + $0x540] sm:$0xff]
        %v1147 = vld [vmem:[%s118 + $0x548] sm:$0xff]
        %v1148 = vld [vmem:[%s118 + $0x550] sm:$0xff]
        %v1149 = vld [vmem:[%s118 + $0x558] sm:$0xff]
        %v1150 = vld [vmem:[%s118 + $0x560] sm:$0xff]
        %v1151 = vld [vmem:[%s118 + $0x568] sm:$0xff]
        %v1152 = vld [vmem:[%s118 + $0x570] sm:$0xff]
        %v1153 = vld [vmem:[%s118 + $0x578] sm:$0xff]
        %v1154 = vld [vmem:[%s118 + $0x580] sm:$0xff]
        %v1155 = vld [vmem:[%s118 + $0x588] sm:$0xff]
        %v1156 = vld [vmem:[%s118 + $0x590] sm:$0xff]
        %v1157 = vld [vmem:[%s118 + $0x598] sm:$0xff]
        %v1158 = vld [vmem:[%s118 + $0x5a0] sm:$0xff]
        %v1159 = vld [vmem:[%s118 + $0x5a8] sm:$0xff]
        %v1160 = vld [vmem:[%s118 + $0x5b0] sm:$0xff]
        %v1161 = vld [vmem:[%s118 + $0x5b8] sm:$0xff]
        %v1162 = vld [vmem:[%s118 + $0x5c0] sm:$0xff]
        %v1163 = vld [vmem:[%s118 + $0x5c8] sm:$0xff]
        %v1164 = vld [vmem:[%s118 + $0x5d0] sm:$0xff]
        %v1165 = vld [vmem:[%s118 + $0x5d8] sm:$0xff]
        %v1166 = vld [vmem:[%s118 + $0x5e0] sm:$0xff]
        %v1167 = vld [vmem:[%s118 + $0x5e8] sm:$0xff]
        %v1168 = vld [vmem:[%s118 + $0x5f0] sm:$0xff]
        %v1169 = vld [vmem:[%s118 + $0x5f8] sm:$0xff]
        %v1170 = vld [vmem:[%s118 + $0x600] sm:$0xff]
        %v1171 = vld [vmem:[%s118 + $0x608] sm:$0xff]
        %v1172 = vld [vmem:[%s118 + $0x610] sm:$0xff]
        %v1173 = vld [vmem:[%s118 + $0x618] sm:$0xff]
        %v1174 = vld [vmem:[%s118 + $0x620] sm:$0xff]
        %v1175 = vld [vmem:[%s118 + $0x628] sm:$0xff]
        %v1176 = vld [vmem:[%s118 + $0x630] sm:$0xff]
        %v1177 = vld [vmem:[%s118 + $0x638] sm:$0xff]
        %v1178 = vld [vmem:[%s118 + $0x640] sm:$0xff]
        %v1179 = vld [vmem:[%s118 + $0x648] sm:$0xff]
        %v1180 = vld [vmem:[%s118 + $0x650] sm:$0xff]
        %v1181 = vld [vmem:[%s118 + $0x658] sm:$0xff]
        %v1182 = vld [vmem:[%s118 + $0x660] sm:$0xff]
        %v1183 = vld [vmem:[%s118 + $0x668] sm:$0xff]
        %v1184 = vld [vmem:[%s118 + $0x670] sm:$0xff]
        %v1185 = vld [vmem:[%s118 + $0x678] sm:$0xff]
        %v1186 = vld [vmem:[%s118 + $0x680] sm:$0xff]
        %v1187 = vld [vmem:[%s118 + $0x688] sm:$0xff]
        %v1188 = vld [vmem:[%s118 + $0x690] sm:$0xff]
        %v1189 = vld [vmem:[%s118 + $0x698] sm:$0xff]
        %v1190 = vld [vmem:[%s118 + $0x6a0] sm:$0xff]
        %v1191 = vld [vmem:[%s118 + $0x6a8] sm:$0xff]
        %v1192 = vld [vmem:[%s118 + $0x6b0] sm:$0xff]
        %v1193 = vld [vmem:[%s118 + $0x6b8] sm:$0xff]
        %v1194 = vld [vmem:[%s118 + $0x6c0] sm:$0xff]
        %v1195 = vld [vmem:[%s118 + $0x6c8] sm:$0xff]
        %v1196 = vld [vmem:[%s118 + $0x6d0] sm:$0xff]
        %v1197 = vld [vmem:[%s118 + $0x6d8] sm:$0xff]
        %v1198 = vld [vmem:[%s118 + $0x6e0] sm:$0xff]
        %v1199 = vld [vmem:[%s118 + $0x6e8] sm:$0xff]
        %v1200 = vld [vmem:[%s118 + $0x6f0] sm:$0xff]
        %v1201 = vld [vmem:[%s118 + $0x6f8] sm:$0xff]
        %v1202 = vld [vmem:[%s118 + $0x700] sm:$0xff]
        %v1203 = vld [vmem:[%s118 + $0x708] sm:$0xff]
        %v1204 = vld [vmem:[%s118 + $0x710] sm:$0xff]
        %v1205 = vld [vmem:[%s118 + $0x718] sm:$0xff]
        %v1206 = vld [vmem:[%s118 + $0x720] sm:$0xff]
        %v1207 = vld [vmem:[%s118 + $0x728] sm:$0xff]
        %v1208 = vld [vmem:[%s118 + $0x730] sm:$0xff]
        %v1209 = vld [vmem:[%s118 + $0x738] sm:$0xff]
        %v1210 = vld [vmem:[%s118 + $0x740] sm:$0xff]
        %v1211 = vld [vmem:[%s118 + $0x748] sm:$0xff]
        %v1212 = vld [vmem:[%s118 + $0x750] sm:$0xff]
        %v1213 = vld [vmem:[%s118 + $0x758] sm:$0xff]
        %v1214 = vld [vmem:[%s118 + $0x760] sm:$0xff]
        %v1215 = vld [vmem:[%s118 + $0x768] sm:$0xff]
        %v1216 = vld [vmem:[%s118 + $0x770] sm:$0xff]
        %v1217 = vld [vmem:[%s118 + $0x778] sm:$0xff]
        %v1218 = vld [vmem:[%s118 + $0x780] sm:$0xff]
        %v1219 = vld [vmem:[%s118 + $0x788] sm:$0xff]
        %v1220 = vld [vmem:[%s118 + $0x790] sm:$0xff]
        %v1221 = vld [vmem:[%s118 + $0x798] sm:$0xff]
        %v1222 = vld [vmem:[%s118 + $0x7a0] sm:$0xff]
        %v1223 = vld [vmem:[%s118 + $0x7a8] sm:$0xff]
        %v1224 = vld [vmem:[%s118 + $0x7b0] sm:$0xff]
        %v1225 = vld [vmem:[%s118 + $0x7b8] sm:$0xff]
        %v1226 = vld [vmem:[%s118 + $0x7c0] sm:$0xff]
        %v1227 = vld [vmem:[%s118 + $0x7c8] sm:$0xff]
        %v1228 = vld [vmem:[%s118 + $0x7d0] sm:$0xff]
        %v1229 = vld [vmem:[%s118 + $0x7d8] sm:$0xff]
        %v1230 = vld [vmem:[%s118 + $0x7e0] sm:$0xff]
        %v1231 = vld [vmem:[%s118 + $0x7e8] sm:$0xff]
        %v1232 = vld [vmem:[%s118 + $0x7f0] sm:$0xff]
        %v1233 = vld [vmem:[%s118 + $0x7f8] sm:$0xff]
        %v1234 = vld [vmem:[%s118 + $0x800] sm:$0xff]
        %v1235 = vld [vmem:[%s118 + $0x808] sm:$0xff]
        %v1236 = vld [vmem:[%s118 + $0x810] sm:$0xff]
        %v1237 = vld [vmem:[%s118 + $0x818] sm:$0xff]
        %v1238 = vld [vmem:[%s118 + $0x820] sm:$0xff]
        %v1239 = vld [vmem:[%s118 + $0x828] sm:$0xff]
        %v1240 = vld [vmem:[%s118 + $0x830] sm:$0xff]
        %v1241 = vld [vmem:[%s118 + $0x838] sm:$0xff]
        %v1242 = vld [vmem:[%s118 + $0x840] sm:$0xff]
        %v1243 = vld [vmem:[%s118 + $0x848] sm:$0xff]
        %v1244 = vld [vmem:[%s118 + $0x850] sm:$0xff]
        %v1245 = vld [vmem:[%s118 + $0x858] sm:$0xff]
        %v1246 = vld [vmem:[%s118 + $0x860] sm:$0xff]
        %v1247 = vld [vmem:[%s118 + $0x868] sm:$0xff]
        %v1248 = vld [vmem:[%s118 + $0x870] sm:$0xff]
        %v1249 = vld [vmem:[%s118 + $0x878] sm:$0xff]
        %v1250 = vld [vmem:[%s118 + $0x880] sm:$0xff]
        %v1251 = vld [vmem:[%s118 + $0x888] sm:$0xff]
        %v1252 = vld [vmem:[%s118 + $0x890] sm:$0xff]
        %v1253 = vld [vmem:[%s118 + $0x898] sm:$0xff]
        %v1254 = vld [vmem:[%s118 + $0x8a0] sm:$0xff]
        %v1255 = vld [vmem:[%s118 + $0x8a8] sm:$0xff]
        %v1256 = vld [vmem:[%s118 + $0x8b0] sm:$0xff]
        %v1257 = vld [vmem:[%s118 + $0x8b8] sm:$0xff]
        %v1258 = vld [vmem:[%s118 + $0x8c0] sm:$0xff]
        %v1259 = vld [vmem:[%s118 + $0x8c8] sm:$0xff]
        %v1260 = vld [vmem:[%s118 + $0x8d0] sm:$0xff]
        %v1261 = vld [vmem:[%s118 + $0x8d8] sm:$0xff]
        %v1262 = vld [vmem:[%s118 + $0x8e0] sm:$0xff]
        %v1263 = vld [vmem:[%s118 + $0x8e8] sm:$0xff]
        %v1264 = vld [vmem:[%s118 + $0x8f0] sm:$0xff]
        %v1265 = vld [vmem:[%s118 + $0x8f8] sm:$0xff]
        %v1266 = vmul.f32 %v978, 0.024
        %v1267 = vmul.f32 %v979, 0.024
        %v1268 = vmul.f32 %v980, 0.024
        %v1269 = vmul.f32 %v981, 0.024
        %v1270 = vmul.f32 %v982, 0.024
        %v1271 = vmul.f32 %v983, 0.024
        %v1272 = vmul.f32 %v984, 0.024
        %v1273 = vmul.f32 %v985, 0.024
        %v1274 = vmul.f32 %v986, 0.024
        %v1275 = vmul.f32 %v987, 0.024
        %v1276 = vmul.f32 %v988, 0.024
        %v1277 = vmul.f32 %v989, 0.024
        %v1278 = vmul.f32 %v990, 0.024
        %v1279 = vmul.f32 %v991, 0.024
        %v1280 = vmul.f32 %v992, 0.024
        %v1281 = vmul.f32 %v993, 0.024
        %v1282 = vmul.f32 %v994, 0.024
        %v1283 = vmul.f32 %v995, 0.024
        %v1284 = vmul.f32 %v996, 0.024
        %v1285 = vmul.f32 %v997, 0.024
        %v1286 = vmul.f32 %v998, 0.024
        %v1287 = vmul.f32 %v999, 0.024
        %v1288 = vmul.f32 %v1000, 0.024
        %v1289 = vmul.f32 %v1001, 0.024
        %v1290 = vmul.f32 %v1002, 0.024
        %v1291 = vmul.f32 %v1003, 0.024
        %v1292 = vmul.f32 %v1004, 0.024
        %v1293 = vmul.f32 %v1005, 0.024
        %v1294 = vmul.f32 %v1006, 0.024
        %v1295 = vmul.f32 %v1007, 0.024
        %v1296 = vmul.f32 %v1008, 0.024
        %v1297 = vmul.f32 %v1009, 0.024
        %v1298 = vmul.f32 %v1010, 0.024
        %v1299 = vmul.f32 %v1011, 0.024
        %v1300 = vmul.f32 %v1012, 0.024
        %v1301 = vmul.f32 %v1013, 0.024
        %v1302 = vmul.f32 %v1014, 0.024
        %v1303 = vmul.f32 %v1015, 0.024
        %v1304 = vmul.f32 %v1016, 0.024
        %v1305 = vmul.f32 %v1017, 0.024
        %v1306 = vmul.f32 %v1018, 0.024
        %v1307 = vmul.f32 %v1019, 0.024
        %v1308 = vmul.f32 %v1020, 0.024
        %v1309 = vmul.f32 %v1021, 0.024
        %v1310 = vmul.f32 %v1022, 0.024
        %v1311 = vmul.f32 %v1023, 0.024
        %v1312 = vmul.f32 %v1024, 0.024
        %v1313 = vmul.f32 %v1025, 0.024
        %v1314 = vmul.f32 %v1026, 0.024
        %v1315 = vmul.f32 %v1027, 0.024
        %v1316 = vmul.f32 %v1028, 0.024
        %v1317 = vmul.f32 %v1029, 0.024
        %v1318 = vmul.f32 %v1030, 0.024
        %v1319 = vmul.f32 %v1031, 0.024
        %v1320 = vmul.f32 %v1032, 0.024
        %v1321 = vmul.f32 %v1033, 0.024
        %v1322 = vmul.f32 %v1034, 0.024
        %v1323 = vmul.f32 %v1035, 0.024
        %v1324 = vmul.f32 %v1036, 0.024
        %v1325 = vmul.f32 %v1037, 0.024
        %v1326 = vmul.f32 %v1038, 0.024
        %v1327 = vmul.f32 %v1039, 0.024
        %v1328 = vmul.f32 %v1040, 0.024
        %v1329 = vmul.f32 %v1041, 0.024
        %v1330 = vmul.f32 %v1042, 0.024
        %v1331 = vmul.f32 %v1043, 0.024
        %v1332 = vmul.f32 %v1044, 0.024
        %v1333 = vmul.f32 %v1045, 0.024
        %v1334 = vmul.f32 %v1046, 0.024
        %v1335 = vmul.f32 %v1047, 0.024
        %v1336 = vmul.f32 %v1048, 0.024
        %v1337 = vmul.f32 %v1049, 0.024
        %v1338 = vmul.f32 %v1050, 0.024
        %v1339 = vmul.f32 %v1051, 0.024
        %v1340 = vmul.f32 %v1052, 0.024
        %v1341 = vmul.f32 %v1053, 0.024
        %v1342 = vmul.f32 %v1054, 0.024
        %v1343 = vmul.f32 %v1055, 0.024
        %v1344 = vmul.f32 %v1056, 0.024
        %v1345 = vmul.f32 %v1057, 0.024
        %v1346 = vmul.f32 %v1058, 0.024
        %v1347 = vmul.f32 %v1059, 0.024
        %v1348 = vmul.f32 %v1060, 0.024
        %v1349 = vmul.f32 %v1061, 0.024
        %v1350 = vmul.f32 %v1062, 0.024
        %v1351 = vmul.f32 %v1063, 0.024
        %v1352 = vmul.f32 %v1064, 0.024
        %v1353 = vmul.f32 %v1065, 0.024
        %v1354 = vmul.f32 %v1066, 0.024
        %v1355 = vmul.f32 %v1067, 0.024
        %v1356 = vmul.f32 %v1068, 0.024
        %v1357 = vmul.f32 %v1069, 0.024
        %v1358 = vmul.f32 %v1070, 0.024
        %v1359 = vmul.f32 %v1071, 0.024
        %v1360 = vmul.f32 %v1072, 0.024
        %v1361 = vmul.f32 %v1073, 0.024
        %v1362 = vmul.f32 %v1074, 0.024
        %v1363 = vmul.f32 %v1075, 0.024
        %v1364 = vmul.f32 %v1076, 0.024
        %v1365 = vmul.f32 %v1077, 0.024
        %v1366 = vmul.f32 %v1078, 0.024
        %v1367 = vmul.f32 %v1079, 0.024
        %v1368 = vmul.f32 %v1080, 0.024
        %v1369 = vmul.f32 %v1081, 0.024
        %v1370 = vmul.f32 %v1082, 0.024
        %v1371 = vmul.f32 %v1083, 0.024
        %v1372 = vmul.f32 %v1084, 0.024
        %v1373 = vmul.f32 %v1085, 0.024
        %v1374 = vmul.f32 %v1086, 0.024
        %v1375 = vmul.f32 %v1087, 0.024
        %v1376 = vmul.f32 %v1088, 0.024
        %v1377 = vmul.f32 %v1089, 0.024
        %v1378 = vmul.f32 %v1090, 0.024
        %v1379 = vmul.f32 %v1091, 0.024
        %v1380 = vmul.f32 %v1092, 0.024
        %v1381 = vmul.f32 %v1093, 0.024
        %v1382 = vmul.f32 %v1094, 0.024
        %v1383 = vmul.f32 %v1095, 0.024
        %v1384 = vmul.f32 %v1096, 0.024
        %v1385 = vmul.f32 %v1097, 0.024
        %v1386 = vmul.f32 %v1098, 0.024
        %v1387 = vmul.f32 %v1099, 0.024
        %v1388 = vmul.f32 %v1100, 0.024
        %v1389 = vmul.f32 %v1101, 0.024
        %v1390 = vmul.f32 %v1102, 0.024
        %v1391 = vmul.f32 %v1103, 0.024
        %v1392 = vmul.f32 %v1104, 0.024
        %v1393 = vmul.f32 %v1105, 0.024
        %v1394 = vmul.f32 %v1106, 0.024
        %v1395 = vmul.f32 %v1107, 0.024
        %v1396 = vmul.f32 %v1108, 0.024
        %v1397 = vmul.f32 %v1109, 0.024
        %v1398 = vmul.f32 %v1110, 0.024
        %v1399 = vmul.f32 %v1111, 0.024
        %v1400 = vmul.f32 %v1112, 0.024
        %v1401 = vmul.f32 %v1113, 0.024
        %v1402 = vmul.f32 %v1114, 0.024
        %v1403 = vmul.f32 %v1115, 0.024
        %v1404 = vmul.f32 %v1116, 0.024
        %v1405 = vmul.f32 %v1117, 0.024
        %v1406 = vmul.f32 %v1118, 0.024
        %v1407 = vmul.f32 %v1119, 0.024
        %v1408 = vmul.f32 %v1120, 0.024
        %v1409 = vmul.f32 %v1121, 0.024
        %v1410 = vmul.f32 %v1122, 0.024
        %v1411 = vmul.f32 %v1123, 0.024
        %v1412 = vmul.f32 %v1124, 0.024
        %v1413 = vmul.f32 %v1125, 0.024
        %v1414 = vmul.f32 %v1126, 0.024
        %v1415 = vmul.f32 %v1127, 0.024
        %v1416 = vmul.f32 %v1128, 0.024
        %v1417 = vmul.f32 %v1129, 0.024
        %v1418 = vmul.f32 %v1130, 0.024
        %v1419 = vmul.f32 %v1131, 0.024
        %v1420 = vmul.f32 %v1132, 0.024
        %v1421 = vmul.f32 %v1133, 0.024
        %v1422 = vmul.f32 %v1134, 0.024
        %v1423 = vmul.f32 %v1135, 0.024
        %v1424 = vmul.f32 %v1136, 0.024
        %v1425 = vmul.f32 %v1137, 0.024
        %v1426 = vmul.f32 %v1138, 0.024
        %v1427 = vmul.f32 %v1139, 0.024
        %v1428 = vmul.f32 %v1140, 0.024
        %v1429 = vmul.f32 %v1141, 0.024
        %v1430 = vmul.f32 %v1142, 0.024
        %v1431 = vmul.f32 %v1143, 0.024
        %v1432 = vmul.f32 %v1144, 0.024
        %v1433 = vmul.f32 %v1145, 0.024
        %v1434 = vmul.f32 %v1146, 0.024
        %v1435 = vmul.f32 %v1147, 0.024
        %v1436 = vmul.f32 %v1148, 0.024
        %v1437 = vmul.f32 %v1149, 0.024
        %v1438 = vmul.f32 %v1150, 0.024
        %v1439 = vmul.f32 %v1151, 0.024
        %v1440 = vmul.f32 %v1152, 0.024
        %v1441 = vmul.f32 %v1153, 0.024
        %v1442 = vmul.f32 %v1154, 0.024
        %v1443 = vmul.f32 %v1155, 0.024
        %v1444 = vmul.f32 %v1156, 0.024
        %v1445 = vmul.f32 %v1157, 0.024
        %v1446 = vmul.f32 %v1158, 0.024
        %v1447 = vmul.f32 %v1159, 0.024
        %v1448 = vmul.f32 %v1160, 0.024
        %v1449 = vmul.f32 %v1161, 0.024
        %v1450 = vmul.f32 %v1162, 0.024
        %v1451 = vmul.f32 %v1163, 0.024
        %v1452 = vmul.f32 %v1164, 0.024
        %v1453 = vmul.f32 %v1165, 0.024
        %v1454 = vmul.f32 %v1166, 0.024
        %v1455 = vmul.f32 %v1167, 0.024
        %v1456 = vmul.f32 %v1168, 0.024
        %v1457 = vmul.f32 %v1169, 0.024
        %v1458 = vmul.f32 %v1170, 0.024
        %v1459 = vmul.f32 %v1171, 0.024
        %v1460 = vmul.f32 %v1172, 0.024
        %v1461 = vmul.f32 %v1173, 0.024
        %v1462 = vmul.f32 %v1174, 0.024
        %v1463 = vmul.f32 %v1175, 0.024
        %v1464 = vmul.f32 %v1176, 0.024
        %v1465 = vmul.f32 %v1177, 0.024
        %v1466 = vmul.f32 %v1178, 0.024
        %v1467 = vmul.f32 %v1179, 0.024
        %v1468 = vmul.f32 %v1180, 0.024
        %v1469 = vmul.f32 %v1181, 0.024
        %v1470 = vmul.f32 %v1182, 0.024
        %v1471 = vmul.f32 %v1183, 0.024
        %v1472 = vmul.f32 %v1184, 0.024
        %v1473 = vmul.f32 %v1185, 0.024
        %v1474 = vmul.f32 %v1186, 0.024
        %v1475 = vmul.f32 %v1187, 0.024
        %v1476 = vmul.f32 %v1188, 0.024
        %v1477 = vmul.f32 %v1189, 0.024
        %v1478 = vmul.f32 %v1190, 0.024
        %v1479 = vmul.f32 %v1191, 0.024
        %v1480 = vmul.f32 %v1192, 0.024
        %v1481 = vmul.f32 %v1193, 0.024
        %v1482 = vmul.f32 %v1194, 0.024
        %v1483 = vmul.f32 %v1195, 0.024
        %v1484 = vmul.f32 %v1196, 0.024
        %v1485 = vmul.f32 %v1197, 0.024
        %v1486 = vmul.f32 %v1198, 0.024
        %v1487 = vmul.f32 %v1199, 0.024
        %v1488 = vmul.f32 %v1200, 0.024
        %v1489 = vmul.f32 %v1201, 0.024
        %v1490 = vmul.f32 %v1202, 0.024
        %v1491 = vmul.f32 %v1203, 0.024
        %v1492 = vmul.f32 %v1204, 0.024
        %v1493 = vmul.f32 %v1205, 0.024
        %v1494 = vmul.f32 %v1206, 0.024
        %v1495 = vmul.f32 %v1207, 0.024
        %v1496 = vmul.f32 %v1208, 0.024
        %v1497 = vmul.f32 %v1209, 0.024
        %v1498 = vmul.f32 %v1210, 0.024
        %v1499 = vmul.f32 %v1211, 0.024
        %v1500 = vmul.f32 %v1212, 0.024
        %v1501 = vmul.f32 %v1213, 0.024
        %v1502 = vmul.f32 %v1214, 0.024
        %v1503 = vmul.f32 %v1215, 0.024
        %v1504 = vmul.f32 %v1216, 0.024
        %v1505 = vmul.f32 %v1217, 0.024
        %v1506 = vmul.f32 %v1218, 0.024
        %v1507 = vmul.f32 %v1219, 0.024
        %v1508 = vmul.f32 %v1220, 0.024
        %v1509 = vmul.f32 %v1221, 0.024
        %v1510 = vmul.f32 %v1222, 0.024
        %v1511 = vmul.f32 %v1223, 0.024
        %v1512 = vmul.f32 %v1224, 0.024
        %v1513 = vmul.f32 %v1225, 0.024
        %v1514 = vmul.f32 %v1226, 0.024
        %v1515 = vmul.f32 %v1227, 0.024
        %v1516 = vmul.f32 %v1228, 0.024
        %v1517 = vmul.f32 %v1229, 0.024
        %v1518 = vmul.f32 %v1230, 0.024
        %v1519 = vmul.f32 %v1231, 0.024
        %v1520 = vmul.f32 %v1232, 0.024
        %v1521 = vmul.f32 %v1233, 0.024
        %v1522 = vmul.f32 %v1234, 0.024
        %v1523 = vmul.f32 %v1235, 0.024
        %v1524 = vmul.f32 %v1236, 0.024
        %v1525 = vmul.f32 %v1237, 0.024
        %v1526 = vmul.f32 %v1238, 0.024
        %v1527 = vmul.f32 %v1239, 0.024
        %v1528 = vmul.f32 %v1240, 0.024
        %v1529 = vmul.f32 %v1241, 0.024
        %v1530 = vmul.f32 %v1242, 0.024
        %v1531 = vmul.f32 %v1243, 0.024
        %v1532 = vmul.f32 %v1244, 0.024
        %v1533 = vmul.f32 %v1245, 0.024
        %v1534 = vmul.f32 %v1246, 0.024
        %v1535 = vmul.f32 %v1247, 0.024
        %v1536 = vmul.f32 %v1248, 0.024
        %v1537 = vmul.f32 %v1249, 0.024
        %v1538 = vmul.f32 %v1250, 0.024
        %v1539 = vmul.f32 %v1251, 0.024
        %v1540 = vmul.f32 %v1252, 0.024
        %v1541 = vmul.f32 %v1253, 0.024
        %v1542 = vmul.f32 %v1254, 0.024
        %v1543 = vmul.f32 %v1255, 0.024
        %v1544 = vmul.f32 %v1256, 0.024
        %v1545 = vmul.f32 %v1257, 0.024
        %v1546 = vmul.f32 %v1258, 0.024
        %v1547 = vmul.f32 %v1259, 0.024
        %v1548 = vmul.f32 %v1260, 0.024
        %v1549 = vmul.f32 %v1261, 0.024
        %v1550 = vmul.f32 %v1262, 0.024
        %v1551 = vmul.f32 %v1263, 0.024
        %v1552 = vmul.f32 %v1264, 0.024
        %v1553 = vmul.f32 %v1265, 0.024
        %v1554 = vadd.f32 %v690, %v1266
        %v1555 = vadd.f32 %v691, %v1267
        %v1556 = vadd.f32 %v692, %v1268
        %v1557 = vadd.f32 %v693, %v1269
        %v1558 = vadd.f32 %v694, %v1270
        %v1559 = vadd.f32 %v695, %v1271
        %v1560 = vadd.f32 %v696, %v1272
        %v1561 = vadd.f32 %v697, %v1273
        %v1562 = vadd.f32 %v698, %v1274
        %v1563 = vadd.f32 %v699, %v1275
        %v1564 = vadd.f32 %v700, %v1276
        %v1565 = vadd.f32 %v701, %v1277
        %v1566 = vadd.f32 %v702, %v1278
        %v1567 = vadd.f32 %v703, %v1279
        %v1568 = vadd.f32 %v704, %v1280
        %v1569 = vadd.f32 %v705, %v1281
        %v1570 = vadd.f32 %v706, %v1282
        %v1571 = vadd.f32 %v707, %v1283
        %v1572 = vadd.f32 %v708, %v1284
        %v1573 = vadd.f32 %v709, %v1285
        %v1574 = vadd.f32 %v710, %v1286
        %v1575 = vadd.f32 %v711, %v1287
        %v1576 = vadd.f32 %v712, %v1288
        %v1577 = vadd.f32 %v713, %v1289
        %v1578 = vadd.f32 %v714, %v1290
        %v1579 = vadd.f32 %v715, %v1291
        %v1580 = vadd.f32 %v716, %v1292
        %v1581 = vadd.f32 %v717, %v1293
        %v1582 = vadd.f32 %v718, %v1294
        %v1583 = vadd.f32 %v719, %v1295
        %v1584 = vadd.f32 %v720, %v1296
        %v1585 = vadd.f32 %v721, %v1297
        %v1586 = vadd.f32 %v722, %v1298
        %v1587 = vadd.f32 %v723, %v1299
        %v1588 = vadd.f32 %v724, %v1300
        %v1589 = vadd.f32 %v725, %v1301
        %v1590 = vadd.f32 %v726, %v1302
        %v1591 = vadd.f32 %v727, %v1303
        %v1592 = vadd.f32 %v728, %v1304
        %v1593 = vadd.f32 %v729, %v1305
        %v1594 = vadd.f32 %v730, %v1306
        %v1595 = vadd.f32 %v731, %v1307
        %v1596 = vadd.f32 %v732, %v1308
        %v1597 = vadd.f32 %v733, %v1309
        %v1598 = vadd.f32 %v734, %v1310
        %v1599 = vadd.f32 %v735, %v1311
        %v1600 = vadd.f32 %v736, %v1312
        %v1601 = vadd.f32 %v737, %v1313
        %v1602 = vadd.f32 %v738, %v1314
        %v1603 = vadd.f32 %v739, %v1315
        %v1604 = vadd.f32 %v740, %v1316
        %v1605 = vadd.f32 %v741, %v1317
        %v1606 = vadd.f32 %v742, %v1318
        %v1607 = vadd.f32 %v743, %v1319
        %v1608 = vadd.f32 %v744, %v1320
        %v1609 = vadd.f32 %v745, %v1321
        %v1610 = vadd.f32 %v746, %v1322
        %v1611 = vadd.f32 %v747, %v1323
        %v1612 = vadd.f32 %v748, %v1324
        %v1613 = vadd.f32 %v749, %v1325
        %v1614 = vadd.f32 %v750, %v1326
        %v1615 = vadd.f32 %v751, %v1327
        %v1616 = vadd.f32 %v752, %v1328
        %v1617 = vadd.f32 %v753, %v1329
        %v1618 = vadd.f32 %v754, %v1330
        %v1619 = vadd.f32 %v755, %v1331
        %v1620 = vadd.f32 %v756, %v1332
        %v1621 = vadd.f32 %v757, %v1333
        %v1622 = vadd.f32 %v758, %v1334
        %v1623 = vadd.f32 %v759, %v1335
        %v1624 = vadd.f32 %v760, %v1336
        %v1625 = vadd.f32 %v761, %v1337
        %v1626 = vadd.f32 %v762, %v1338
        %v1627 = vadd.f32 %v763, %v1339
        %v1628 = vadd.f32 %v764, %v1340
        %v1629 = vadd.f32 %v765, %v1341
        %v1630 = vadd.f32 %v766, %v1342
        %v1631 = vadd.f32 %v767, %v1343
        %v1632 = vadd.f32 %v768, %v1344
        %v1633 = vadd.f32 %v769, %v1345
        %v1634 = vadd.f32 %v770, %v1346
        %v1635 = vadd.f32 %v771, %v1347
        %v1636 = vadd.f32 %v772, %v1348
        %v1637 = vadd.f32 %v773, %v1349
        %v1638 = vadd.f32 %v774, %v1350
        %v1639 = vadd.f32 %v775, %v1351
        %v1640 = vadd.f32 %v776, %v1352
        %v1641 = vadd.f32 %v777, %v1353
        %v1642 = vadd.f32 %v778, %v1354
        %v1643 = vadd.f32 %v779, %v1355
        %v1644 = vadd.f32 %v780, %v1356
        %v1645 = vadd.f32 %v781, %v1357
        %v1646 = vadd.f32 %v782, %v1358
        %v1647 = vadd.f32 %v783, %v1359
        %v1648 = vadd.f32 %v784, %v1360
        %v1649 = vadd.f32 %v785, %v1361
        %v1650 = vadd.f32 %v786, %v1362
        %v1651 = vadd.f32 %v787, %v1363
        %v1652 = vadd.f32 %v788, %v1364
        %v1653 = vadd.f32 %v789, %v1365
        %v1654 = vadd.f32 %v790, %v1366
        %v1655 = vadd.f32 %v791, %v1367
        %v1656 = vadd.f32 %v792, %v1368
        %v1657 = vadd.f32 %v793, %v1369
        %v1658 = vadd.f32 %v794, %v1370
        %v1659 = vadd.f32 %v795, %v1371
        %v1660 = vadd.f32 %v796, %v1372
        %v1661 = vadd.f32 %v797, %v1373
        %v1662 = vadd.f32 %v798, %v1374
        %v1663 = vadd.f32 %v799, %v1375
        %v1664 = vadd.f32 %v800, %v1376
        %v1665 = vadd.f32 %v801, %v1377
        %v1666 = vadd.f32 %v802, %v1378
        %v1667 = vadd.f32 %v803, %v1379
        %v1668 = vadd.f32 %v804, %v1380
        %v1669 = vadd.f32 %v805, %v1381
        %v1670 = vadd.f32 %v806, %v1382
        %v1671 = vadd.f32 %v807, %v1383
        %v1672 = vadd.f32 %v808, %v1384
        %v1673 = vadd.f32 %v809, %v1385
        %v1674 = vadd.f32 %v810, %v1386
        %v1675 = vadd.f32 %v811, %v1387
        %v1676 = vadd.f32 %v812, %v1388
        %v1677 = vadd.f32 %v813, %v1389
        %v1678 = vadd.f32 %v814, %v1390
        %v1679 = vadd.f32 %v815, %v1391
        %v1680 = vadd.f32 %v816, %v1392
        %v1681 = vadd.f32 %v817, %v1393
        %v1682 = vadd.f32 %v818, %v1394
        %v1683 = vadd.f32 %v819, %v1395
        %v1684 = vadd.f32 %v820, %v1396
        %v1685 = vadd.f32 %v821, %v1397
        %v1686 = vadd.f32 %v822, %v1398
        %v1687 = vadd.f32 %v823, %v1399
        %v1688 = vadd.f32 %v824, %v1400
        %v1689 = vadd.f32 %v825, %v1401
        %v1690 = vadd.f32 %v826, %v1402
        %v1691 = vadd.f32 %v827, %v1403
        %v1692 = vadd.f32 %v828, %v1404
        %v1693 = vadd.f32 %v829, %v1405
        %v1694 = vadd.f32 %v830, %v1406
        %v1695 = vadd.f32 %v831, %v1407
        %v1696 = vadd.f32 %v832, %v1408
        %v1697 = vadd.f32 %v833, %v1409
        %v1698 = vadd.f32 %v834, %v1410
        %v1699 = vadd.f32 %v835, %v1411
        %v1700 = vadd.f32 %v836, %v1412
        %v1701 = vadd.f32 %v837, %v1413
        %v1702 = vadd.f32 %v838, %v1414
        %v1703 = vadd.f32 %v839, %v1415
        %v1704 = vadd.f32 %v840, %v1416
        %v1705 = vadd.f32 %v841, %v1417
        %v1706 = vadd.f32 %v842, %v1418
        %v1707 = vadd.f32 %v843, %v1419
        %v1708 = vadd.f32 %v844, %v1420
        %v1709 = vadd.f32 %v845, %v1421
        %v1710 = vadd.f32 %v846, %v1422
        %v1711 = vadd.f32 %v847, %v1423
        %v1712 = vadd.f32 %v848, %v1424
        %v1713 = vadd.f32 %v849, %v1425
        %v1714 = vadd.f32 %v850, %v1426
        %v1715 = vadd.f32 %v851, %v1427
        %v1716 = vadd.f32 %v852, %v1428
        %v1717 = vadd.f32 %v853, %v1429
        %v1718 = vadd.f32 %v854, %v1430
        %v1719 = vadd.f32 %v855, %v1431
        %v1720 = vadd.f32 %v856, %v1432
        %v1721 = vadd.f32 %v857, %v1433
        %v1722 = vadd.f32 %v858, %v1434
        %v1723 = vadd.f32 %v859, %v1435
        %v1724 = vadd.f32 %v860, %v1436
        %v1725 = vadd.f32 %v861, %v1437
        %v1726 = vadd.f32 %v862, %v1438
        %v1727 = vadd.f32 %v863, %v1439
        %v1728 = vadd.f32 %v864, %v1440
        %v1729 = vadd.f32 %v865, %v1441
        %v1730 = vadd.f32 %v866, %v1442
        %v1731 = vadd.f32 %v867, %v1443
        %v1732 = vadd.f32 %v868, %v1444
        %v1733 = vadd.f32 %v869, %v1445
        %v1734 = vadd.f32 %v870, %v1446
        %v1735 = vadd.f32 %v871, %v1447
        %v1736 = vadd.f32 %v872, %v1448
        %v1737 = vadd.f32 %v873, %v1449
        %v1738 = vadd.f32 %v874, %v1450
        %v1739 = vadd.f32 %v875, %v1451
        %v1740 = vadd.f32 %v876, %v1452
        %v1741 = vadd.f32 %v877, %v1453
        %v1742 = vadd.f32 %v878, %v1454
        %v1743 = vadd.f32 %v879, %v1455
        %v1744 = vadd.f32 %v880, %v1456
        %v1745 = vadd.f32 %v881, %v1457
        %v1746 = vadd.f32 %v882, %v1458
        %v1747 = vadd.f32 %v883, %v1459
        %v1748 = vadd.f32 %v884, %v1460
        %v1749 = vadd.f32 %v885, %v1461
        %v1750 = vadd.f32 %v886, %v1462
        %v1751 = vadd.f32 %v887, %v1463
        %v1752 = vadd.f32 %v888, %v1464
        %v1753 = vadd.f32 %v889, %v1465
        %v1754 = vadd.f32 %v890, %v1466
        %v1755 = vadd.f32 %v891, %v1467
        %v1756 = vadd.f32 %v892, %v1468
        %v1757 = vadd.f32 %v893, %v1469
        %v1758 = vadd.f32 %v894, %v1470
        %v1759 = vadd.f32 %v895, %v1471
        %v1760 = vadd.f32 %v896, %v1472
        %v1761 = vadd.f32 %v897, %v1473
        %v1762 = vadd.f32 %v898, %v1474
        %v1763 = vadd.f32 %v899, %v1475
        %v1764 = vadd.f32 %v900, %v1476
        %v1765 = vadd.f32 %v901, %v1477
        %v1766 = vadd.f32 %v902, %v1478
        %v1767 = vadd.f32 %v903, %v1479
        %v1768 = vadd.f32 %v904, %v1480
        %v1769 = vadd.f32 %v905, %v1481
        %v1770 = vadd.f32 %v906, %v1482
        %v1771 = vadd.f32 %v907, %v1483
        %v1772 = vadd.f32 %v908, %v1484
        %v1773 = vadd.f32 %v909, %v1485
        %v1774 = vadd.f32 %v910, %v1486
        %v1775 = vadd.f32 %v911, %v1487
        %v1776 = vadd.f32 %v912, %v1488
        %v1777 = vadd.f32 %v913, %v1489
        %v1778 = vadd.f32 %v914, %v1490
        %v1779 = vadd.f32 %v915, %v1491
        %v1780 = vadd.f32 %v916, %v1492
        %v1781 = vadd.f32 %v917, %v1493
        %v1782 = vadd.f32 %v918, %v1494
        %v1783 = vadd.f32 %v919, %v1495
        %v1784 = vadd.f32 %v920, %v1496
        %v1785 = vadd.f32 %v921, %v1497
        %v1786 = vadd.f32 %v922, %v1498
        %v1787 = vadd.f32 %v923, %v1499
        %v1788 = vadd.f32 %v924, %v1500
        %v1789 = vadd.f32 %v925, %v1501
        %v1790 = vadd.f32 %v926, %v1502
        %v1791 = vadd.f32 %v927, %v1503
        %v1792 = vadd.f32 %v928, %v1504
        %v1793 = vadd.f32 %v929, %v1505
        %v1794 = vadd.f32 %v930, %v1506
        %v1795 = vadd.f32 %v931, %v1507
        %v1796 = vadd.f32 %v932, %v1508
        %v1797 = vadd.f32 %v933, %v1509
        %v1798 = vadd.f32 %v934, %v1510
        %v1799 = vadd.f32 %v935, %v1511
        %v1800 = vadd.f32 %v936, %v1512
        %v1801 = vadd.f32 %v937, %v1513
        %v1802 = vadd.f32 %v938, %v1514
        %v1803 = vadd.f32 %v939, %v1515
        %v1804 = vadd.f32 %v940, %v1516
        %v1805 = vadd.f32 %v941, %v1517
        %v1806 = vadd.f32 %v942, %v1518
        %v1807 = vadd.f32 %v943, %v1519
        %v1808 = vadd.f32 %v944, %v1520
        %v1809 = vadd.f32 %v945, %v1521
        %v1810 = vadd.f32 %v946, %v1522
        %v1811 = vadd.f32 %v947, %v1523
        %v1812 = vadd.f32 %v948, %v1524
        %v1813 = vadd.f32 %v949, %v1525
        %v1814 = vadd.f32 %v950, %v1526
        %v1815 = vadd.f32 %v951, %v1527
        %v1816 = vadd.f32 %v952, %v1528
        %v1817 = vadd.f32 %v953, %v1529
        %v1818 = vadd.f32 %v954, %v1530
        %v1819 = vadd.f32 %v955, %v1531
        %v1820 = vadd.f32 %v956, %v1532
        %v1821 = vadd.f32 %v957, %v1533
        %v1822 = vadd.f32 %v958, %v1534
        %v1823 = vadd.f32 %v959, %v1535
        %v1824 = vadd.f32 %v960, %v1536
        %v1825 = vadd.f32 %v961, %v1537
        %v1826 = vadd.f32 %v962, %v1538
        %v1827 = vadd.f32 %v963, %v1539
        %v1828 = vadd.f32 %v964, %v1540
        %v1829 = vadd.f32 %v965, %v1541
        %v1830 = vadd.f32 %v966, %v1542
        %v1831 = vadd.f32 %v967, %v1543
        %v1832 = vadd.f32 %v968, %v1544
        %v1833 = vadd.f32 %v969, %v1545
        %v1834 = vadd.f32 %v970, %v1546
        %v1835 = vadd.f32 %v971, %v1547
        %v1836 = vadd.f32 %v972, %v1548
        %v1837 = vadd.f32 %v973, %v1549
        %v1838 = vadd.f32 %v974, %v1550
        %v1839 = vadd.f32 %v975, %v1551
        %v1840 = vadd.f32 %v976, %v1552
        %v1841 = vadd.f32 %v977, %v1553
        %1842 = vst [vmem:[%s136 + $0x148] sm:$0xff] %v1554
        %1843 = vst [vmem:[%s136 + $0x150] sm:$0xff] %v1555
        %1844 = vst [vmem:[%s136 + $0x158] sm:$0xff] %v1556
        %1845 = vst [vmem:[%s136 + $0x170] sm:$0xff] %v1557
        %1846 = vst [vmem:[%s136 + $0x178] sm:$0xff] %v1558
        %1847 = vst [vmem:[%s136 + $0x180] sm:$0xff] %v1559
        %1848 = vst [vmem:[%s136 + $0x198] sm:$0xff] %v1560
        %1849 = vst [vmem:[%s136 + $0x1a0] sm:$0xff] %v1561
        %1850 = vst [vmem:[%s136 + $0x1a8] sm:$0xff] %v1562
        %1851 = vst [vmem:[%s136 + $0x1c0] sm:$0xff] %v1563
        %1852 = vst [vmem:[%s136 + $0x1c8] sm:$0xff] %v1564
        %1853 = vst [vmem:[%s136 + $0x1d0] sm:$0xff] %v1565
        %1854 = vst [vmem:[%s136 + $0x1e8] sm:$0xff] %v1566
        %1855 = vst [vmem:[%s136 + $0x1f0] sm:$0xff] %v1567
        %1856 = vst [vmem:[%s136 + $0x1f8] sm:$0xff] %v1568
        %1857 = vst [vmem:[%s136 + $0x210] sm:$0xff] %v1569
        %1858 = vst [vmem:[%s136 + $0x218] sm:$0xff] %v1570
        %1859 = vst [vmem:[%s136 + $0x220] sm:$0xff] %v1571
        %1860 = vst [vmem:[%s136 + $0x238] sm:$0xff] %v1572
        %1861 = vst [vmem:[%s136 + $0x240] sm:$0xff] %v1573
        %1862 = vst [vmem:[%s136 + $0x248] sm:$0xff] %v1574
        %1863 = vst [vmem:[%s136 + $0x260] sm:$0xff] %v1575
        %1864 = vst [vmem:[%s136 + $0x268] sm:$0xff] %v1576
        %1865 = vst [vmem:[%s136 + $0x270] sm:$0xff] %v1577
        %1866 = vst [vmem:[%s136 + $0x288] sm:$0xff] %v1578
        %1867 = vst [vmem:[%s136 + $0x290] sm:$0xff] %v1579
        %1868 = vst [vmem:[%s136 + $0x298] sm:$0xff] %v1580
        %1869 = vst [vmem:[%s136 + $0x2b0] sm:$0xff] %v1581
        %1870 = vst [vmem:[%s136 + $0x2b8] sm:$0xff] %v1582
        %1871 = vst [vmem:[%s136 + $0x2c0] sm:$0xff] %v1583
        %1872 = vst [vmem:[%s136 + $0x2d8] sm:$0xff] %v1584
        %1873 = vst [vmem:[%s136 + $0x2e0] sm:$0xff] %v1585
        %1874 = vst [vmem:[%s136 + $0x2e8] sm:$0xff] %v1586
        %1875 = vst [vmem:[%s136 + $0x300] sm:$0xff] %v1587
        %1876 = vst [vmem:[%s136 + $0x308] sm:$0xff] %v1588
        %1877 = vst [vmem:[%s136 + $0x310] sm:$0xff] %v1589
        %1878 = vst [vmem:[%s136 + $0x328] sm:$0xff] %v1590
        %1879 = vst [vmem:[%s136 + $0x330] sm:$0xff] %v1591
        %1880 = vst [vmem:[%s136 + $0x338] sm:$0xff] %v1592
        %1881 = vst [vmem:[%s136 + $0x350] sm:$0xff] %v1593
        %1882 = vst [vmem:[%s136 + $0x358] sm:$0xff] %v1594
        %1883 = vst [vmem:[%s136 + $0x360] sm:$0xff] %v1595
        %1884 = vst [vmem:[%s136 + $0x378] sm:$0xff] %v1596
        %1885 = vst [vmem:[%s136 + $0x380] sm:$0xff] %v1597
        %1886 = vst [vmem:[%s136 + $0x388] sm:$0xff] %v1598
        %1887 = vst [vmem:[%s136 + $0x3a0] sm:$0xff] %v1599
        %1888 = vst [vmem:[%s136 + $0x3a8] sm:$0xff] %v1600
        %1889 = vst [vmem:[%s136 + $0x3b0] sm:$0xff] %v1601
        %1890 = vst [vmem:[%s136 + $0x3c8] sm:$0xff] %v1602
        %1891 = vst [vmem:[%s136 + $0x3d0] sm:$0xff] %v1603
        %1892 = vst [vmem:[%s136 + $0x3d8] sm:$0xff] %v1604
        %1893 = vst [vmem:[%s136 + $0x3f0] sm:$0xff] %v1605
        %1894 = vst [vmem:[%s136 + $0x3f8] sm:$0xff] %v1606
        %1895 = vst [vmem:[%s136 + $0x400] sm:$0xff] %v1607
        %1896 = vst [vmem:[%s136 + $0x418] sm:$0xff] %v1608
        %1897 = vst [vmem:[%s136 + $0x420] sm:$0xff] %v1609
        %1898 = vst [vmem:[%s136 + $0x428] sm:$0xff] %v1610
        %1899 = vst [vmem:[%s136 + $0x440] sm:$0xff] %v1611
        %1900 = vst [vmem:[%s136 + $0x448] sm:$0xff] %v1612
        %1901 = vst [vmem:[%s136 + $0x450] sm:$0xff] %v1613
        %1902 = vst [vmem:[%s136 + $0x468] sm:$0xff] %v1614
        %1903 = vst [vmem:[%s136 + $0x470] sm:$0xff] %v1615
        %1904 = vst [vmem:[%s136 + $0x478] sm:$0xff] %v1616
        %1905 = vst [vmem:[%s136 + $0x490] sm:$0xff] %v1617
        %1906 = vst [vmem:[%s136 + $0x498] sm:$0xff] %v1618
        %1907 = vst [vmem:[%s136 + $0x4a0] sm:$0xff] %v1619
        %1908 = vst [vmem:[%s136 + $0x4b8] sm:$0xff] %v1620
        %1909 = vst [vmem:[%s136 + $0x4c0] sm:$0xff] %v1621
        %1910 = vst [vmem:[%s136 + $0x4c8] sm:$0xff] %v1622
        %1911 = vst [vmem:[%s136 + $0x4e0] sm:$0xff] %v1623
        %1912 = vst [vmem:[%s136 + $0x4e8] sm:$0xff] %v1624
        %1913 = vst [vmem:[%s136 + $0x4f0] sm:$0xff] %v1625
        %1914 = vst [vmem:[%s136 + $0x788] sm:$0xff] %v1626
        %1915 = vst [vmem:[%s136 + $0x790] sm:$0xff] %v1627
        %1916 = vst [vmem:[%s136 + $0x798] sm:$0xff] %v1628
        %1917 = vst [vmem:[%s136 + $0x7b0] sm:$0xff] %v1629
        %1918 = vst [vmem:[%s136 + $0x7b8] sm:$0xff] %v1630
        %1919 = vst [vmem:[%s136 + $0x7c0] sm:$0xff] %v1631
        %1920 = vst [vmem:[%s136 + $0x7d8] sm:$0xff] %v1632
        %1921 = vst [vmem:[%s136 + $0x7e0] sm:$0xff] %v1633
        %1922 = vst [vmem:[%s136 + $0x7e8] sm:$0xff] %v1634
        %1923 = vst [vmem:[%s136 + $0x800] sm:$0xff] %v1635
        %1924 = vst [vmem:[%s136 + $0x808] sm:$0xff] %v1636
        %1925 = vst [vmem:[%s136 + $0x810] sm:$0xff] %v1637
        %1926 = vst [vmem:[%s136 + $0x828] sm:$0xff] %v1638
        %1927 = vst [vmem:[%s136 + $0x830] sm:$0xff] %v1639
        %1928 = vst [vmem:[%s136 + $0x838] sm:$0xff] %v1640
        %1929 = vst [vmem:[%s136 + $0x850] sm:$0xff] %v1641
        %1930 = vst [vmem:[%s136 + $0x858] sm:$0xff] %v1642
        %1931 = vst [vmem:[%s136 + $0x860] sm:$0xff] %v1643
        %1932 = vst [vmem:[%s136 + $0x878] sm:$0xff] %v1644
        %1933 = vst [vmem:[%s136 + $0x880] sm:$0xff] %v1645
        %1934 = vst [vmem:[%s136 + $0x888] sm:$0xff] %v1646
        %1935 = vst [vmem:[%s136 + $0x8a0] sm:$0xff] %v1647
        %1936 = vst [vmem:[%s136 + $0x8a8] sm:$0xff] %v1648
        %1937 = vst [vmem:[%s136 + $0x8b0] sm:$0xff] %v1649
        %1938 = vst [vmem:[%s136 + $0x8c8] sm:$0xff] %v1650
        %1939 = vst [vmem:[%s136 + $0x8d0] sm:$0xff] %v1651
        %1940 = vst [vmem:[%s136 + $0x8d8] sm:$0xff] %v1652
        %1941 = vst [vmem:[%s136 + $0x8f0] sm:$0xff] %v1653
        %1942 = vst [vmem:[%s136 + $0x8f8] sm:$0xff] %v1654
        %1943 = vst [vmem:[%s136 + $0x900] sm:$0xff] %v1655
        %1944 = vst [vmem:[%s136 + $0x918] sm:$0xff] %v1656
        %1945 = vst [vmem:[%s136 + $0x920] sm:$0xff] %v1657
        %1946 = vst [vmem:[%s136 + $0x928] sm:$0xff] %v1658
        %1947 = vst [vmem:[%s136 + $0x940] sm:$0xff] %v1659
        %1948 = vst [vmem:[%s136 + $0x948] sm:$0xff] %v1660
        %1949 = vst [vmem:[%s136 + $0x950] sm:$0xff] %v1661
        %1950 = vst [vmem:[%s136 + $0x968] sm:$0xff] %v1662
        %1951 = vst [vmem:[%s136 + $0x970] sm:$0xff] %v1663
        %1952 = vst [vmem:[%s136 + $0x978] sm:$0xff] %v1664
        %1953 = vst [vmem:[%s136 + $0x990] sm:$0xff] %v1665
        %1954 = vst [vmem:[%s136 + $0x998] sm:$0xff] %v1666
        %1955 = vst [vmem:[%s136 + $0x9a0] sm:$0xff] %v1667
        %1956 = vst [vmem:[%s136 + $0x9b8] sm:$0xff] %v1668
        %1957 = vst [vmem:[%s136 + $0x9c0] sm:$0xff] %v1669
        %1958 = vst [vmem:[%s136 + $0x9c8] sm:$0xff] %v1670
        %1959 = vst [vmem:[%s136 + $0x9e0] sm:$0xff] %v1671
        %1960 = vst [vmem:[%s136 + $0x9e8] sm:$0xff] %v1672
        %1961 = vst [vmem:[%s136 + $0x9f0] sm:$0xff] %v1673
        %1962 = vst [vmem:[%s136 + $0xa08] sm:$0xff] %v1674
        %1963 = vst [vmem:[%s136 + $0xa10] sm:$0xff] %v1675
        %1964 = vst [vmem:[%s136 + $0xa18] sm:$0xff] %v1676
        %1965 = vst [vmem:[%s136 + $0xa30] sm:$0xff] %v1677
        %1966 = vst [vmem:[%s136 + $0xa38] sm:$0xff] %v1678
        %1967 = vst [vmem:[%s136 + $0xa40] sm:$0xff] %v1679
        %1968 = vst [vmem:[%s136 + $0xa58] sm:$0xff] %v1680
        %1969 = vst [vmem:[%s136 + $0xa60] sm:$0xff] %v1681
        %1970 = vst [vmem:[%s136 + $0xa68] sm:$0xff] %v1682
        %1971 = vst [vmem:[%s136 + $0xa80] sm:$0xff] %v1683
        %1972 = vst [vmem:[%s136 + $0xa88] sm:$0xff] %v1684
        %1973 = vst [vmem:[%s136 + $0xa90] sm:$0xff] %v1685
        %1974 = vst [vmem:[%s136 + $0xaa8] sm:$0xff] %v1686
        %1975 = vst [vmem:[%s136 + $0xab0] sm:$0xff] %v1687
        %1976 = vst [vmem:[%s136 + $0xab8] sm:$0xff] %v1688
        %1977 = vst [vmem:[%s136 + $0xad0] sm:$0xff] %v1689
        %1978 = vst [vmem:[%s136 + $0xad8] sm:$0xff] %v1690
        %1979 = vst [vmem:[%s136 + $0xae0] sm:$0xff] %v1691
        %1980 = vst [vmem:[%s136 + $0xaf8] sm:$0xff] %v1692
        %1981 = vst [vmem:[%s136 + $0xb00] sm:$0xff] %v1693
        %1982 = vst [vmem:[%s136 + $0xb08] sm:$0xff] %v1694
        %1983 = vst [vmem:[%s136 + $0xb20] sm:$0xff] %v1695
        %1984 = vst [vmem:[%s136 + $0xb28] sm:$0xff] %v1696
        %1985 = vst [vmem:[%s136 + $0xb30] sm:$0xff] %v1697
        %1986 = vst [vmem:[%s136 + $0xdc8] sm:$0xff] %v1698
        %1987 = vst [vmem:[%s136 + $0xdd0] sm:$0xff] %v1699
        %1988 = vst [vmem:[%s136 + $0xdd8] sm:$0xff] %v1700
        %1989 = vst [vmem:[%s136 + $0xdf0] sm:$0xff] %v1701
        %1990 = vst [vmem:[%s136 + $0xdf8] sm:$0xff] %v1702
        %1991 = vst [vmem:[%s136 + $0xe00] sm:$0xff] %v1703
        %1992 = vst [vmem:[%s136 + $0xe18] sm:$0xff] %v1704
        %1993 = vst [vmem:[%s136 + $0xe20] sm:$0xff] %v1705
        %1994 = vst [vmem:[%s136 + $0xe28] sm:$0xff] %v1706
        %1995 = vst [vmem:[%s136 + $0xe40] sm:$0xff] %v1707
        %1996 = vst [vmem:[%s136 + $0xe48] sm:$0xff] %v1708
        %1997 = vst [vmem:[%s136 + $0xe50] sm:$0xff] %v1709
        %1998 = vst [vmem:[%s136 + $0xe68] sm:$0xff] %v1710
        %1999 = vst [vmem:[%s136 + $0xe70] sm:$0xff] %v1711
        %2000 = vst [vmem:[%s136 + $0xe78] sm:$0xff] %v1712
        %2001 = vst [vmem:[%s136 + $0xe90] sm:$0xff] %v1713
        %2002 = vst [vmem:[%s136 + $0xe98] sm:$0xff] %v1714
        %2003 = vst [vmem:[%s136 + $0xea0] sm:$0xff] %v1715
        %2004 = vst [vmem:[%s136 + $0xeb8] sm:$0xff] %v1716
        %2005 = vst [vmem:[%s136 + $0xec0] sm:$0xff] %v1717
        %2006 = vst [vmem:[%s136 + $0xec8] sm:$0xff] %v1718
        %2007 = vst [vmem:[%s136 + $0xee0] sm:$0xff] %v1719
        %2008 = vst [vmem:[%s136 + $0xee8] sm:$0xff] %v1720
        %2009 = vst [vmem:[%s136 + $0xef0] sm:$0xff] %v1721
        %2010 = vst [vmem:[%s136 + $0xf08] sm:$0xff] %v1722
        %2011 = vst [vmem:[%s136 + $0xf10] sm:$0xff] %v1723
        %2012 = vst [vmem:[%s136 + $0xf18] sm:$0xff] %v1724
        %2013 = vst [vmem:[%s136 + $0xf30] sm:$0xff] %v1725
        %2014 = vst [vmem:[%s136 + $0xf38] sm:$0xff] %v1726
        %2015 = vst [vmem:[%s136 + $0xf40] sm:$0xff] %v1727
        %2016 = vst [vmem:[%s136 + $0xf58] sm:$0xff] %v1728
        %2017 = vst [vmem:[%s136 + $0xf60] sm:$0xff] %v1729
        %2018 = vst [vmem:[%s136 + $0xf68] sm:$0xff] %v1730
        %2019 = vst [vmem:[%s136 + $0xf80] sm:$0xff] %v1731
        %2020 = vst [vmem:[%s136 + $0xf88] sm:$0xff] %v1732
        %2021 = vst [vmem:[%s136 + $0xf90] sm:$0xff] %v1733
        %2022 = vst [vmem:[%s136 + $0xfa8] sm:$0xff] %v1734
        %2023 = vst [vmem:[%s136 + $0xfb0] sm:$0xff] %v1735
        %2024 = vst [vmem:[%s136 + $0xfb8] sm:$0xff] %v1736
        %2025 = vst [vmem:[%s136 + $0xfd0] sm:$0xff] %v1737
        %2026 = vst [vmem:[%s136 + $0xfd8] sm:$0xff] %v1738
        %2027 = vst [vmem:[%s136 + $0xfe0] sm:$0xff] %v1739
        %2028 = vst [vmem:[%s136 + $0xff8] sm:$0xff] %v1740
        %2029 = vst [vmem:[%s136 + $0x1000] sm:$0xff] %v1741
        %2030 = vst [vmem:[%s136 + $0x1008] sm:$0xff] %v1742
        %2031 = vst [vmem:[%s136 + $0x1020] sm:$0xff] %v1743
        %2032 = vst [vmem:[%s136 + $0x1028] sm:$0xff] %v1744
        %2033 = vst [vmem:[%s136 + $0x1030] sm:$0xff] %v1745
        %2034 = vst [vmem:[%s136 + $0x1048] sm:$0xff] %v1746
        %2035 = vst [vmem:[%s136 + $0x1050] sm:$0xff] %v1747
        %2036 = vst [vmem:[%s136 + $0x1058] sm:$0xff] %v1748
        %2037 = vst [vmem:[%s136 + $0x1070] sm:$0xff] %v1749
        %2038 = vst [vmem:[%s136 + $0x1078] sm:$0xff] %v1750
        %2039 = vst [vmem:[%s136 + $0x1080] sm:$0xff] %v1751
        %2040 = vst [vmem:[%s136 + $0x1098] sm:$0xff] %v1752
        %2041 = vst [vmem:[%s136 + $0x10a0] sm:$0xff] %v1753
        %2042 = vst [vmem:[%s136 + $0x10a8] sm:$0xff] %v1754
        %2043 = vst [vmem:[%s136 + $0x10c0] sm:$0xff] %v1755
        %2044 = vst [vmem:[%s136 + $0x10c8] sm:$0xff] %v1756
        %2045 = vst [vmem:[%s136 + $0x10d0] sm:$0xff] %v1757
        %2046 = vst [vmem:[%s136 + $0x10e8] sm:$0xff] %v1758
        %2047 = vst [vmem:[%s136 + $0x10f0] sm:$0xff] %v1759
        %2048 = vst [vmem:[%s136 + $0x10f8] sm:$0xff] %v1760
        %2049 = vst [vmem:[%s136 + $0x1110] sm:$0xff] %v1761
        %2050 = vst [vmem:[%s136 + $0x1118] sm:$0xff] %v1762
        %2051 = vst [vmem:[%s136 + $0x1120] sm:$0xff] %v1763
        %2052 = vst [vmem:[%s136 + $0x1138] sm:$0xff] %v1764
        %2053 = vst [vmem:[%s136 + $0x1140] sm:$0xff] %v1765
        %2054 = vst [vmem:[%s136 + $0x1148] sm:$0xff] %v1766
        %2055 = vst [vmem:[%s136 + $0x1160] sm:$0xff] %v1767
        %2056 = vst [vmem:[%s136 + $0x1168] sm:$0xff] %v1768
        %2057 = vst [vmem:[%s136 + $0x1170] sm:$0xff] %v1769
        %2058 = vst [vmem:[%s136 + $0x1408] sm:$0xff] %v1770
        %2059 = vst [vmem:[%s136 + $0x1410] sm:$0xff] %v1771
        %2060 = vst [vmem:[%s136 + $0x1418] sm:$0xff] %v1772
        %2061 = vst [vmem:[%s136 + $0x1430] sm:$0xff] %v1773
        %2062 = vst [vmem:[%s136 + $0x1438] sm:$0xff] %v1774
        %2063 = vst [vmem:[%s136 + $0x1440] sm:$0xff] %v1775
        %2064 = vst [vmem:[%s136 + $0x1458] sm:$0xff] %v1776
        %2065 = vst [vmem:[%s136 + $0x1460] sm:$0xff] %v1777
        %2066 = vst [vmem:[%s136 + $0x1468] sm:$0xff] %v1778
        %2067 = vst [vmem:[%s136 + $0x1480] sm:$0xff] %v1779
        %2068 = vst [vmem:[%s136 + $0x1488] sm:$0xff] %v1780
        %2069 = vst [vmem:[%s136 + $0x1490] sm:$0xff] %v1781
        %2070 = vst [vmem:[%s136 + $0x14a8] sm:$0xff] %v1782
        %2071 = vst [vmem:[%s136 + $0x14b0] sm:$0xff] %v1783
        %2072 = vst [vmem:[%s136 + $0x14b8] sm:$0xff] %v1784
        %2073 = vst [vmem:[%s136 + $0x14d0] sm:$0xff] %v1785
        %2074 = vst [vmem:[%s136 + $0x14d8] sm:$0xff] %v1786
        %2075 = vst [vmem:[%s136 + $0x14e0] sm:$0xff] %v1787
        %2076 = vst [vmem:[%s136 + $0x14f8] sm:$0xff] %v1788
        %2077 = vst [vmem:[%s136 + $0x1500] sm:$0xff] %v1789
        %2078 = vst [vmem:[%s136 + $0x1508] sm:$0xff] %v1790
        %2079 = vst [vmem:[%s136 + $0x1520] sm:$0xff] %v1791
        %2080 = vst [vmem:[%s136 + $0x1528] sm:$0xff] %v1792
        %2081 = vst [vmem:[%s136 + $0x1530] sm:$0xff] %v1793
        %2082 = vst [vmem:[%s136 + $0x1548] sm:$0xff] %v1794
        %2083 = vst [vmem:[%s136 + $0x1550] sm:$0xff] %v1795
        %2084 = vst [vmem:[%s136 + $0x1558] sm:$0xff] %v1796
        %2085 = vst [vmem:[%s136 + $0x1570] sm:$0xff] %v1797
        %2086 = vst [vmem:[%s136 + $0x1578] sm:$0xff] %v1798
        %2087 = vst [vmem:[%s136 + $0x1580] sm:$0xff] %v1799
        %2088 = vst [vmem:[%s136 + $0x1598] sm:$0xff] %v1800
        %2089 = vst [vmem:[%s136 + $0x15a0] sm:$0xff] %v1801
        %2090 = vst [vmem:[%s136 + $0x15a8] sm:$0xff] %v1802
        %2091 = vst [vmem:[%s136 + $0x15c0] sm:$0xff] %v1803
        %2092 = vst [vmem:[%s136 + $0x15c8] sm:$0xff] %v1804
        %2093 = vst [vmem:[%s136 + $0x15d0] sm:$0xff] %v1805
        %2094 = vst [vmem:[%s136 + $0x15e8] sm:$0xff] %v1806
        %2095 = vst [vmem:[%s136 + $0x15f0] sm:$0xff] %v1807
        %2096 = vst [vmem:[%s136 + $0x15f8] sm:$0xff] %v1808
        %2097 = vst [vmem:[%s136 + $0x1610] sm:$0xff] %v1809
        %2098 = vst [vmem:[%s136 + $0x1618] sm:$0xff] %v1810
        %2099 = vst [vmem:[%s136 + $0x1620] sm:$0xff] %v1811
        %2100 = vst [vmem:[%s136 + $0x1638] sm:$0xff] %v1812
        %2101 = vst [vmem:[%s136 + $0x1640] sm:$0xff] %v1813
        %2102 = vst [vmem:[%s136 + $0x1648] sm:$0xff] %v1814
        %2103 = vst [vmem:[%s136 + $0x1660] sm:$0xff] %v1815
        %2104 = vst [vmem:[%s136 + $0x1668] sm:$0xff] %v1816
        %2105 = vst [vmem:[%s136 + $0x1670] sm:$0xff] %v1817
        %2106 = vst [vmem:[%s136 + $0x1688] sm:$0xff] %v1818
        %2107 = vst [vmem:[%s136 + $0x1690] sm:$0xff] %v1819
        %2108 = vst [vmem:[%s136 + $0x1698] sm:$0xff] %v1820
        %2109 = vst [vmem:[%s136 + $0x16b0] sm:$0xff] %v1821
        %2110 = vst [vmem:[%s136 + $0x16b8] sm:$0xff] %v1822
        %2111 = vst [vmem:[%s136 + $0x16c0] sm:$0xff] %v1823
        %2112 = vst [vmem:[%s136 + $0x16d8] sm:$0xff] %v1824
        %2113 = vst [vmem:[%s136 + $0x16e0] sm:$0xff] %v1825
        %2114 = vst [vmem:[%s136 + $0x16e8] sm:$0xff] %v1826
        %2115 = vst [vmem:[%s136 + $0x1700] sm:$0xff] %v1827
        %2116 = vst [vmem:[%s136 + $0x1708] sm:$0xff] %v1828
        %2117 = vst [vmem:[%s136 + $0x1710] sm:$0xff] %v1829
        %2118 = vst [vmem:[%s136 + $0x1728] sm:$0xff] %v1830
        %2119 = vst [vmem:[%s136 + $0x1730] sm:$0xff] %v1831
        %2120 = vst [vmem:[%s136 + $0x1738] sm:$0xff] %v1832
        %2121 = vst [vmem:[%s136 + $0x1750] sm:$0xff] %v1833
        %2122 = vst [vmem:[%s136 + $0x1758] sm:$0xff] %v1834
        %2123 = vst [vmem:[%s136 + $0x1760] sm:$0xff] %v1835
        %2124 = vst [vmem:[%s136 + $0x1778] sm:$0xff] %v1836
        %2125 = vst [vmem:[%s136 + $0x1780] sm:$0xff] %v1837
        %2126 = vst [vmem:[%s136 + $0x1788] sm:$0xff] %v1838
        %2127 = vst [vmem:[%s136 + $0x17a0] sm:$0xff] %v1839
        %2128 = vst [vmem:[%s136 + $0x17a8] sm:$0xff] %v1840
        %2129 = vst [vmem:[%s136 + $0x17b0] sm:$0xff] %v1841
        %s2130 = sand.u32 %s53, 1
        %s2131 = scalar_lea.sflag [#allocation6], %s2130
        %s2132 = sand.u32 %s53, 1
        %s2133 = smul.addr %s2132, 6400
        %s2134 = scalar_lea.vmem [#allocation7], %s2133
        // Predicated region
        $region29: #{tpu_custom_call.1} parent=23 // pred_check
          %p2135 = pneg %p63
        $region30: #{tpu_custom_call.1} parent=23 // pred_check_branch
          %2137 = sbr.rel (%p2135) target = $region32
        $region31: #{tpu_custom_call.1} parent=23 // pred_region
          %s2138 = smul.u32 4, %s19
          %s2140 = ssub.s32 102400, 102400
          %2141 = vsyncadd %s2131, %s2140
          %s2142 = smul.addr %s2138, 200
          %s2143 = smul.addr %s2142, 128
          %s2144 = scalar_lea.hbm %s2, %s2143
          %s2145 = sshll.u32 %s2134, 4
          %s2146 = int_to_ptr.vmem [resolvable:$true] %s2145
          %2151 = dma.vmem_to_hbm [thread:$0]  %s2146, 102400, %s2144, %s2131, 640, 640, 40
        $region32: #{tpu_custom_call.1} parent=23 // pred_fallthru
          _
      $region24: #{tpu_custom_call.1} parent=5 // pred_fallthru
        _
      %p2152 = scmp.le.s32.totalorder 2, %s14
      // Predicated region
      $region33: #{tpu_custom_call.1} parent=5 // pred_check
        %p2153 = pneg %p2152
      $region34: #{tpu_custom_call.1} parent=5 // pred_check_branch
        %2155 = sbr.rel (%p2153) target = $region36
      $region35: #{tpu_custom_call.1} parent=5 // pred_region
        %s2156 = ssub.s32 %s14, 2
        // Predicated region
        $region37: #{tpu_custom_call.1} parent=35 // pred_check
          %p2157 = pneg %p69
        $region38: #{tpu_custom_call.1} parent=35 // pred_check_branch
          %2159 = sbr.rel (%p2157) target = $region40
        $region39: #{tpu_custom_call.1} parent=35 // pred_region
          %s2160 = sand.u32 %s54, 1
          %s2161 = scalar_lea.sflag [#allocation6], %s2160
          %s2162 = sand.u32 %s54, 1
          %s2163 = smul.addr %s2162, 6400
          %s2164 = scalar_lea.vmem [#allocation7], %s2163
          %2165 = dma.done %s2161, 102400
        $region40: #{tpu_custom_call.1} parent=35 // pred_fallthru
          _
      $region36: #{tpu_custom_call.1} parent=5 // pred_fallthru
        _
    $region6: #{tpu_custom_call.1} parent=1 // loop_footer
      %s18 = sadd.s32 1, %s14
    $region7: #{tpu_custom_call.1} parent=1 // loop_footer_branch
      %13 = sbr.rel target = $region3
    $region8: #{tpu_custom_call.1} parent=1 // loop_exit
      _
    %2166 = vsyncpa [#allocation5], 1
    %s2167 = scalar_lea.sflag [#allocation5], 1
    %2168 = vsyncpa %s2167, 1
    %2169 = vsyncpa [#allocation6], 1
    %s2170 = scalar_lea.sflag [#allocation6], 1
    %2171 = vsyncpa %s2170, 1
  %2172 = vsyncmov [#allocation3]
  %s2173 = vpop.sfrf %2172
  %p2174 = scmp.eq.s32.totalorder %s2173, 0
  %p2175 = pneg %p2174
  %2177 = shalt.err (%p2175)

// kernel: tpu_custom_call.1
$region0: #{tpu_custom_call.1}
  #allocation0 [shape = 'u32[]', space=smem, size = 0x4, offset = 0x4, fixed_abs, tag = 'smem constant byte address 0x4 - core index']
  #allocation1 [shape = 'u32[144,128]{1,0:T(1,128)}', space=vmem, size = 0x12000, scoped, tag = 'internal scratch']
  %s0 = inlined_call_operand.hbm [shape: f32[16,320,640], index: 0, kind: input, shape index: {}]
  %s1 = inlined_call_operand.hbm [shape: f32[16,192,384], index: 1, kind: input, shape index: {}]
  %s2 = inlined_call_operand.hbm [shape: f32[16,320,640], index: 2, kind: output, shape index: {}]
  %s3 = sld [smem:[#allocation0]]
  $region49: #{tpu_custom_call.1} parent=0
    _
  %s5 = ssub.s32 1, %s3
  %s6 = scalar_select 0, %s5, %s3
  $region1: #{tpu_custom_call.1} parent=0
    #allocation2 [shape = 'u8[6553600]{0}', space=vmem, size = 0x640000, scoped, tag = 'input window, operand 0']
    #allocation3 [shape = 's32[2]{0}', space=sflag, size = 0x8, scoped, tag = 'scoped memory for tpu_custom_call.1']
    #allocation4 [shape = 's32[2]{0}', space=sflag, size = 0x8, scoped, tag = 'scoped memory for tpu_custom_call.1']
    #allocation5 [shape = 'u8[2359296]{0}', space=vmem, size = 0x240000, scoped, tag = 'input window, operand 1']
    #allocation6 [shape = 's32[2]{0}', space=sflag, size = 0x8, scoped, tag = 'scoped memory for tpu_custom_call.1']
    #allocation7 [shape = 'u8[6553600]{0}', space=vmem, size = 0x640000, scoped, tag = 'output window, operand 0']
    %7 = vsyncpa [#allocation3], 0
    %s8 = scalar_lea.sflag [#allocation3], 1
    %9 = vsyncpa %s8, 0
    %10 = vsyncpa [#allocation6], 0
    %s11 = scalar_lea.sflag [#allocation6], 1
    %12 = vsyncpa %s11, 0
    %13 = vsyncpa [#allocation4], 0
    %s14 = scalar_lea.sflag [#allocation4], 1
    %15 = vsyncpa %s14, 0
    loop: start=0, step=1, limit=6
    $region2: #{tpu_custom_call.1} parent=1 // loop_pre_header
      _
    $region3: #{tpu_custom_call.1} parent=1 // loop_header
      %s17 = sphi 0, %s21
      %p18 = scmp.ge.s32.totalorder %s17, 6
      %s27 = sphi 0, %s29
      %s30 = sphi 0, %s27
      %s31 = sphi 0, %s30
      %s47 = sphi 0, %s31
      %s53 = sphi 0, %s55
      %s56 = sphi 0, %s53
      %s57 = sphi 0, %s56
      %s73 = sphi 0, %s57
      %s79 = sphi 0, %s81
      %s82 = sphi 0, %s79
      %s83 = sphi 0, %s82
      %s99 = sphi 0, %s83
    $region4: #{tpu_custom_call.1} parent=1 // loop_header_branch
      %20 = sbr.rel (%p18) target = $region8
    $region5: #{tpu_custom_call.1} parent=1 // loop_body
      %s22 = ssub.s32 %s17, 1
      %s23 = ssub.s32 %s17, 2
      %s24 = sadd.s32 %s17, 1
      %s25 = ssub.s32 %s17, %s24
      %p26 = scmp.eq.s32.totalorder %s25, 0
      %s28 = sadd.s32 %s27, 1
      %s29 = scalar_select %p26, %s27, %s28
      %p32 = pneg %p26
      %p33 = scmp.eq.s32.totalorder %s17, 3
      %p34 = por %p32, %p33
      %p35 = scmp.ne.s32.totalorder %s27, %s30
      %p36 = scmp.eq.s32.totalorder %s17, 0
      %p37 = por %p35, %p36
      %p38 = scmp.ne.s32.totalorder %s27, %s30
      %p39 = scmp.eq.s32.totalorder %s22, 3
      %p40 = por %p38, %p39
      %p41 = scmp.ne.s32.totalorder %s30, %s31
      %p42 = scmp.eq.s32.totalorder %s22, 0
      %p43 = por %p41, %p42
      %p44 = scmp.ne.s32.totalorder %s30, %s31
      %p45 = scmp.eq.s32.totalorder %s23, 3
      %p46 = por %p44, %p45
      %p48 = scmp.ne.s32.totalorder %s31, %s47
      %p49 = scmp.eq.s32.totalorder %s23, 0
      %p50 = por %p48, %p49
      %s51 = ssub.s32 %s17, %s24
      %p52 = scmp.eq.s32.totalorder %s51, 0
      %s54 = sadd.s32 %s53, 1
      %s55 = scalar_select %p52, %s53, %s54
      %p58 = pneg %p52
      %p59 = scmp.eq.s32.totalorder %s17, 3
      %p60 = por %p58, %p59
      %p61 = scmp.ne.s32.totalorder %s53, %s56
      %p62 = scmp.eq.s32.totalorder %s17, 0
      %p63 = por %p61, %p62
      %p64 = scmp.ne.s32.totalorder %s53, %s56
      %p65 = scmp.eq.s32.totalorder %s22, 3
      %p66 = por %p64, %p65
      %p67 = scmp.ne.s32.totalorder %s56, %s57
      %p68 = scmp.eq.s32.totalorder %s22, 0
      %p69 = por %p67, %p68
      %p70 = scmp.ne.s32.totalorder %s56, %s57
      %p71 = scmp.eq.s32.totalorder %s23, 3
      %p72 = por %p70, %p71
      %p74 = scmp.ne.s32.totalorder %s57, %s73
      %p75 = scmp.eq.s32.totalorder %s23, 0
      %p76 = por %p74, %p75
      %s77 = ssub.s32 %s17, %s24
      %p78 = scmp.eq.s32.totalorder %s77, 0
      %s80 = sadd.s32 %s79, 1
      %s81 = scalar_select %p78, %s79, %s80
      %p84 = pneg %p78
      %p85 = scmp.eq.s32.totalorder %s17, 3
      %p86 = por %p84, %p85
      %p87 = scmp.ne.s32.totalorder %s79, %s82
      %p88 = scmp.eq.s32.totalorder %s17, 0
      %p89 = por %p87, %p88
      %p90 = scmp.ne.s32.totalorder %s79, %s82
      %p91 = scmp.eq.s32.totalorder %s22, 3
      %p92 = por %p90, %p91
      %p93 = scmp.ne.s32.totalorder %s82, %s83
      %p94 = scmp.eq.s32.totalorder %s22, 0
      %p95 = por %p93, %p94
      %p96 = scmp.ne.s32.totalorder %s82, %s83
      %p97 = scmp.eq.s32.totalorder %s23, 3
      %p98 = por %p96, %p97
      %p100 = scmp.ne.s32.totalorder %s83, %s99
      %p101 = scmp.eq.s32.totalorder %s23, 0
      %p102 = por %p100, %p101
      %p103 = scmp.le.s32.totalorder 1, %s17
      %p104 = scmp.lt.s32.totalorder %s17, 5
      %p105 = pnand %p103, %p104
      %p106 = pneg %p105
      // Predicated region
      $region9: #{tpu_custom_call.1} parent=5 // pred_check
        _
      $region10: #{tpu_custom_call.1} parent=5 // pred_check_branch
        %108 = sbr.rel (%p105) target = $region12
      $region11: #{tpu_custom_call.1} parent=5 // pred_region
        %s109 = ssub.s32 %s17, 1
      $region12: #{tpu_custom_call.1} parent=5 // pred_fallthru
        _
      %p110 = scmp.lt.s32.totalorder %s17, 4
      // Predicated region
      $region13: #{tpu_custom_call.1} parent=5 // pred_check
        %p111 = pneg %p110
      $region14: #{tpu_custom_call.1} parent=5 // pred_check_branch
        %113 = sbr.rel (%p111) target = $region16
      $region15: #{tpu_custom_call.1} parent=5 // pred_region
        // Predicated region
        $region17: #{tpu_custom_call.1} parent=15 // pred_check
          %p114 = pneg %p37
        $region18: #{tpu_custom_call.1} parent=15 // pred_check_branch
          %116 = sbr.rel (%p114) target = $region20
        $region19: #{tpu_custom_call.1} parent=15 // pred_region
          %s117 = sand.u32 %s27, 1
          %s118 = scalar_lea.sflag [#allocation3], %s117
          %s119 = sand.u32 %s27, 1
          %s120 = smul.addr %s119, 6400
          %s121 = scalar_lea.vmem [#allocation2], %s120
          %s122 = smul.u32 4, %s17
          %s124 = ssub.s32 102400, 102400
          %125 = vsyncadd %s118, %s124
          %s126 = smul.addr %s122, 200
          %s127 = smul.addr %s126, 128
          %s128 = scalar_lea.hbm %s0, %s127
          %s129 = sshll.u32 %s121, 4
          %s130 = int_to_ptr.vmem [resolvable:$true] %s129
          %135 = dma.hbm_to_vmem [thread:$0]  %s128, 102400, %s130, %s118, 640, 640, 40
        $region20: #{tpu_custom_call.1} parent=15 // pred_fallthru
          _
        // Predicated region
        $region21: #{tpu_custom_call.1} parent=15 // pred_check
          %p136 = pneg %p63
        $region22: #{tpu_custom_call.1} parent=15 // pred_check_branch
          %138 = sbr.rel (%p136) target = $region24
        $region23: #{tpu_custom_call.1} parent=15 // pred_region
          %s139 = sand.u32 %s53, 1
          %s140 = scalar_lea.sflag [#allocation6], %s139
          %s141 = sand.u32 %s53, 1
          %s142 = smul.addr %s141, 2304
          %s143 = scalar_lea.vmem [#allocation5], %s142
          %s144 = smul.u32 4, %s17
          %s146 = ssub.s32 36864, 36864
          %147 = vsyncadd %s140, %s146
          %s148 = smul.addr %s144, 72
          %s149 = smul.addr %s148, 128
          %s150 = scalar_lea.hbm %s1, %s149
          %s151 = sshll.u32 %s143, 4
          %s152 = int_to_ptr.vmem [resolvable:$true] %s151
          %157 = dma.hbm_to_vmem [thread:$0]  %s150, 36864, %s152, %s140, 384, 384, 24
        $region24: #{tpu_custom_call.1} parent=15 // pred_fallthru
          _
      $region16: #{tpu_custom_call.1} parent=5 // pred_fallthru
        _
      %p158 = scmp.le.s32.totalorder 1, %s17
      %p159 = scmp.lt.s32.totalorder %s17, 5
      %p160 = pnand %p158, %p159
      %p161 = pneg %p160
      // Predicated region
      $region25: #{tpu_custom_call.1} parent=5 // pred_check
        _
      $region26: #{tpu_custom_call.1} parent=5 // pred_check_branch
        %163 = sbr.rel (%p160) target = $region28
      $region27: #{tpu_custom_call.1} parent=5 // pred_region
        %s164 = ssub.s32 %s17, 1
        %s165 = sand.u32 %s30, 1
        %s166 = scalar_lea.sflag [#allocation3], %s165
        %s167 = sand.u32 %s30, 1
        %s168 = smul.addr %s167, 6400
        %s169 = scalar_lea.vmem [#allocation2], %s168
        // Predicated region
        $region29: #{tpu_custom_call.1} parent=27 // pred_check
          %p170 = pneg %p43
        $region30: #{tpu_custom_call.1} parent=27 // pred_check_branch
          %172 = sbr.rel (%p170) target = $region32
        $region31: #{tpu_custom_call.1} parent=27 // pred_region
          %173 = dma.done %s166, 102400
        $region32: #{tpu_custom_call.1} parent=27 // pred_fallthru
          _
        %s174 = sand.u32 %s56, 1
        %s175 = scalar_lea.sflag [#allocation6], %s174
        %s176 = sand.u32 %s56, 1
        %s177 = smul.addr %s176, 2304
        %s178 = scalar_lea.vmem [#allocation5], %s177
        // Predicated region
        $region33: #{tpu_custom_call.1} parent=27 // pred_check
          %p179 = pneg %p69
        $region34: #{tpu_custom_call.1} parent=27 // pred_check_branch
          %181 = sbr.rel (%p179) target = $region36
        $region35: #{tpu_custom_call.1} parent=27 // pred_region
          %182 = dma.done %s175, 36864
        $region36: #{tpu_custom_call.1} parent=27 // pred_fallthru
          _
        %s183 = sand.u32 %s30, 1
        %s184 = scalar_lea.sflag [#allocation3], %s183
        %s185 = sand.u32 %s30, 1
        %s186 = smul.addr %s185, 6400
        %s187 = scalar_lea.vmem [#allocation2], %s186
        %p188 = pneg %p43
        %p189 = pneg %p40
        %s190 = sand.u32 %s56, 1
        %s191 = scalar_lea.sflag [#allocation6], %s190
        %s192 = sand.u32 %s56, 1
        %s193 = smul.addr %s192, 2304
        %s194 = scalar_lea.vmem [#allocation5], %s193
        %p195 = pneg %p69
        %p196 = pneg %p66
        %p197 = pneg %p95
        %p198 = pneg %p92
        %s199 = sand.u32 %s82, 1
        %s200 = scalar_lea.sflag [#allocation4], %s199
        %s201 = sand.u32 %s82, 1
        %s202 = smul.addr %s201, 6400
        %s203 = scalar_lea.vmem [#allocation7], %s202
        %s204 = smul.u32 4, %s22
        %s205 = smul.u32 4, %s22
        %s206 = smul.u32 4, %s22
        %207 = vst [vmem:[%s203] sm:$0xff] 0.0
        %208 = vst [vmem:[%s203 + $0x8] sm:$0xff] 0.0
        %209 = vst [vmem:[%s203 + $0x10] sm:$0xff] 0.0
        %210 = vst [vmem:[%s203 + $0x18] sm:$0xff] 0.0
        %211 = vst [vmem:[%s203 + $0x20] sm:$0xff] 0.0
        %212 = vst [vmem:[%s203 + $0x28] sm:$0xff] 0.0
        %213 = vst [vmem:[%s203 + $0x30] sm:$0xff] 0.0
        %214 = vst [vmem:[%s203 + $0x38] sm:$0xff] 0.0
        %215 = vst [vmem:[%s203 + $0x40] sm:$0xff] 0.0
        %216 = vst [vmem:[%s203 + $0x48] sm:$0xff] 0.0
        %217 = vst [vmem:[%s203 + $0x50] sm:$0xff] 0.0
        %218 = vst [vmem:[%s203 + $0x58] sm:$0xff] 0.0
        %219 = vst [vmem:[%s203 + $0x60] sm:$0xff] 0.0
        %220 = vst [vmem:[%s203 + $0x68] sm:$0xff] 0.0
        %221 = vst [vmem:[%s203 + $0x70] sm:$0xff] 0.0
        %222 = vst [vmem:[%s203 + $0x78] sm:$0xff] 0.0
        %223 = vst [vmem:[%s203 + $0x80] sm:$0xff] 0.0
        %224 = vst [vmem:[%s203 + $0x88] sm:$0xff] 0.0
        %225 = vst [vmem:[%s203 + $0x90] sm:$0xff] 0.0
        %226 = vst [vmem:[%s203 + $0x98] sm:$0xff] 0.0
        %227 = vst [vmem:[%s203 + $0xa0] sm:$0xff] 0.0
        %228 = vst [vmem:[%s203 + $0xa8] sm:$0xff] 0.0
        %229 = vst [vmem:[%s203 + $0xb0] sm:$0xff] 0.0
        %230 = vst [vmem:[%s203 + $0xb8] sm:$0xff] 0.0
        %231 = vst [vmem:[%s203 + $0xc0] sm:$0xff] 0.0
        %232 = vst [vmem:[%s203 + $0xc8] sm:$0xff] 0.0
        %233 = vst [vmem:[%s203 + $0xd0] sm:$0xff] 0.0
        %234 = vst [vmem:[%s203 + $0xd8] sm:$0xff] 0.0
        %235 = vst [vmem:[%s203 + $0xe0] sm:$0xff] 0.0
        %236 = vst [vmem:[%s203 + $0xe8] sm:$0xff] 0.0
        %237 = vst [vmem:[%s203 + $0xf0] sm:$0xff] 0.0
        %238 = vst [vmem:[%s203 + $0xf8] sm:$0xff] 0.0
        %239 = vst [vmem:[%s203 + $0x100] sm:$0xff] 0.0
        %240 = vst [vmem:[%s203 + $0x108] sm:$0xff] 0.0
        %241 = vst [vmem:[%s203 + $0x110] sm:$0xff] 0.0
        %242 = vst [vmem:[%s203 + $0x118] sm:$0xff] 0.0
        %243 = vst [vmem:[%s203 + $0x120] sm:$0xff] 0.0
        %244 = vst [vmem:[%s203 + $0x128] sm:$0xff] 0.0
        %245 = vst [vmem:[%s203 + $0x130] sm:$0xff] 0.0
        %246 = vst [vmem:[%s203 + $0x138] sm:$0xff] 0.0
        %247 = vst [vmem:[%s203 + $0x640] sm:$0xff] 0.0
        %248 = vst [vmem:[%s203 + $0x648] sm:$0xff] 0.0
        %249 = vst [vmem:[%s203 + $0x650] sm:$0xff] 0.0
        %250 = vst [vmem:[%s203 + $0x658] sm:$0xff] 0.0
        %251 = vst [vmem:[%s203 + $0x660] sm:$0xff] 0.0
        %252 = vst [vmem:[%s203 + $0x668] sm:$0xff] 0.0
        %253 = vst [vmem:[%s203 + $0x670] sm:$0xff] 0.0
        %254 = vst [vmem:[%s203 + $0x678] sm:$0xff] 0.0
        %255 = vst [vmem:[%s203 + $0x680] sm:$0xff] 0.0
        %256 = vst [vmem:[%s203 + $0x688] sm:$0xff] 0.0
        %257 = vst [vmem:[%s203 + $0x690] sm:$0xff] 0.0
        %258 = vst [vmem:[%s203 + $0x698] sm:$0xff] 0.0
        %259 = vst [vmem:[%s203 + $0x6a0] sm:$0xff] 0.0
        %260 = vst [vmem:[%s203 + $0x6a8] sm:$0xff] 0.0
        %261 = vst [vmem:[%s203 + $0x6b0] sm:$0xff] 0.0
        %262 = vst [vmem:[%s203 + $0x6b8] sm:$0xff] 0.0
        %263 = vst [vmem:[%s203 + $0x6c0] sm:$0xff] 0.0
        %264 = vst [vmem:[%s203 + $0x6c8] sm:$0xff] 0.0
        %265 = vst [vmem:[%s203 + $0x6d0] sm:$0xff] 0.0
        %266 = vst [vmem:[%s203 + $0x6d8] sm:$0xff] 0.0
        %267 = vst [vmem:[%s203 + $0x6e0] sm:$0xff] 0.0
        %268 = vst [vmem:[%s203 + $0x6e8] sm:$0xff] 0.0
        %269 = vst [vmem:[%s203 + $0x6f0] sm:$0xff] 0.0
        %270 = vst [vmem:[%s203 + $0x6f8] sm:$0xff] 0.0
        %271 = vst [vmem:[%s203 + $0x700] sm:$0xff] 0.0
        %272 = vst [vmem:[%s203 + $0x708] sm:$0xff] 0.0
        %273 = vst [vmem:[%s203 + $0x710] sm:$0xff] 0.0
        %274 = vst [vmem:[%s203 + $0x718] sm:$0xff] 0.0
        %275 = vst [vmem:[%s203 + $0x720] sm:$0xff] 0.0
        %276 = vst [vmem:[%s203 + $0x728] sm:$0xff] 0.0
        %277 = vst [vmem:[%s203 + $0x730] sm:$0xff] 0.0
        %278 = vst [vmem:[%s203 + $0x738] sm:$0xff] 0.0
        %279 = vst [vmem:[%s203 + $0x740] sm:$0xff] 0.0
        %280 = vst [vmem:[%s203 + $0x748] sm:$0xff] 0.0
        %281 = vst [vmem:[%s203 + $0x750] sm:$0xff] 0.0
        %282 = vst [vmem:[%s203 + $0x758] sm:$0xff] 0.0
        %283 = vst [vmem:[%s203 + $0x760] sm:$0xff] 0.0
        %284 = vst [vmem:[%s203 + $0x768] sm:$0xff] 0.0
        %285 = vst [vmem:[%s203 + $0x770] sm:$0xff] 0.0
        %286 = vst [vmem:[%s203 + $0x778] sm:$0xff] 0.0
        %287 = vst [vmem:[%s203 + $0xc80] sm:$0xff] 0.0
        %288 = vst [vmem:[%s203 + $0xc88] sm:$0xff] 0.0
        %289 = vst [vmem:[%s203 + $0xc90] sm:$0xff] 0.0
        %290 = vst [vmem:[%s203 + $0xc98] sm:$0xff] 0.0
        %291 = vst [vmem:[%s203 + $0xca0] sm:$0xff] 0.0
        %292 = vst [vmem:[%s203 + $0xca8] sm:$0xff] 0.0
        %293 = vst [vmem:[%s203 + $0xcb0] sm:$0xff] 0.0
        %294 = vst [vmem:[%s203 + $0xcb8] sm:$0xff] 0.0
        %295 = vst [vmem:[%s203 + $0xcc0] sm:$0xff] 0.0
        %296 = vst [vmem:[%s203 + $0xcc8] sm:$0xff] 0.0
        %297 = vst [vmem:[%s203 + $0xcd0] sm:$0xff] 0.0
        %298 = vst [vmem:[%s203 + $0xcd8] sm:$0xff] 0.0
        %299 = vst [vmem:[%s203 + $0xce0] sm:$0xff] 0.0
        %300 = vst [vmem:[%s203 + $0xce8] sm:$0xff] 0.0
        %301 = vst [vmem:[%s203 + $0xcf0] sm:$0xff] 0.0
        %302 = vst [vmem:[%s203 + $0xcf8] sm:$0xff] 0.0
        %303 = vst [vmem:[%s203 + $0xd00] sm:$0xff] 0.0
        %304 = vst [vmem:[%s203 + $0xd08] sm:$0xff] 0.0
        %305 = vst [vmem:[%s203 + $0xd10] sm:$0xff] 0.0
        %306 = vst [vmem:[%s203 + $0xd18] sm:$0xff] 0.0
        %307 = vst [vmem:[%s203 + $0xd20] sm:$0xff] 0.0
        %308 = vst [vmem:[%s203 + $0xd28] sm:$0xff] 0.0
        %309 = vst [vmem:[%s203 + $0xd30] sm:$0xff] 0.0
        %310 = vst [vmem:[%s203 + $0xd38] sm:$0xff] 0.0
        %311 = vst [vmem:[%s203 + $0xd40] sm:$0xff] 0.0
        %312 = vst [vmem:[%s203 + $0xd48] sm:$0xff] 0.0
        %313 = vst [vmem:[%s203 + $0xd50] sm:$0xff] 0.0
        %314 = vst [vmem:[%s203 + $0xd58] sm:$0xff] 0.0
        %315 = vst [vmem:[%s203 + $0xd60] sm:$0xff] 0.0
        %316 = vst [vmem:[%s203 + $0xd68] sm:$0xff] 0.0
        %317 = vst [vmem:[%s203 + $0xd70] sm:$0xff] 0.0
        %318 = vst [vmem:[%s203 + $0xd78] sm:$0xff] 0.0
        %319 = vst [vmem:[%s203 + $0xd80] sm:$0xff] 0.0
        %320 = vst [vmem:[%s203 + $0xd88] sm:$0xff] 0.0
        %321 = vst [vmem:[%s203 + $0xd90] sm:$0xff] 0.0
        %322 = vst [vmem:[%s203 + $0xd98] sm:$0xff] 0.0
        %323 = vst [vmem:[%s203 + $0xda0] sm:$0xff] 0.0
        %324 = vst [vmem:[%s203 + $0xda8] sm:$0xff] 0.0
        %325 = vst [vmem:[%s203 + $0xdb0] sm:$0xff] 0.0
        %326 = vst [vmem:[%s203 + $0xdb8] sm:$0xff] 0.0
        %327 = vst [vmem:[%s203 + $0x12c0] sm:$0xff] 0.0
        %328 = vst [vmem:[%s203 + $0x12c8] sm:$0xff] 0.0
        %329 = vst [vmem:[%s203 + $0x12d0] sm:$0xff] 0.0
        %330 = vst [vmem:[%s203 + $0x12d8] sm:$0xff] 0.0
        %331 = vst [vmem:[%s203 + $0x12e0] sm:$0xff] 0.0
        %332 = vst [vmem:[%s203 + $0x12e8] sm:$0xff] 0.0
        %333 = vst [vmem:[%s203 + $0x12f0] sm:$0xff] 0.0
        %334 = vst [vmem:[%s203 + $0x12f8] sm:$0xff] 0.0
        %335 = vst [vmem:[%s203 + $0x1300] sm:$0xff] 0.0
        %336 = vst [vmem:[%s203 + $0x1308] sm:$0xff] 0.0
        %337 = vst [vmem:[%s203 + $0x1310] sm:$0xff] 0.0
        %338 = vst [vmem:[%s203 + $0x1318] sm:$0xff] 0.0
        %339 = vst [vmem:[%s203 + $0x1320] sm:$0xff] 0.0
        %340 = vst [vmem:[%s203 + $0x1328] sm:$0xff] 0.0
        %341 = vst [vmem:[%s203 + $0x1330] sm:$0xff] 0.0
        %342 = vst [vmem:[%s203 + $0x1338] sm:$0xff] 0.0
        %343 = vst [vmem:[%s203 + $0x1340] sm:$0xff] 0.0
        %344 = vst [vmem:[%s203 + $0x1348] sm:$0xff] 0.0
        %345 = vst [vmem:[%s203 + $0x1350] sm:$0xff] 0.0
        %346 = vst [vmem:[%s203 + $0x1358] sm:$0xff] 0.0
        %347 = vst [vmem:[%s203 + $0x1360] sm:$0xff] 0.0
        %348 = vst [vmem:[%s203 + $0x1368] sm:$0xff] 0.0
        %349 = vst [vmem:[%s203 + $0x1370] sm:$0xff] 0.0
        %350 = vst [vmem:[%s203 + $0x1378] sm:$0xff] 0.0
        %351 = vst [vmem:[%s203 + $0x1380] sm:$0xff] 0.0
        %352 = vst [vmem:[%s203 + $0x1388] sm:$0xff] 0.0
        %353 = vst [vmem:[%s203 + $0x1390] sm:$0xff] 0.0
        %354 = vst [vmem:[%s203 + $0x1398] sm:$0xff] 0.0
        %355 = vst [vmem:[%s203 + $0x13a0] sm:$0xff] 0.0
        %356 = vst [vmem:[%s203 + $0x13a8] sm:$0xff] 0.0
        %357 = vst [vmem:[%s203 + $0x13b0] sm:$0xff] 0.0
        %358 = vst [vmem:[%s203 + $0x13b8] sm:$0xff] 0.0
        %359 = vst [vmem:[%s203 + $0x13c0] sm:$0xff] 0.0
        %360 = vst [vmem:[%s203 + $0x13c8] sm:$0xff] 0.0
        %361 = vst [vmem:[%s203 + $0x13d0] sm:$0xff] 0.0
        %362 = vst [vmem:[%s203 + $0x13d8] sm:$0xff] 0.0
        %363 = vst [vmem:[%s203 + $0x13e0] sm:$0xff] 0.0
        %364 = vst [vmem:[%s203 + $0x13e8] sm:$0xff] 0.0
        %365 = vst [vmem:[%s203 + $0x13f0] sm:$0xff] 0.0
        %366 = vst [vmem:[%s203 + $0x13f8] sm:$0xff] 0.0
        %367 = vst [vmem:[%s203 + $0x500] sm:$0xff] 0.0
        %368 = vst [vmem:[%s203 + $0x508] sm:$0xff] 0.0
        %369 = vst [vmem:[%s203 + $0x510] sm:$0xff] 0.0
        %370 = vst [vmem:[%s203 + $0x518] sm:$0xff] 0.0
        %371 = vst [vmem:[%s203 + $0x520] sm:$0xff] 0.0
        %372 = vst [vmem:[%s203 + $0x528] sm:$0xff] 0.0
        %373 = vst [vmem:[%s203 + $0x530] sm:$0xff] 0.0
        %374 = vst [vmem:[%s203 + $0x538] sm:$0xff] 0.0
        %375 = vst [vmem:[%s203 + $0x540] sm:$0xff] 0.0
        %376 = vst [vmem:[%s203 + $0x548] sm:$0xff] 0.0
        %377 = vst [vmem:[%s203 + $0x550] sm:$0xff] 0.0
        %378 = vst [vmem:[%s203 + $0x558] sm:$0xff] 0.0
        %379 = vst [vmem:[%s203 + $0x560] sm:$0xff] 0.0
        %380 = vst [vmem:[%s203 + $0x568] sm:$0xff] 0.0
        %381 = vst [vmem:[%s203 + $0x570] sm:$0xff] 0.0
        %382 = vst [vmem:[%s203 + $0x578] sm:$0xff] 0.0
        %383 = vst [vmem:[%s203 + $0x580] sm:$0xff] 0.0
        %384 = vst [vmem:[%s203 + $0x588] sm:$0xff] 0.0
        %385 = vst [vmem:[%s203 + $0x590] sm:$0xff] 0.0
        %386 = vst [vmem:[%s203 + $0x598] sm:$0xff] 0.0
        %387 = vst [vmem:[%s203 + $0x5a0] sm:$0xff] 0.0
        %388 = vst [vmem:[%s203 + $0x5a8] sm:$0xff] 0.0
        %389 = vst [vmem:[%s203 + $0x5b0] sm:$0xff] 0.0
        %390 = vst [vmem:[%s203 + $0x5b8] sm:$0xff] 0.0
        %391 = vst [vmem:[%s203 + $0x5c0] sm:$0xff] 0.0
        %392 = vst [vmem:[%s203 + $0x5c8] sm:$0xff] 0.0
        %393 = vst [vmem:[%s203 + $0x5d0] sm:$0xff] 0.0
        %394 = vst [vmem:[%s203 + $0x5d8] sm:$0xff] 0.0
        %395 = vst [vmem:[%s203 + $0x5e0] sm:$0xff] 0.0
        %396 = vst [vmem:[%s203 + $0x5e8] sm:$0xff] 0.0
        %397 = vst [vmem:[%s203 + $0x5f0] sm:$0xff] 0.0
        %398 = vst [vmem:[%s203 + $0x5f8] sm:$0xff] 0.0
        %399 = vst [vmem:[%s203 + $0x600] sm:$0xff] 0.0
        %400 = vst [vmem:[%s203 + $0x608] sm:$0xff] 0.0
        %401 = vst [vmem:[%s203 + $0x610] sm:$0xff] 0.0
        %402 = vst [vmem:[%s203 + $0x618] sm:$0xff] 0.0
        %403 = vst [vmem:[%s203 + $0x620] sm:$0xff] 0.0
        %404 = vst [vmem:[%s203 + $0x628] sm:$0xff] 0.0
        %405 = vst [vmem:[%s203 + $0x630] sm:$0xff] 0.0
        %406 = vst [vmem:[%s203 + $0x638] sm:$0xff] 0.0
        %407 = vst [vmem:[%s203 + $0xb40] sm:$0xff] 0.0
        %408 = vst [vmem:[%s203 + $0xb48] sm:$0xff] 0.0
        %409 = vst [vmem:[%s203 + $0xb50] sm:$0xff] 0.0
        %410 = vst [vmem:[%s203 + $0xb58] sm:$0xff] 0.0
        %411 = vst [vmem:[%s203 + $0xb60] sm:$0xff] 0.0
        %412 = vst [vmem:[%s203 + $0xb68] sm:$0xff] 0.0
        %413 = vst [vmem:[%s203 + $0xb70] sm:$0xff] 0.0
        %414 = vst [vmem:[%s203 + $0xb78] sm:$0xff] 0.0
        %415 = vst [vmem:[%s203 + $0xb80] sm:$0xff] 0.0
        %416 = vst [vmem:[%s203 + $0xb88] sm:$0xff] 0.0
        %417 = vst [vmem:[%s203 + $0xb90] sm:$0xff] 0.0
        %418 = vst [vmem:[%s203 + $0xb98] sm:$0xff] 0.0
        %419 = vst [vmem:[%s203 + $0xba0] sm:$0xff] 0.0
        %420 = vst [vmem:[%s203 + $0xba8] sm:$0xff] 0.0
        %421 = vst [vmem:[%s203 + $0xbb0] sm:$0xff] 0.0
        %422 = vst [vmem:[%s203 + $0xbb8] sm:$0xff] 0.0
        %423 = vst [vmem:[%s203 + $0xbc0] sm:$0xff] 0.0
        %424 = vst [vmem:[%s203 + $0xbc8] sm:$0xff] 0.0
        %425 = vst [vmem:[%s203 + $0xbd0] sm:$0xff] 0.0
        %426 = vst [vmem:[%s203 + $0xbd8] sm:$0xff] 0.0
        %427 = vst [vmem:[%s203 + $0xbe0] sm:$0xff] 0.0
        %428 = vst [vmem:[%s203 + $0xbe8] sm:$0xff] 0.0
        %429 = vst [vmem:[%s203 + $0xbf0] sm:$0xff] 0.0
        %430 = vst [vmem:[%s203 + $0xbf8] sm:$0xff] 0.0
        %431 = vst [vmem:[%s203 + $0xc00] sm:$0xff] 0.0
        %432 = vst [vmem:[%s203 + $0xc08] sm:$0xff] 0.0
        %433 = vst [vmem:[%s203 + $0xc10] sm:$0xff] 0.0
        %434 = vst [vmem:[%s203 + $0xc18] sm:$0xff] 0.0
        %435 = vst [vmem:[%s203 + $0xc20] sm:$0xff] 0.0
        %436 = vst [vmem:[%s203 + $0xc28] sm:$0xff] 0.0
        %437 = vst [vmem:[%s203 + $0xc30] sm:$0xff] 0.0
        %438 = vst [vmem:[%s203 + $0xc38] sm:$0xff] 0.0
        %439 = vst [vmem:[%s203 + $0xc40] sm:$0xff] 0.0
        %440 = vst [vmem:[%s203 + $0xc48] sm:$0xff] 0.0
        %441 = vst [vmem:[%s203 + $0xc50] sm:$0xff] 0.0
        %442 = vst [vmem:[%s203 + $0xc58] sm:$0xff] 0.0
        %443 = vst [vmem:[%s203 + $0xc60] sm:$0xff] 0.0
        %444 = vst [vmem:[%s203 + $0xc68] sm:$0xff] 0.0
        %445 = vst [vmem:[%s203 + $0xc70] sm:$0xff] 0.0
        %446 = vst [vmem:[%s203 + $0xc78] sm:$0xff] 0.0
        %447 = vst [vmem:[%s203 + $0x1180] sm:$0xff] 0.0
        %448 = vst [vmem:[%s203 + $0x1188] sm:$0xff] 0.0
        %449 = vst [vmem:[%s203 + $0x1190] sm:$0xff] 0.0
        %450 = vst [vmem:[%s203 + $0x1198] sm:$0xff] 0.0
        %451 = vst [vmem:[%s203 + $0x11a0] sm:$0xff] 0.0
        %452 = vst [vmem:[%s203 + $0x11a8] sm:$0xff] 0.0
        %453 = vst [vmem:[%s203 + $0x11b0] sm:$0xff] 0.0
        %454 = vst [vmem:[%s203 + $0x11b8] sm:$0xff] 0.0
        %455 = vst [vmem:[%s203 + $0x11c0] sm:$0xff] 0.0
        %456 = vst [vmem:[%s203 + $0x11c8] sm:$0xff] 0.0
        %457 = vst [vmem:[%s203 + $0x11d0] sm:$0xff] 0.0
        %458 = vst [vmem:[%s203 + $0x11d8] sm:$0xff] 0.0
        %459 = vst [vmem:[%s203 + $0x11e0] sm:$0xff] 0.0
        %460 = vst [vmem:[%s203 + $0x11e8] sm:$0xff] 0.0
        %461 = vst [vmem:[%s203 + $0x11f0] sm:$0xff] 0.0
        %462 = vst [vmem:[%s203 + $0x11f8] sm:$0xff] 0.0
        %463 = vst [vmem:[%s203 + $0x1200] sm:$0xff] 0.0
        %464 = vst [vmem:[%s203 + $0x1208] sm:$0xff] 0.0
        %465 = vst [vmem:[%s203 + $0x1210] sm:$0xff] 0.0
        %466 = vst [vmem:[%s203 + $0x1218] sm:$0xff] 0.0
        %467 = vst [vmem:[%s203 + $0x1220] sm:$0xff] 0.0
        %468 = vst [vmem:[%s203 + $0x1228] sm:$0xff] 0.0
        %469 = vst [vmem:[%s203 + $0x1230] sm:$0xff] 0.0
        %470 = vst [vmem:[%s203 + $0x1238] sm:$0xff] 0.0
        %471 = vst [vmem:[%s203 + $0x1240] sm:$0xff] 0.0
        %472 = vst [vmem:[%s203 + $0x1248] sm:$0xff] 0.0
        %473 = vst [vmem:[%s203 + $0x1250] sm:$0xff] 0.0
        %474 = vst [vmem:[%s203 + $0x1258] sm:$0xff] 0.0
        %475 = vst [vmem:[%s203 + $0x1260] sm:$0xff] 0.0
        %476 = vst [vmem:[%s203 + $0x1268] sm:$0xff] 0.0
        %477 = vst [vmem:[%s203 + $0x1270] sm:$0xff] 0.0
        %478 = vst [vmem:[%s203 + $0x1278] sm:$0xff] 0.0
        %479 = vst [vmem:[%s203 + $0x1280] sm:$0xff] 0.0
        %480 = vst [vmem:[%s203 + $0x1288] sm:$0xff] 0.0
        %481 = vst [vmem:[%s203 + $0x1290] sm:$0xff] 0.0
        %482 = vst [vmem:[%s203 + $0x1298] sm:$0xff] 0.0
        %483 = vst [vmem:[%s203 + $0x12a0] sm:$0xff] 0.0
        %484 = vst [vmem:[%s203 + $0x12a8] sm:$0xff] 0.0
        %485 = vst [vmem:[%s203 + $0x12b0] sm:$0xff] 0.0
        %486 = vst [vmem:[%s203 + $0x12b8] sm:$0xff] 0.0
        %487 = vst [vmem:[%s203 + $0x17c0] sm:$0xff] 0.0
        %488 = vst [vmem:[%s203 + $0x17c8] sm:$0xff] 0.0
        %489 = vst [vmem:[%s203 + $0x17d0] sm:$0xff] 0.0
        %490 = vst [vmem:[%s203 + $0x17d8] sm:$0xff] 0.0
        %491 = vst [vmem:[%s203 + $0x17e0] sm:$0xff] 0.0
        %492 = vst [vmem:[%s203 + $0x17e8] sm:$0xff] 0.0
        %493 = vst [vmem:[%s203 + $0x17f0] sm:$0xff] 0.0
        %494 = vst [vmem:[%s203 + $0x17f8] sm:$0xff] 0.0
        %495 = vst [vmem:[%s203 + $0x1800] sm:$0xff] 0.0
        %496 = vst [vmem:[%s203 + $0x1808] sm:$0xff] 0.0
        %497 = vst [vmem:[%s203 + $0x1810] sm:$0xff] 0.0
        %498 = vst [vmem:[%s203 + $0x1818] sm:$0xff] 0.0
        %499 = vst [vmem:[%s203 + $0x1820] sm:$0xff] 0.0
        %500 = vst [vmem:[%s203 + $0x1828] sm:$0xff] 0.0
        %501 = vst [vmem:[%s203 + $0x1830] sm:$0xff] 0.0
        %502 = vst [vmem:[%s203 + $0x1838] sm:$0xff] 0.0
        %503 = vst [vmem:[%s203 + $0x1840] sm:$0xff] 0.0
        %504 = vst [vmem:[%s203 + $0x1848] sm:$0xff] 0.0
        %505 = vst [vmem:[%s203 + $0x1850] sm:$0xff] 0.0
        %506 = vst [vmem:[%s203 + $0x1858] sm:$0xff] 0.0
        %507 = vst [vmem:[%s203 + $0x1860] sm:$0xff] 0.0
        %508 = vst [vmem:[%s203 + $0x1868] sm:$0xff] 0.0
        %509 = vst [vmem:[%s203 + $0x1870] sm:$0xff] 0.0
        %510 = vst [vmem:[%s203 + $0x1878] sm:$0xff] 0.0
        %511 = vst [vmem:[%s203 + $0x1880] sm:$0xff] 0.0
        %512 = vst [vmem:[%s203 + $0x1888] sm:$0xff] 0.0
        %513 = vst [vmem:[%s203 + $0x1890] sm:$0xff] 0.0
        %514 = vst [vmem:[%s203 + $0x1898] sm:$0xff] 0.0
        %515 = vst [vmem:[%s203 + $0x18a0] sm:$0xff] 0.0
        %516 = vst [vmem:[%s203 + $0x18a8] sm:$0xff] 0.0
        %517 = vst [vmem:[%s203 + $0x18b0] sm:$0xff] 0.0
        %518 = vst [vmem:[%s203 + $0x18b8] sm:$0xff] 0.0
        %519 = vst [vmem:[%s203 + $0x18c0] sm:$0xff] 0.0
        %520 = vst [vmem:[%s203 + $0x18c8] sm:$0xff] 0.0
        %521 = vst [vmem:[%s203 + $0x18d0] sm:$0xff] 0.0
        %522 = vst [vmem:[%s203 + $0x18d8] sm:$0xff] 0.0
        %523 = vst [vmem:[%s203 + $0x18e0] sm:$0xff] 0.0
        %524 = vst [vmem:[%s203 + $0x18e8] sm:$0xff] 0.0
        %525 = vst [vmem:[%s203 + $0x18f0] sm:$0xff] 0.0
        %526 = vst [vmem:[%s203 + $0x18f8] sm:$0xff] 0.0
        %527 = vst [vmem:[%s203 + $0x140] sm:$0xff] 0.0
        %528 = vst [vmem:[%s203 + $0x168] sm:$0xff] 0.0
        %529 = vst [vmem:[%s203 + $0x190] sm:$0xff] 0.0
        %530 = vst [vmem:[%s203 + $0x1b8] sm:$0xff] 0.0
        %531 = vst [vmem:[%s203 + $0x1e0] sm:$0xff] 0.0
        %532 = vst [vmem:[%s203 + $0x208] sm:$0xff] 0.0
        %533 = vst [vmem:[%s203 + $0x230] sm:$0xff] 0.0
        %534 = vst [vmem:[%s203 + $0x258] sm:$0xff] 0.0
        %535 = vst [vmem:[%s203 + $0x280] sm:$0xff] 0.0
        %536 = vst [vmem:[%s203 + $0x2a8] sm:$0xff] 0.0
        %537 = vst [vmem:[%s203 + $0x2d0] sm:$0xff] 0.0
        %538 = vst [vmem:[%s203 + $0x2f8] sm:$0xff] 0.0
        %539 = vst [vmem:[%s203 + $0x320] sm:$0xff] 0.0
        %540 = vst [vmem:[%s203 + $0x348] sm:$0xff] 0.0
        %541 = vst [vmem:[%s203 + $0x370] sm:$0xff] 0.0
        %542 = vst [vmem:[%s203 + $0x398] sm:$0xff] 0.0
        %543 = vst [vmem:[%s203 + $0x3c0] sm:$0xff] 0.0
        %544 = vst [vmem:[%s203 + $0x3e8] sm:$0xff] 0.0
        %545 = vst [vmem:[%s203 + $0x410] sm:$0xff] 0.0
        %546 = vst [vmem:[%s203 + $0x438] sm:$0xff] 0.0
        %547 = vst [vmem:[%s203 + $0x460] sm:$0xff] 0.0
        %548 = vst [vmem:[%s203 + $0x488] sm:$0xff] 0.0
        %549 = vst [vmem:[%s203 + $0x4b0] sm:$0xff] 0.0
        %550 = vst [vmem:[%s203 + $0x4d8] sm:$0xff] 0.0
        %551 = vst [vmem:[%s203 + $0x780] sm:$0xff] 0.0
        %552 = vst [vmem:[%s203 + $0x7a8] sm:$0xff] 0.0
        %553 = vst [vmem:[%s203 + $0x7d0] sm:$0xff] 0.0
        %554 = vst [vmem:[%s203 + $0x7f8] sm:$0xff] 0.0
        %555 = vst [vmem:[%s203 + $0x820] sm:$0xff] 0.0
        %556 = vst [vmem:[%s203 + $0x848] sm:$0xff] 0.0
        %557 = vst [vmem:[%s203 + $0x870] sm:$0xff] 0.0
        %558 = vst [vmem:[%s203 + $0x898] sm:$0xff] 0.0
        %559 = vst [vmem:[%s203 + $0x8c0] sm:$0xff] 0.0
        %560 = vst [vmem:[%s203 + $0x8e8] sm:$0xff] 0.0
        %561 = vst [vmem:[%s203 + $0x910] sm:$0xff] 0.0
        %562 = vst [vmem:[%s203 + $0x938] sm:$0xff] 0.0
        %563 = vst [vmem:[%s203 + $0x960] sm:$0xff] 0.0
        %564 = vst [vmem:[%s203 + $0x988] sm:$0xff] 0.0
        %565 = vst [vmem:[%s203 + $0x9b0] sm:$0xff] 0.0
        %566 = vst [vmem:[%s203 + $0x9d8] sm:$0xff] 0.0
        %567 = vst [vmem:[%s203 + $0xa00] sm:$0xff] 0.0
        %568 = vst [vmem:[%s203 + $0xa28] sm:$0xff] 0.0
        %569 = vst [vmem:[%s203 + $0xa50] sm:$0xff] 0.0
        %570 = vst [vmem:[%s203 + $0xa78] sm:$0xff] 0.0
        %571 = vst [vmem:[%s203 + $0xaa0] sm:$0xff] 0.0
        %572 = vst [vmem:[%s203 + $0xac8] sm:$0xff] 0.0
        %573 = vst [vmem:[%s203 + $0xaf0] sm:$0xff] 0.0
        %574 = vst [vmem:[%s203 + $0xb18] sm:$0xff] 0.0
        %575 = vst [vmem:[%s203 + $0xdc0] sm:$0xff] 0.0
        %576 = vst [vmem:[%s203 + $0xde8] sm:$0xff] 0.0
        %577 = vst [vmem:[%s203 + $0xe10] sm:$0xff] 0.0
        %578 = vst [vmem:[%s203 + $0xe38] sm:$0xff] 0.0
        %579 = vst [vmem:[%s203 + $0xe60] sm:$0xff] 0.0
        %580 = vst [vmem:[%s203 + $0xe88] sm:$0xff] 0.0
        %581 = vst [vmem:[%s203 + $0xeb0] sm:$0xff] 0.0
        %582 = vst [vmem:[%s203 + $0xed8] sm:$0xff] 0.0
        %583 = vst [vmem:[%s203 + $0xf00] sm:$0xff] 0.0
        %584 = vst [vmem:[%s203 + $0xf28] sm:$0xff] 0.0
        %585 = vst [vmem:[%s203 + $0xf50] sm:$0xff] 0.0
        %586 = vst [vmem:[%s203 + $0xf78] sm:$0xff] 0.0
        %587 = vst [vmem:[%s203 + $0xfa0] sm:$0xff] 0.0
        %588 = vst [vmem:[%s203 + $0xfc8] sm:$0xff] 0.0
        %589 = vst [vmem:[%s203 + $0xff0] sm:$0xff] 0.0
        %590 = vst [vmem:[%s203 + $0x1018] sm:$0xff] 0.0
        %591 = vst [vmem:[%s203 + $0x1040] sm:$0xff] 0.0
        %592 = vst [vmem:[%s203 + $0x1068] sm:$0xff] 0.0
        %593 = vst [vmem:[%s203 + $0x1090] sm:$0xff] 0.0
        %594 = vst [vmem:[%s203 + $0x10b8] sm:$0xff] 0.0
        %595 = vst [vmem:[%s203 + $0x10e0] sm:$0xff] 0.0
        %596 = vst [vmem:[%s203 + $0x1108] sm:$0xff] 0.0
        %597 = vst [vmem:[%s203 + $0x1130] sm:$0xff] 0.0
        %598 = vst [vmem:[%s203 + $0x1158] sm:$0xff] 0.0
        %599 = vst [vmem:[%s203 + $0x1400] sm:$0xff] 0.0
        %600 = vst [vmem:[%s203 + $0x1428] sm:$0xff] 0.0
        %601 = vst [vmem:[%s203 + $0x1450] sm:$0xff] 0.0
        %602 = vst [vmem:[%s203 + $0x1478] sm:$0xff] 0.0
        %603 = vst [vmem:[%s203 + $0x14a0] sm:$0xff] 0.0
        %604 = vst [vmem:[%s203 + $0x14c8] sm:$0xff] 0.0
        %605 = vst [vmem:[%s203 + $0x14f0] sm:$0xff] 0.0
        %606 = vst [vmem:[%s203 + $0x1518] sm:$0xff] 0.0
        %607 = vst [vmem:[%s203 + $0x1540] sm:$0xff] 0.0
        %608 = vst [vmem:[%s203 + $0x1568] sm:$0xff] 0.0
        %609 = vst [vmem:[%s203 + $0x1590] sm:$0xff] 0.0
        %610 = vst [vmem:[%s203 + $0x15b8] sm:$0xff] 0.0
        %611 = vst [vmem:[%s203 + $0x15e0] sm:$0xff] 0.0
        %612 = vst [vmem:[%s203 + $0x1608] sm:$0xff] 0.0
        %613 = vst [vmem:[%s203 + $0x1630] sm:$0xff] 0.0
        %614 = vst [vmem:[%s203 + $0x1658] sm:$0xff] 0.0
        %615 = vst [vmem:[%s203 + $0x1680] sm:$0xff] 0.0
        %616 = vst [vmem:[%s203 + $0x16a8] sm:$0xff] 0.0
        %617 = vst [vmem:[%s203 + $0x16d0] sm:$0xff] 0.0
        %618 = vst [vmem:[%s203 + $0x16f8] sm:$0xff] 0.0
        %619 = vst [vmem:[%s203 + $0x1720] sm:$0xff] 0.0
        %620 = vst [vmem:[%s203 + $0x1748] sm:$0xff] 0.0
        %621 = vst [vmem:[%s203 + $0x1770] sm:$0xff] 0.0
        %622 = vst [vmem:[%s203 + $0x1798] sm:$0xff] 0.0
        %623 = vst [vmem:[%s203 + $0x160] sm:$0xff] 0.0
        %624 = vst [vmem:[%s203 + $0x188] sm:$0xff] 0.0
        %625 = vst [vmem:[%s203 + $0x1b0] sm:$0xff] 0.0
        %626 = vst [vmem:[%s203 + $0x1d8] sm:$0xff] 0.0
        %627 = vst [vmem:[%s203 + $0x200] sm:$0xff] 0.0
        %628 = vst [vmem:[%s203 + $0x228] sm:$0xff] 0.0
        %629 = vst [vmem:[%s203 + $0x250] sm:$0xff] 0.0
        %630 = vst [vmem:[%s203 + $0x278] sm:$0xff] 0.0
        %631 = vst [vmem:[%s203 + $0x2a0] sm:$0xff] 0.0
        %632 = vst [vmem:[%s203 + $0x2c8] sm:$0xff] 0.0
        %633 = vst [vmem:[%s203 + $0x2f0] sm:$0xff] 0.0
        %634 = vst [vmem:[%s203 + $0x318] sm:$0xff] 0.0
        %635 = vst [vmem:[%s203 + $0x340] sm:$0xff] 0.0
        %636 = vst [vmem:[%s203 + $0x368] sm:$0xff] 0.0
        %637 = vst [vmem:[%s203 + $0x390] sm:$0xff] 0.0
        %638 = vst [vmem:[%s203 + $0x3b8] sm:$0xff] 0.0
        %639 = vst [vmem:[%s203 + $0x3e0] sm:$0xff] 0.0
        %640 = vst [vmem:[%s203 + $0x408] sm:$0xff] 0.0
        %641 = vst [vmem:[%s203 + $0x430] sm:$0xff] 0.0
        %642 = vst [vmem:[%s203 + $0x458] sm:$0xff] 0.0
        %643 = vst [vmem:[%s203 + $0x480] sm:$0xff] 0.0
        %644 = vst [vmem:[%s203 + $0x4a8] sm:$0xff] 0.0
        %645 = vst [vmem:[%s203 + $0x4d0] sm:$0xff] 0.0
        %646 = vst [vmem:[%s203 + $0x4f8] sm:$0xff] 0.0
        %647 = vst [vmem:[%s203 + $0x7a0] sm:$0xff] 0.0
        %648 = vst [vmem:[%s203 + $0x7c8] sm:$0xff] 0.0
        %649 = vst [vmem:[%s203 + $0x7f0] sm:$0xff] 0.0
        %650 = vst [vmem:[%s203 + $0x818] sm:$0xff] 0.0
        %651 = vst [vmem:[%s203 + $0x840] sm:$0xff] 0.0
        %652 = vst [vmem:[%s203 + $0x868] sm:$0xff] 0.0
        %653 = vst [vmem:[%s203 + $0x890] sm:$0xff] 0.0
        %654 = vst [vmem:[%s203 + $0x8b8] sm:$0xff] 0.0
        %655 = vst [vmem:[%s203 + $0x8e0] sm:$0xff] 0.0
        %656 = vst [vmem:[%s203 + $0x908] sm:$0xff] 0.0
        %657 = vst [vmem:[%s203 + $0x930] sm:$0xff] 0.0
        %658 = vst [vmem:[%s203 + $0x958] sm:$0xff] 0.0
        %659 = vst [vmem:[%s203 + $0x980] sm:$0xff] 0.0
        %660 = vst [vmem:[%s203 + $0x9a8] sm:$0xff] 0.0
        %661 = vst [vmem:[%s203 + $0x9d0] sm:$0xff] 0.0
        %662 = vst [vmem:[%s203 + $0x9f8] sm:$0xff] 0.0
        %663 = vst [vmem:[%s203 + $0xa20] sm:$0xff] 0.0
        %664 = vst [vmem:[%s203 + $0xa48] sm:$0xff] 0.0
        %665 = vst [vmem:[%s203 + $0xa70] sm:$0xff] 0.0
        %666 = vst [vmem:[%s203 + $0xa98] sm:$0xff] 0.0
        %667 = vst [vmem:[%s203 + $0xac0] sm:$0xff] 0.0
        %668 = vst [vmem:[%s203 + $0xae8] sm:$0xff] 0.0
        %669 = vst [vmem:[%s203 + $0xb10] sm:$0xff] 0.0
        %670 = vst [vmem:[%s203 + $0xb38] sm:$0xff] 0.0
        %671 = vst [vmem:[%s203 + $0xde0] sm:$0xff] 0.0
        %672 = vst [vmem:[%s203 + $0xe08] sm:$0xff] 0.0
        %673 = vst [vmem:[%s203 + $0xe30] sm:$0xff] 0.0
        %674 = vst [vmem:[%s203 + $0xe58] sm:$0xff] 0.0
        %675 = vst [vmem:[%s203 + $0xe80] sm:$0xff] 0.0
        %676 = vst [vmem:[%s203 + $0xea8] sm:$0xff] 0.0
        %677 = vst [vmem:[%s203 + $0xed0] sm:$0xff] 0.0
        %678 = vst [vmem:[%s203 + $0xef8] sm:$0xff] 0.0
        %679 = vst [vmem:[%s203 + $0xf20] sm:$0xff] 0.0
        %680 = vst [vmem:[%s203 + $0xf48] sm:$0xff] 0.0
        %681 = vst [vmem:[%s203 + $0xf70] sm:$0xff] 0.0
        %682 = vst [vmem:[%s203 + $0xf98] sm:$0xff] 0.0
        %683 = vst [vmem:[%s203 + $0xfc0] sm:$0xff] 0.0
        %684 = vst [vmem:[%s203 + $0xfe8] sm:$0xff] 0.0
        %685 = vst [vmem:[%s203 + $0x1010] sm:$0xff] 0.0
        %686 = vst [vmem:[%s203 + $0x1038] sm:$0xff] 0.0
        %687 = vst [vmem:[%s203 + $0x1060] sm:$0xff] 0.0
        %688 = vst [vmem:[%s203 + $0x1088] sm:$0xff] 0.0
        %689 = vst [vmem:[%s203 + $0x10b0] sm:$0xff] 0.0
        %690 = vst [vmem:[%s203 + $0x10d8] sm:$0xff] 0.0
        %691 = vst [vmem:[%s203 + $0x1100] sm:$0xff] 0.0
        %692 = vst [vmem:[%s203 + $0x1128] sm:$0xff] 0.0
        %693 = vst [vmem:[%s203 + $0x1150] sm:$0xff] 0.0
        %694 = vst [vmem:[%s203 + $0x1178] sm:$0xff] 0.0
        %695 = vst [vmem:[%s203 + $0x1420] sm:$0xff] 0.0
        %696 = vst [vmem:[%s203 + $0x1448] sm:$0xff] 0.0
        %697 = vst [vmem:[%s203 + $0x1470] sm:$0xff] 0.0
        %698 = vst [vmem:[%s203 + $0x1498] sm:$0xff] 0.0
        %699 = vst [vmem:[%s203 + $0x14c0] sm:$0xff] 0.0
        %700 = vst [vmem:[%s203 + $0x14e8] sm:$0xff] 0.0
        %701 = vst [vmem:[%s203 + $0x1510] sm:$0xff] 0.0
        %702 = vst [vmem:[%s203 + $0x1538] sm:$0xff] 0.0
        %703 = vst [vmem:[%s203 + $0x1560] sm:$0xff] 0.0
        %704 = vst [vmem:[%s203 + $0x1588] sm:$0xff] 0.0
        %705 = vst [vmem:[%s203 + $0x15b0] sm:$0xff] 0.0
        %706 = vst [vmem:[%s203 + $0x15d8] sm:$0xff] 0.0
        %707 = vst [vmem:[%s203 + $0x1600] sm:$0xff] 0.0
        %708 = vst [vmem:[%s203 + $0x1628] sm:$0xff] 0.0
        %709 = vst [vmem:[%s203 + $0x1650] sm:$0xff] 0.0
        %710 = vst [vmem:[%s203 + $0x1678] sm:$0xff] 0.0
        %711 = vst [vmem:[%s203 + $0x16a0] sm:$0xff] 0.0
        %712 = vst [vmem:[%s203 + $0x16c8] sm:$0xff] 0.0
        %713 = vst [vmem:[%s203 + $0x16f0] sm:$0xff] 0.0
        %714 = vst [vmem:[%s203 + $0x1718] sm:$0xff] 0.0
        %715 = vst [vmem:[%s203 + $0x1740] sm:$0xff] 0.0
        %716 = vst [vmem:[%s203 + $0x1768] sm:$0xff] 0.0
        %717 = vst [vmem:[%s203 + $0x1790] sm:$0xff] 0.0
        %718 = vst [vmem:[%s203 + $0x17b8] sm:$0xff] 0.0
        %v719 = vld [vmem:[%s169 + $0x148] sm:$0xff]
        %v720 = vld [vmem:[%s169 + $0x150] sm:$0xff]
        %v721 = vld [vmem:[%s169 + $0x158] sm:$0xff]
        %v722 = vld [vmem:[%s169 + $0x170] sm:$0xff]
        %v723 = vld [vmem:[%s169 + $0x178] sm:$0xff]
        %v724 = vld [vmem:[%s169 + $0x180] sm:$0xff]
        %v725 = vld [vmem:[%s169 + $0x198] sm:$0xff]
        %v726 = vld [vmem:[%s169 + $0x1a0] sm:$0xff]
        %v727 = vld [vmem:[%s169 + $0x1a8] sm:$0xff]
        %v728 = vld [vmem:[%s169 + $0x1c0] sm:$0xff]
        %v729 = vld [vmem:[%s169 + $0x1c8] sm:$0xff]
        %v730 = vld [vmem:[%s169 + $0x1d0] sm:$0xff]
        %v731 = vld [vmem:[%s169 + $0x1e8] sm:$0xff]
        %v732 = vld [vmem:[%s169 + $0x1f0] sm:$0xff]
        %v733 = vld [vmem:[%s169 + $0x1f8] sm:$0xff]
        %v734 = vld [vmem:[%s169 + $0x210] sm:$0xff]
        %v735 = vld [vmem:[%s169 + $0x218] sm:$0xff]
        %v736 = vld [vmem:[%s169 + $0x220] sm:$0xff]
        %v737 = vld [vmem:[%s169 + $0x238] sm:$0xff]
        %v738 = vld [vmem:[%s169 + $0x240] sm:$0xff]
        %v739 = vld [vmem:[%s169 + $0x248] sm:$0xff]
        %v740 = vld [vmem:[%s169 + $0x260] sm:$0xff]
        %v741 = vld [vmem:[%s169 + $0x268] sm:$0xff]
        %v742 = vld [vmem:[%s169 + $0x270] sm:$0xff]
        %v743 = vld [vmem:[%s169 + $0x288] sm:$0xff]
        %v744 = vld [vmem:[%s169 + $0x290] sm:$0xff]
        %v745 = vld [vmem:[%s169 + $0x298] sm:$0xff]
        %v746 = vld [vmem:[%s169 + $0x2b0] sm:$0xff]
        %v747 = vld [vmem:[%s169 + $0x2b8] sm:$0xff]
        %v748 = vld [vmem:[%s169 + $0x2c0] sm:$0xff]
        %v749 = vld [vmem:[%s169 + $0x2d8] sm:$0xff]
        %v750 = vld [vmem:[%s169 + $0x2e0] sm:$0xff]
        %v751 = vld [vmem:[%s169 + $0x2e8] sm:$0xff]
        %v752 = vld [vmem:[%s169 + $0x300] sm:$0xff]
        %v753 = vld [vmem:[%s169 + $0x308] sm:$0xff]
        %v754 = vld [vmem:[%s169 + $0x310] sm:$0xff]
        %v755 = vld [vmem:[%s169 + $0x328] sm:$0xff]
        %v756 = vld [vmem:[%s169 + $0x330] sm:$0xff]
        %v757 = vld [vmem:[%s169 + $0x338] sm:$0xff]
        %v758 = vld [vmem:[%s169 + $0x350] sm:$0xff]
        %v759 = vld [vmem:[%s169 + $0x358] sm:$0xff]
        %v760 = vld [vmem:[%s169 + $0x360] sm:$0xff]
        %v761 = vld [vmem:[%s169 + $0x378] sm:$0xff]
        %v762 = vld [vmem:[%s169 + $0x380] sm:$0xff]
        %v763 = vld [vmem:[%s169 + $0x388] sm:$0xff]
        %v764 = vld [vmem:[%s169 + $0x3a0] sm:$0xff]
        %v765 = vld [vmem:[%s169 + $0x3a8] sm:$0xff]
        %v766 = vld [vmem:[%s169 + $0x3b0] sm:$0xff]
        %v767 = vld [vmem:[%s169 + $0x3c8] sm:$0xff]
        %v768 = vld [vmem:[%s169 + $0x3d0] sm:$0xff]
        %v769 = vld [vmem:[%s169 + $0x3d8] sm:$0xff]
        %v770 = vld [vmem:[%s169 + $0x3f0] sm:$0xff]
        %v771 = vld [vmem:[%s169 + $0x3f8] sm:$0xff]
        %v772 = vld [vmem:[%s169 + $0x400] sm:$0xff]
        %v773 = vld [vmem:[%s169 + $0x418] sm:$0xff]
        %v774 = vld [vmem:[%s169 + $0x420] sm:$0xff]
        %v775 = vld [vmem:[%s169 + $0x428] sm:$0xff]
        %v776 = vld [vmem:[%s169 + $0x440] sm:$0xff]
        %v777 = vld [vmem:[%s169 + $0x448] sm:$0xff]
        %v778 = vld [vmem:[%s169 + $0x450] sm:$0xff]
        %v779 = vld [vmem:[%s169 + $0x468] sm:$0xff]
        %v780 = vld [vmem:[%s169 + $0x470] sm:$0xff]
        %v781 = vld [vmem:[%s169 + $0x478] sm:$0xff]
        %v782 = vld [vmem:[%s169 + $0x490] sm:$0xff]
        %v783 = vld [vmem:[%s169 + $0x498] sm:$0xff]
        %v784 = vld [vmem:[%s169 + $0x4a0] sm:$0xff]
        %v785 = vld [vmem:[%s169 + $0x4b8] sm:$0xff]
        %v786 = vld [vmem:[%s169 + $0x4c0] sm:$0xff]
        %v787 = vld [vmem:[%s169 + $0x4c8] sm:$0xff]
        %v788 = vld [vmem:[%s169 + $0x4e0] sm:$0xff]
        %v789 = vld [vmem:[%s169 + $0x4e8] sm:$0xff]
        %v790 = vld [vmem:[%s169 + $0x4f0] sm:$0xff]
        %v791 = vld [vmem:[%s169 + $0x788] sm:$0xff]
        %v792 = vld [vmem:[%s169 + $0x790] sm:$0xff]
        %v793 = vld [vmem:[%s169 + $0x798] sm:$0xff]
        %v794 = vld [vmem:[%s169 + $0x7b0] sm:$0xff]
        %v795 = vld [vmem:[%s169 + $0x7b8] sm:$0xff]
        %v796 = vld [vmem:[%s169 + $0x7c0] sm:$0xff]
        %v797 = vld [vmem:[%s169 + $0x7d8] sm:$0xff]
        %v798 = vld [vmem:[%s169 + $0x7e0] sm:$0xff]
        %v799 = vld [vmem:[%s169 + $0x7e8] sm:$0xff]
        %v800 = vld [vmem:[%s169 + $0x800] sm:$0xff]
        %v801 = vld [vmem:[%s169 + $0x808] sm:$0xff]
        %v802 = vld [vmem:[%s169 + $0x810] sm:$0xff]
        %v803 = vld [vmem:[%s169 + $0x828] sm:$0xff]
        %v804 = vld [vmem:[%s169 + $0x830] sm:$0xff]
        %v805 = vld [vmem:[%s169 + $0x838] sm:$0xff]
        %v806 = vld [vmem:[%s169 + $0x850] sm:$0xff]
        %v807 = vld [vmem:[%s169 + $0x858] sm:$0xff]
        %v808 = vld [vmem:[%s169 + $0x860] sm:$0xff]
        %v809 = vld [vmem:[%s169 + $0x878] sm:$0xff]
        %v810 = vld [vmem:[%s169 + $0x880] sm:$0xff]
        %v811 = vld [vmem:[%s169 + $0x888] sm:$0xff]
        %v812 = vld [vmem:[%s169 + $0x8a0] sm:$0xff]
        %v813 = vld [vmem:[%s169 + $0x8a8] sm:$0xff]
        %v814 = vld [vmem:[%s169 + $0x8b0] sm:$0xff]
        %v815 = vld [vmem:[%s169 + $0x8c8] sm:$0xff]
        %v816 = vld [vmem:[%s169 + $0x8d0] sm:$0xff]
        %v817 = vld [vmem:[%s169 + $0x8d8] sm:$0xff]
        %v818 = vld [vmem:[%s169 + $0x8f0] sm:$0xff]
        %v819 = vld [vmem:[%s169 + $0x8f8] sm:$0xff]
        %v820 = vld [vmem:[%s169 + $0x900] sm:$0xff]
        %v821 = vld [vmem:[%s169 + $0x918] sm:$0xff]
        %v822 = vld [vmem:[%s169 + $0x920] sm:$0xff]
        %v823 = vld [vmem:[%s169 + $0x928] sm:$0xff]
        %v824 = vld [vmem:[%s169 + $0x940] sm:$0xff]
        %v825 = vld [vmem:[%s169 + $0x948] sm:$0xff]
        %v826 = vld [vmem:[%s169 + $0x950] sm:$0xff]
        %v827 = vld [vmem:[%s169 + $0x968] sm:$0xff]
        %v828 = vld [vmem:[%s169 + $0x970] sm:$0xff]
        %v829 = vld [vmem:[%s169 + $0x978] sm:$0xff]
        %v830 = vld [vmem:[%s169 + $0x990] sm:$0xff]
        %v831 = vld [vmem:[%s169 + $0x998] sm:$0xff]
        %v832 = vld [vmem:[%s169 + $0x9a0] sm:$0xff]
        %v833 = vld [vmem:[%s169 + $0x9b8] sm:$0xff]
        %v834 = vld [vmem:[%s169 + $0x9c0] sm:$0xff]
        %v835 = vld [vmem:[%s169 + $0x9c8] sm:$0xff]
        %v836 = vld [vmem:[%s169 + $0x9e0] sm:$0xff]
        %v837 = vld [vmem:[%s169 + $0x9e8] sm:$0xff]
        %v838 = vld [vmem:[%s169 + $0x9f0] sm:$0xff]
        %v839 = vld [vmem:[%s169 + $0xa08] sm:$0xff]
        %v840 = vld [vmem:[%s169 + $0xa10] sm:$0xff]
        %v841 = vld [vmem:[%s169 + $0xa18] sm:$0xff]
        %v842 = vld [vmem:[%s169 + $0xa30] sm:$0xff]
        %v843 = vld [vmem:[%s169 + $0xa38] sm:$0xff]
        %v844 = vld [vmem:[%s169 + $0xa40] sm:$0xff]
        %v845 = vld [vmem:[%s169 + $0xa58] sm:$0xff]
        %v846 = vld [vmem:[%s169 + $0xa60] sm:$0xff]
        %v847 = vld [vmem:[%s169 + $0xa68] sm:$0xff]
        %v848 = vld [vmem:[%s169 + $0xa80] sm:$0xff]
        %v849 = vld [vmem:[%s169 + $0xa88] sm:$0xff]
        %v850 = vld [vmem:[%s169 + $0xa90] sm:$0xff]
        %v851 = vld [vmem:[%s169 + $0xaa8] sm:$0xff]
        %v852 = vld [vmem:[%s169 + $0xab0] sm:$0xff]
        %v853 = vld [vmem:[%s169 + $0xab8] sm:$0xff]
        %v854 = vld [vmem:[%s169 + $0xad0] sm:$0xff]
        %v855 = vld [vmem:[%s169 + $0xad8] sm:$0xff]
        %v856 = vld [vmem:[%s169 + $0xae0] sm:$0xff]
        %v857 = vld [vmem:[%s169 + $0xaf8] sm:$0xff]
        %v858 = vld [vmem:[%s169 + $0xb00] sm:$0xff]
        %v859 = vld [vmem:[%s169 + $0xb08] sm:$0xff]
        %v860 = vld [vmem:[%s169 + $0xb20] sm:$0xff]
        %v861 = vld [vmem:[%s169 + $0xb28] sm:$0xff]
        %v862 = vld [vmem:[%s169 + $0xb30] sm:$0xff]
        %v863 = vld [vmem:[%s169 + $0xdc8] sm:$0xff]
        %v864 = vld [vmem:[%s169 + $0xdd0] sm:$0xff]
        %v865 = vld [vmem:[%s169 + $0xdd8] sm:$0xff]
        %v866 = vld [vmem:[%s169 + $0xdf0] sm:$0xff]
        %v867 = vld [vmem:[%s169 + $0xdf8] sm:$0xff]
        %v868 = vld [vmem:[%s169 + $0xe00] sm:$0xff]
        %v869 = vld [vmem:[%s169 + $0xe18] sm:$0xff]
        %v870 = vld [vmem:[%s169 + $0xe20] sm:$0xff]
        %v871 = vld [vmem:[%s169 + $0xe28] sm:$0xff]
        %v872 = vld [vmem:[%s169 + $0xe40] sm:$0xff]
        %v873 = vld [vmem:[%s169 + $0xe48] sm:$0xff]
        %v874 = vld [vmem:[%s169 + $0xe50] sm:$0xff]
        %v875 = vld [vmem:[%s169 + $0xe68] sm:$0xff]
        %v876 = vld [vmem:[%s169 + $0xe70] sm:$0xff]
        %v877 = vld [vmem:[%s169 + $0xe78] sm:$0xff]
        %v878 = vld [vmem:[%s169 + $0xe90] sm:$0xff]
        %v879 = vld [vmem:[%s169 + $0xe98] sm:$0xff]
        %v880 = vld [vmem:[%s169 + $0xea0] sm:$0xff]
        %v881 = vld [vmem:[%s169 + $0xeb8] sm:$0xff]
        %v882 = vld [vmem:[%s169 + $0xec0] sm:$0xff]
        %v883 = vld [vmem:[%s169 + $0xec8] sm:$0xff]
        %v884 = vld [vmem:[%s169 + $0xee0] sm:$0xff]
        %v885 = vld [vmem:[%s169 + $0xee8] sm:$0xff]
        %v886 = vld [vmem:[%s169 + $0xef0] sm:$0xff]
        %v887 = vld [vmem:[%s169 + $0xf08] sm:$0xff]
        %v888 = vld [vmem:[%s169 + $0xf10] sm:$0xff]
        %v889 = vld [vmem:[%s169 + $0xf18] sm:$0xff]
        %v890 = vld [vmem:[%s169 + $0xf30] sm:$0xff]
        %v891 = vld [vmem:[%s169 + $0xf38] sm:$0xff]
        %v892 = vld [vmem:[%s169 + $0xf40] sm:$0xff]
        %v893 = vld [vmem:[%s169 + $0xf58] sm:$0xff]
        %v894 = vld [vmem:[%s169 + $0xf60] sm:$0xff]
        %v895 = vld [vmem:[%s169 + $0xf68] sm:$0xff]
        %v896 = vld [vmem:[%s169 + $0xf80] sm:$0xff]
        %v897 = vld [vmem:[%s169 + $0xf88] sm:$0xff]
        %v898 = vld [vmem:[%s169 + $0xf90] sm:$0xff]
        %v899 = vld [vmem:[%s169 + $0xfa8] sm:$0xff]
        %v900 = vld [vmem:[%s169 + $0xfb0] sm:$0xff]
        %v901 = vld [vmem:[%s169 + $0xfb8] sm:$0xff]
        %v902 = vld [vmem:[%s169 + $0xfd0] sm:$0xff]
        %v903 = vld [vmem:[%s169 + $0xfd8] sm:$0xff]
        %v904 = vld [vmem:[%s169 + $0xfe0] sm:$0xff]
        %v905 = vld [vmem:[%s169 + $0xff8] sm:$0xff]
        %v906 = vld [vmem:[%s169 + $0x1000] sm:$0xff]
        %v907 = vld [vmem:[%s169 + $0x1008] sm:$0xff]
        %v908 = vld [vmem:[%s169 + $0x1020] sm:$0xff]
        %v909 = vld [vmem:[%s169 + $0x1028] sm:$0xff]
        %v910 = vld [vmem:[%s169 + $0x1030] sm:$0xff]
        %v911 = vld [vmem:[%s169 + $0x1048] sm:$0xff]
        %v912 = vld [vmem:[%s169 + $0x1050] sm:$0xff]
        %v913 = vld [vmem:[%s169 + $0x1058] sm:$0xff]
        %v914 = vld [vmem:[%s169 + $0x1070] sm:$0xff]
        %v915 = vld [vmem:[%s169 + $0x1078] sm:$0xff]
        %v916 = vld [vmem:[%s169 + $0x1080] sm:$0xff]
        %v917 = vld [vmem:[%s169 + $0x1098] sm:$0xff]
        %v918 = vld [vmem:[%s169 + $0x10a0] sm:$0xff]
        %v919 = vld [vmem:[%s169 + $0x10a8] sm:$0xff]
        %v920 = vld [vmem:[%s169 + $0x10c0] sm:$0xff]
        %v921 = vld [vmem:[%s169 + $0x10c8] sm:$0xff]
        %v922 = vld [vmem:[%s169 + $0x10d0] sm:$0xff]
        %v923 = vld [vmem:[%s169 + $0x10e8] sm:$0xff]
        %v924 = vld [vmem:[%s169 + $0x10f0] sm:$0xff]
        %v925 = vld [vmem:[%s169 + $0x10f8] sm:$0xff]
        %v926 = vld [vmem:[%s169 + $0x1110] sm:$0xff]
        %v927 = vld [vmem:[%s169 + $0x1118] sm:$0xff]
        %v928 = vld [vmem:[%s169 + $0x1120] sm:$0xff]
        %v929 = vld [vmem:[%s169 + $0x1138] sm:$0xff]
        %v930 = vld [vmem:[%s169 + $0x1140] sm:$0xff]
        %v931 = vld [vmem:[%s169 + $0x1148] sm:$0xff]
        %v932 = vld [vmem:[%s169 + $0x1160] sm:$0xff]
        %v933 = vld [vmem:[%s169 + $0x1168] sm:$0xff]
        %v934 = vld [vmem:[%s169 + $0x1170] sm:$0xff]
        %v935 = vld [vmem:[%s169 + $0x1408] sm:$0xff]
        %v936 = vld [vmem:[%s169 + $0x1410] sm:$0xff]
        %v937 = vld [vmem:[%s169 + $0x1418] sm:$0xff]
        %v938 = vld [vmem:[%s169 + $0x1430] sm:$0xff]
        %v939 = vld [vmem:[%s169 + $0x1438] sm:$0xff]
        %v940 = vld [vmem:[%s169 + $0x1440] sm:$0xff]
        %v941 = vld [vmem:[%s169 + $0x1458] sm:$0xff]
        %v942 = vld [vmem:[%s169 + $0x1460] sm:$0xff]
        %v943 = vld [vmem:[%s169 + $0x1468] sm:$0xff]
        %v944 = vld [vmem:[%s169 + $0x1480] sm:$0xff]
        %v945 = vld [vmem:[%s169 + $0x1488] sm:$0xff]
        %v946 = vld [vmem:[%s169 + $0x1490] sm:$0xff]
        %v947 = vld [vmem:[%s169 + $0x14a8] sm:$0xff]
        %v948 = vld [vmem:[%s169 + $0x14b0] sm:$0xff]
        %v949 = vld [vmem:[%s169 + $0x14b8] sm:$0xff]
        %v950 = vld [vmem:[%s169 + $0x14d0] sm:$0xff]
        %v951 = vld [vmem:[%s169 + $0x14d8] sm:$0xff]
        %v952 = vld [vmem:[%s169 + $0x14e0] sm:$0xff]
        %v953 = vld [vmem:[%s169 + $0x14f8] sm:$0xff]
        %v954 = vld [vmem:[%s169 + $0x1500] sm:$0xff]
        %v955 = vld [vmem:[%s169 + $0x1508] sm:$0xff]
        %v956 = vld [vmem:[%s169 + $0x1520] sm:$0xff]
        %v957 = vld [vmem:[%s169 + $0x1528] sm:$0xff]
        %v958 = vld [vmem:[%s169 + $0x1530] sm:$0xff]
        %v959 = vld [vmem:[%s169 + $0x1548] sm:$0xff]
        %v960 = vld [vmem:[%s169 + $0x1550] sm:$0xff]
        %v961 = vld [vmem:[%s169 + $0x1558] sm:$0xff]
        %v962 = vld [vmem:[%s169 + $0x1570] sm:$0xff]
        %v963 = vld [vmem:[%s169 + $0x1578] sm:$0xff]
        %v964 = vld [vmem:[%s169 + $0x1580] sm:$0xff]
        %v965 = vld [vmem:[%s169 + $0x1598] sm:$0xff]
        %v966 = vld [vmem:[%s169 + $0x15a0] sm:$0xff]
        %v967 = vld [vmem:[%s169 + $0x15a8] sm:$0xff]
        %v968 = vld [vmem:[%s169 + $0x15c0] sm:$0xff]
        %v969 = vld [vmem:[%s169 + $0x15c8] sm:$0xff]
        %v970 = vld [vmem:[%s169 + $0x15d0] sm:$0xff]
        %v971 = vld [vmem:[%s169 + $0x15e8] sm:$0xff]
        %v972 = vld [vmem:[%s169 + $0x15f0] sm:$0xff]
        %v973 = vld [vmem:[%s169 + $0x15f8] sm:$0xff]
        %v974 = vld [vmem:[%s169 + $0x1610] sm:$0xff]
        %v975 = vld [vmem:[%s169 + $0x1618] sm:$0xff]
        %v976 = vld [vmem:[%s169 + $0x1620] sm:$0xff]
        %v977 = vld [vmem:[%s169 + $0x1638] sm:$0xff]
        %v978 = vld [vmem:[%s169 + $0x1640] sm:$0xff]
        %v979 = vld [vmem:[%s169 + $0x1648] sm:$0xff]
        %v980 = vld [vmem:[%s169 + $0x1660] sm:$0xff]
        %v981 = vld [vmem:[%s169 + $0x1668] sm:$0xff]
        %v982 = vld [vmem:[%s169 + $0x1670] sm:$0xff]
        %v983 = vld [vmem:[%s169 + $0x1688] sm:$0xff]
        %v984 = vld [vmem:[%s169 + $0x1690] sm:$0xff]
        %v985 = vld [vmem:[%s169 + $0x1698] sm:$0xff]
        %v986 = vld [vmem:[%s169 + $0x16b0] sm:$0xff]
        %v987 = vld [vmem:[%s169 + $0x16b8] sm:$0xff]
        %v988 = vld [vmem:[%s169 + $0x16c0] sm:$0xff]
        %v989 = vld [vmem:[%s169 + $0x16d8] sm:$0xff]
        %v990 = vld [vmem:[%s169 + $0x16e0] sm:$0xff]
        %v991 = vld [vmem:[%s169 + $0x16e8] sm:$0xff]
        %v992 = vld [vmem:[%s169 + $0x1700] sm:$0xff]
        %v993 = vld [vmem:[%s169 + $0x1708] sm:$0xff]
        %v994 = vld [vmem:[%s169 + $0x1710] sm:$0xff]
        %v995 = vld [vmem:[%s169 + $0x1728] sm:$0xff]
        %v996 = vld [vmem:[%s169 + $0x1730] sm:$0xff]
        %v997 = vld [vmem:[%s169 + $0x1738] sm:$0xff]
        %v998 = vld [vmem:[%s169 + $0x1750] sm:$0xff]
        %v999 = vld [vmem:[%s169 + $0x1758] sm:$0xff]
        %v1000 = vld [vmem:[%s169 + $0x1760] sm:$0xff]
        %v1001 = vld [vmem:[%s169 + $0x1778] sm:$0xff]
        %v1002 = vld [vmem:[%s169 + $0x1780] sm:$0xff]
        %v1003 = vld [vmem:[%s169 + $0x1788] sm:$0xff]
        %v1004 = vld [vmem:[%s169 + $0x17a0] sm:$0xff]
        %v1005 = vld [vmem:[%s169 + $0x17a8] sm:$0xff]
        %v1006 = vld [vmem:[%s169 + $0x17b0] sm:$0xff]
        %v1007 = vld [vmem:[%s178] sm:$0xff]
        %v1008 = vld [vmem:[%s178 + $0x8] sm:$0xff]
        %v1009 = vld [vmem:[%s178 + $0x10] sm:$0xff]
        %v1010 = vld [vmem:[%s178 + $0x18] sm:$0xff]
        %v1011 = vld [vmem:[%s178 + $0x20] sm:$0xff]
        %v1012 = vld [vmem:[%s178 + $0x28] sm:$0xff]
        %v1013 = vld [vmem:[%s178 + $0x30] sm:$0xff]
        %v1014 = vld [vmem:[%s178 + $0x38] sm:$0xff]
        %v1015 = vld [vmem:[%s178 + $0x40] sm:$0xff]
        %v1016 = vld [vmem:[%s178 + $0x48] sm:$0xff]
        %v1017 = vld [vmem:[%s178 + $0x50] sm:$0xff]
        %v1018 = vld [vmem:[%s178 + $0x58] sm:$0xff]
        %v1019 = vld [vmem:[%s178 + $0x60] sm:$0xff]
        %v1020 = vld [vmem:[%s178 + $0x68] sm:$0xff]
        %v1021 = vld [vmem:[%s178 + $0x70] sm:$0xff]
        %v1022 = vld [vmem:[%s178 + $0x78] sm:$0xff]
        %v1023 = vld [vmem:[%s178 + $0x80] sm:$0xff]
        %v1024 = vld [vmem:[%s178 + $0x88] sm:$0xff]
        %v1025 = vld [vmem:[%s178 + $0x90] sm:$0xff]
        %v1026 = vld [vmem:[%s178 + $0x98] sm:$0xff]
        %v1027 = vld [vmem:[%s178 + $0xa0] sm:$0xff]
        %v1028 = vld [vmem:[%s178 + $0xa8] sm:$0xff]
        %v1029 = vld [vmem:[%s178 + $0xb0] sm:$0xff]
        %v1030 = vld [vmem:[%s178 + $0xb8] sm:$0xff]
        %v1031 = vld [vmem:[%s178 + $0xc0] sm:$0xff]
        %v1032 = vld [vmem:[%s178 + $0xc8] sm:$0xff]
        %v1033 = vld [vmem:[%s178 + $0xd0] sm:$0xff]
        %v1034 = vld [vmem:[%s178 + $0xd8] sm:$0xff]
        %v1035 = vld [vmem:[%s178 + $0xe0] sm:$0xff]
        %v1036 = vld [vmem:[%s178 + $0xe8] sm:$0xff]
        %v1037 = vld [vmem:[%s178 + $0xf0] sm:$0xff]
        %v1038 = vld [vmem:[%s178 + $0xf8] sm:$0xff]
        %v1039 = vld [vmem:[%s178 + $0x100] sm:$0xff]
        %v1040 = vld [vmem:[%s178 + $0x108] sm:$0xff]
        %v1041 = vld [vmem:[%s178 + $0x110] sm:$0xff]
        %v1042 = vld [vmem:[%s178 + $0x118] sm:$0xff]
        %v1043 = vld [vmem:[%s178 + $0x120] sm:$0xff]
        %v1044 = vld [vmem:[%s178 + $0x128] sm:$0xff]
        %v1045 = vld [vmem:[%s178 + $0x130] sm:$0xff]
        %v1046 = vld [vmem:[%s178 + $0x138] sm:$0xff]
        %v1047 = vld [vmem:[%s178 + $0x140] sm:$0xff]
        %v1048 = vld [vmem:[%s178 + $0x148] sm:$0xff]
        %v1049 = vld [vmem:[%s178 + $0x150] sm:$0xff]
        %v1050 = vld [vmem:[%s178 + $0x158] sm:$0xff]
        %v1051 = vld [vmem:[%s178 + $0x160] sm:$0xff]
        %v1052 = vld [vmem:[%s178 + $0x168] sm:$0xff]
        %v1053 = vld [vmem:[%s178 + $0x170] sm:$0xff]
        %v1054 = vld [vmem:[%s178 + $0x178] sm:$0xff]
        %v1055 = vld [vmem:[%s178 + $0x180] sm:$0xff]
        %v1056 = vld [vmem:[%s178 + $0x188] sm:$0xff]
        %v1057 = vld [vmem:[%s178 + $0x190] sm:$0xff]
        %v1058 = vld [vmem:[%s178 + $0x198] sm:$0xff]
        %v1059 = vld [vmem:[%s178 + $0x1a0] sm:$0xff]
        %v1060 = vld [vmem:[%s178 + $0x1a8] sm:$0xff]
        %v1061 = vld [vmem:[%s178 + $0x1b0] sm:$0xff]
        %v1062 = vld [vmem:[%s178 + $0x1b8] sm:$0xff]
        %v1063 = vld [vmem:[%s178 + $0x1c0] sm:$0xff]
        %v1064 = vld [vmem:[%s178 + $0x1c8] sm:$0xff]
        %v1065 = vld [vmem:[%s178 + $0x1d0] sm:$0xff]
        %v1066 = vld [vmem:[%s178 + $0x1d8] sm:$0xff]
        %v1067 = vld [vmem:[%s178 + $0x1e0] sm:$0xff]
        %v1068 = vld [vmem:[%s178 + $0x1e8] sm:$0xff]
        %v1069 = vld [vmem:[%s178 + $0x1f0] sm:$0xff]
        %v1070 = vld [vmem:[%s178 + $0x1f8] sm:$0xff]
        %v1071 = vld [vmem:[%s178 + $0x200] sm:$0xff]
        %v1072 = vld [vmem:[%s178 + $0x208] sm:$0xff]
        %v1073 = vld [vmem:[%s178 + $0x210] sm:$0xff]
        %v1074 = vld [vmem:[%s178 + $0x218] sm:$0xff]
        %v1075 = vld [vmem:[%s178 + $0x220] sm:$0xff]
        %v1076 = vld [vmem:[%s178 + $0x228] sm:$0xff]
        %v1077 = vld [vmem:[%s178 + $0x230] sm:$0xff]
        %v1078 = vld [vmem:[%s178 + $0x238] sm:$0xff]
        %v1079 = vld [vmem:[%s178 + $0x240] sm:$0xff]
        %v1080 = vld [vmem:[%s178 + $0x248] sm:$0xff]
        %v1081 = vld [vmem:[%s178 + $0x250] sm:$0xff]
        %v1082 = vld [vmem:[%s178 + $0x258] sm:$0xff]
        %v1083 = vld [vmem:[%s178 + $0x260] sm:$0xff]
        %v1084 = vld [vmem:[%s178 + $0x268] sm:$0xff]
        %v1085 = vld [vmem:[%s178 + $0x270] sm:$0xff]
        %v1086 = vld [vmem:[%s178 + $0x278] sm:$0xff]
        %v1087 = vld [vmem:[%s178 + $0x280] sm:$0xff]
        %v1088 = vld [vmem:[%s178 + $0x288] sm:$0xff]
        %v1089 = vld [vmem:[%s178 + $0x290] sm:$0xff]
        %v1090 = vld [vmem:[%s178 + $0x298] sm:$0xff]
        %v1091 = vld [vmem:[%s178 + $0x2a0] sm:$0xff]
        %v1092 = vld [vmem:[%s178 + $0x2a8] sm:$0xff]
        %v1093 = vld [vmem:[%s178 + $0x2b0] sm:$0xff]
        %v1094 = vld [vmem:[%s178 + $0x2b8] sm:$0xff]
        %v1095 = vld [vmem:[%s178 + $0x2c0] sm:$0xff]
        %v1096 = vld [vmem:[%s178 + $0x2c8] sm:$0xff]
        %v1097 = vld [vmem:[%s178 + $0x2d0] sm:$0xff]
        %v1098 = vld [vmem:[%s178 + $0x2d8] sm:$0xff]
        %v1099 = vld [vmem:[%s178 + $0x2e0] sm:$0xff]
        %v1100 = vld [vmem:[%s178 + $0x2e8] sm:$0xff]
        %v1101 = vld [vmem:[%s178 + $0x2f0] sm:$0xff]
        %v1102 = vld [vmem:[%s178 + $0x2f8] sm:$0xff]
        %v1103 = vld [vmem:[%s178 + $0x300] sm:$0xff]
        %v1104 = vld [vmem:[%s178 + $0x308] sm:$0xff]
        %v1105 = vld [vmem:[%s178 + $0x310] sm:$0xff]
        %v1106 = vld [vmem:[%s178 + $0x318] sm:$0xff]
        %v1107 = vld [vmem:[%s178 + $0x320] sm:$0xff]
        %v1108 = vld [vmem:[%s178 + $0x328] sm:$0xff]
        %v1109 = vld [vmem:[%s178 + $0x330] sm:$0xff]
        %v1110 = vld [vmem:[%s178 + $0x338] sm:$0xff]
        %v1111 = vld [vmem:[%s178 + $0x340] sm:$0xff]
        %v1112 = vld [vmem:[%s178 + $0x348] sm:$0xff]
        %v1113 = vld [vmem:[%s178 + $0x350] sm:$0xff]
        %v1114 = vld [vmem:[%s178 + $0x358] sm:$0xff]
        %v1115 = vld [vmem:[%s178 + $0x360] sm:$0xff]
        %v1116 = vld [vmem:[%s178 + $0x368] sm:$0xff]
        %v1117 = vld [vmem:[%s178 + $0x370] sm:$0xff]
        %v1118 = vld [vmem:[%s178 + $0x378] sm:$0xff]
        %v1119 = vld [vmem:[%s178 + $0x380] sm:$0xff]
        %v1120 = vld [vmem:[%s178 + $0x388] sm:$0xff]
        %v1121 = vld [vmem:[%s178 + $0x390] sm:$0xff]
        %v1122 = vld [vmem:[%s178 + $0x398] sm:$0xff]
        %v1123 = vld [vmem:[%s178 + $0x3a0] sm:$0xff]
        %v1124 = vld [vmem:[%s178 + $0x3a8] sm:$0xff]
        %v1125 = vld [vmem:[%s178 + $0x3b0] sm:$0xff]
        %v1126 = vld [vmem:[%s178 + $0x3b8] sm:$0xff]
        %v1127 = vld [vmem:[%s178 + $0x3c0] sm:$0xff]
        %v1128 = vld [vmem:[%s178 + $0x3c8] sm:$0xff]
        %v1129 = vld [vmem:[%s178 + $0x3d0] sm:$0xff]
        %v1130 = vld [vmem:[%s178 + $0x3d8] sm:$0xff]
        %v1131 = vld [vmem:[%s178 + $0x3e0] sm:$0xff]
        %v1132 = vld [vmem:[%s178 + $0x3e8] sm:$0xff]
        %v1133 = vld [vmem:[%s178 + $0x3f0] sm:$0xff]
        %v1134 = vld [vmem:[%s178 + $0x3f8] sm:$0xff]
        %v1135 = vld [vmem:[%s178 + $0x400] sm:$0xff]
        %v1136 = vld [vmem:[%s178 + $0x408] sm:$0xff]
        %v1137 = vld [vmem:[%s178 + $0x410] sm:$0xff]
        %v1138 = vld [vmem:[%s178 + $0x418] sm:$0xff]
        %v1139 = vld [vmem:[%s178 + $0x420] sm:$0xff]
        %v1140 = vld [vmem:[%s178 + $0x428] sm:$0xff]
        %v1141 = vld [vmem:[%s178 + $0x430] sm:$0xff]
        %v1142 = vld [vmem:[%s178 + $0x438] sm:$0xff]
        %v1143 = vld [vmem:[%s178 + $0x440] sm:$0xff]
        %v1144 = vld [vmem:[%s178 + $0x448] sm:$0xff]
        %v1145 = vld [vmem:[%s178 + $0x450] sm:$0xff]
        %v1146 = vld [vmem:[%s178 + $0x458] sm:$0xff]
        %v1147 = vld [vmem:[%s178 + $0x460] sm:$0xff]
        %v1148 = vld [vmem:[%s178 + $0x468] sm:$0xff]
        %v1149 = vld [vmem:[%s178 + $0x470] sm:$0xff]
        %v1150 = vld [vmem:[%s178 + $0x478] sm:$0xff]
        %v1151 = vld [vmem:[%s178 + $0x480] sm:$0xff]
        %v1152 = vld [vmem:[%s178 + $0x488] sm:$0xff]
        %v1153 = vld [vmem:[%s178 + $0x490] sm:$0xff]
        %v1154 = vld [vmem:[%s178 + $0x498] sm:$0xff]
        %v1155 = vld [vmem:[%s178 + $0x4a0] sm:$0xff]
        %v1156 = vld [vmem:[%s178 + $0x4a8] sm:$0xff]
        %v1157 = vld [vmem:[%s178 + $0x4b0] sm:$0xff]
        %v1158 = vld [vmem:[%s178 + $0x4b8] sm:$0xff]
        %v1159 = vld [vmem:[%s178 + $0x4c0] sm:$0xff]
        %v1160 = vld [vmem:[%s178 + $0x4c8] sm:$0xff]
        %v1161 = vld [vmem:[%s178 + $0x4d0] sm:$0xff]
        %v1162 = vld [vmem:[%s178 + $0x4d8] sm:$0xff]
        %v1163 = vld [vmem:[%s178 + $0x4e0] sm:$0xff]
        %v1164 = vld [vmem:[%s178 + $0x4e8] sm:$0xff]
        %v1165 = vld [vmem:[%s178 + $0x4f0] sm:$0xff]
        %v1166 = vld [vmem:[%s178 + $0x4f8] sm:$0xff]
        %v1167 = vld [vmem:[%s178 + $0x500] sm:$0xff]
        %v1168 = vld [vmem:[%s178 + $0x508] sm:$0xff]
        %v1169 = vld [vmem:[%s178 + $0x510] sm:$0xff]
        %v1170 = vld [vmem:[%s178 + $0x518] sm:$0xff]
        %v1171 = vld [vmem:[%s178 + $0x520] sm:$0xff]
        %v1172 = vld [vmem:[%s178 + $0x528] sm:$0xff]
        %v1173 = vld [vmem:[%s178 + $0x530] sm:$0xff]
        %v1174 = vld [vmem:[%s178 + $0x538] sm:$0xff]
        %v1175 = vld [vmem:[%s178 + $0x540] sm:$0xff]
        %v1176 = vld [vmem:[%s178 + $0x548] sm:$0xff]
        %v1177 = vld [vmem:[%s178 + $0x550] sm:$0xff]
        %v1178 = vld [vmem:[%s178 + $0x558] sm:$0xff]
        %v1179 = vld [vmem:[%s178 + $0x560] sm:$0xff]
        %v1180 = vld [vmem:[%s178 + $0x568] sm:$0xff]
        %v1181 = vld [vmem:[%s178 + $0x570] sm:$0xff]
        %v1182 = vld [vmem:[%s178 + $0x578] sm:$0xff]
        %v1183 = vld [vmem:[%s178 + $0x580] sm:$0xff]
        %v1184 = vld [vmem:[%s178 + $0x588] sm:$0xff]
        %v1185 = vld [vmem:[%s178 + $0x590] sm:$0xff]
        %v1186 = vld [vmem:[%s178 + $0x598] sm:$0xff]
        %v1187 = vld [vmem:[%s178 + $0x5a0] sm:$0xff]
        %v1188 = vld [vmem:[%s178 + $0x5a8] sm:$0xff]
        %v1189 = vld [vmem:[%s178 + $0x5b0] sm:$0xff]
        %v1190 = vld [vmem:[%s178 + $0x5b8] sm:$0xff]
        %v1191 = vld [vmem:[%s178 + $0x5c0] sm:$0xff]
        %v1192 = vld [vmem:[%s178 + $0x5c8] sm:$0xff]
        %v1193 = vld [vmem:[%s178 + $0x5d0] sm:$0xff]
        %v1194 = vld [vmem:[%s178 + $0x5d8] sm:$0xff]
        %v1195 = vld [vmem:[%s178 + $0x5e0] sm:$0xff]
        %v1196 = vld [vmem:[%s178 + $0x5e8] sm:$0xff]
        %v1197 = vld [vmem:[%s178 + $0x5f0] sm:$0xff]
        %v1198 = vld [vmem:[%s178 + $0x5f8] sm:$0xff]
        %v1199 = vld [vmem:[%s178 + $0x600] sm:$0xff]
        %v1200 = vld [vmem:[%s178 + $0x608] sm:$0xff]
        %v1201 = vld [vmem:[%s178 + $0x610] sm:$0xff]
        %v1202 = vld [vmem:[%s178 + $0x618] sm:$0xff]
        %v1203 = vld [vmem:[%s178 + $0x620] sm:$0xff]
        %v1204 = vld [vmem:[%s178 + $0x628] sm:$0xff]
        %v1205 = vld [vmem:[%s178 + $0x630] sm:$0xff]
        %v1206 = vld [vmem:[%s178 + $0x638] sm:$0xff]
        %v1207 = vld [vmem:[%s178 + $0x640] sm:$0xff]
        %v1208 = vld [vmem:[%s178 + $0x648] sm:$0xff]
        %v1209 = vld [vmem:[%s178 + $0x650] sm:$0xff]
        %v1210 = vld [vmem:[%s178 + $0x658] sm:$0xff]
        %v1211 = vld [vmem:[%s178 + $0x660] sm:$0xff]
        %v1212 = vld [vmem:[%s178 + $0x668] sm:$0xff]
        %v1213 = vld [vmem:[%s178 + $0x670] sm:$0xff]
        %v1214 = vld [vmem:[%s178 + $0x678] sm:$0xff]
        %v1215 = vld [vmem:[%s178 + $0x680] sm:$0xff]
        %v1216 = vld [vmem:[%s178 + $0x688] sm:$0xff]
        %v1217 = vld [vmem:[%s178 + $0x690] sm:$0xff]
        %v1218 = vld [vmem:[%s178 + $0x698] sm:$0xff]
        %v1219 = vld [vmem:[%s178 + $0x6a0] sm:$0xff]
        %v1220 = vld [vmem:[%s178 + $0x6a8] sm:$0xff]
        %v1221 = vld [vmem:[%s178 + $0x6b0] sm:$0xff]
        %v1222 = vld [vmem:[%s178 + $0x6b8] sm:$0xff]
        %v1223 = vld [vmem:[%s178 + $0x6c0] sm:$0xff]
        %v1224 = vld [vmem:[%s178 + $0x6c8] sm:$0xff]
        %v1225 = vld [vmem:[%s178 + $0x6d0] sm:$0xff]
        %v1226 = vld [vmem:[%s178 + $0x6d8] sm:$0xff]
        %v1227 = vld [vmem:[%s178 + $0x6e0] sm:$0xff]
        %v1228 = vld [vmem:[%s178 + $0x6e8] sm:$0xff]
        %v1229 = vld [vmem:[%s178 + $0x6f0] sm:$0xff]
        %v1230 = vld [vmem:[%s178 + $0x6f8] sm:$0xff]
        %v1231 = vld [vmem:[%s178 + $0x700] sm:$0xff]
        %v1232 = vld [vmem:[%s178 + $0x708] sm:$0xff]
        %v1233 = vld [vmem:[%s178 + $0x710] sm:$0xff]
        %v1234 = vld [vmem:[%s178 + $0x718] sm:$0xff]
        %v1235 = vld [vmem:[%s178 + $0x720] sm:$0xff]
        %v1236 = vld [vmem:[%s178 + $0x728] sm:$0xff]
        %v1237 = vld [vmem:[%s178 + $0x730] sm:$0xff]
        %v1238 = vld [vmem:[%s178 + $0x738] sm:$0xff]
        %v1239 = vld [vmem:[%s178 + $0x740] sm:$0xff]
        %v1240 = vld [vmem:[%s178 + $0x748] sm:$0xff]
        %v1241 = vld [vmem:[%s178 + $0x750] sm:$0xff]
        %v1242 = vld [vmem:[%s178 + $0x758] sm:$0xff]
        %v1243 = vld [vmem:[%s178 + $0x760] sm:$0xff]
        %v1244 = vld [vmem:[%s178 + $0x768] sm:$0xff]
        %v1245 = vld [vmem:[%s178 + $0x770] sm:$0xff]
        %v1246 = vld [vmem:[%s178 + $0x778] sm:$0xff]
        %v1247 = vld [vmem:[%s178 + $0x780] sm:$0xff]
        %v1248 = vld [vmem:[%s178 + $0x788] sm:$0xff]
        %v1249 = vld [vmem:[%s178 + $0x790] sm:$0xff]
        %v1250 = vld [vmem:[%s178 + $0x798] sm:$0xff]
        %v1251 = vld [vmem:[%s178 + $0x7a0] sm:$0xff]
        %v1252 = vld [vmem:[%s178 + $0x7a8] sm:$0xff]
        %v1253 = vld [vmem:[%s178 + $0x7b0] sm:$0xff]
        %v1254 = vld [vmem:[%s178 + $0x7b8] sm:$0xff]
        %v1255 = vld [vmem:[%s178 + $0x7c0] sm:$0xff]
        %v1256 = vld [vmem:[%s178 + $0x7c8] sm:$0xff]
        %v1257 = vld [vmem:[%s178 + $0x7d0] sm:$0xff]
        %v1258 = vld [vmem:[%s178 + $0x7d8] sm:$0xff]
        %v1259 = vld [vmem:[%s178 + $0x7e0] sm:$0xff]
        %v1260 = vld [vmem:[%s178 + $0x7e8] sm:$0xff]
        %v1261 = vld [vmem:[%s178 + $0x7f0] sm:$0xff]
        %v1262 = vld [vmem:[%s178 + $0x7f8] sm:$0xff]
        %v1263 = vld [vmem:[%s178 + $0x800] sm:$0xff]
        %v1264 = vld [vmem:[%s178 + $0x808] sm:$0xff]
        %v1265 = vld [vmem:[%s178 + $0x810] sm:$0xff]
        %v1266 = vld [vmem:[%s178 + $0x818] sm:$0xff]
        %v1267 = vld [vmem:[%s178 + $0x820] sm:$0xff]
        %v1268 = vld [vmem:[%s178 + $0x828] sm:$0xff]
        %v1269 = vld [vmem:[%s178 + $0x830] sm:$0xff]
        %v1270 = vld [vmem:[%s178 + $0x838] sm:$0xff]
        %v1271 = vld [vmem:[%s178 + $0x840] sm:$0xff]
        %v1272 = vld [vmem:[%s178 + $0x848] sm:$0xff]
        %v1273 = vld [vmem:[%s178 + $0x850] sm:$0xff]
        %v1274 = vld [vmem:[%s178 + $0x858] sm:$0xff]
        %v1275 = vld [vmem:[%s178 + $0x860] sm:$0xff]
        %v1276 = vld [vmem:[%s178 + $0x868] sm:$0xff]
        %v1277 = vld [vmem:[%s178 + $0x870] sm:$0xff]
        %v1278 = vld [vmem:[%s178 + $0x878] sm:$0xff]
        %v1279 = vld [vmem:[%s178 + $0x880] sm:$0xff]
        %v1280 = vld [vmem:[%s178 + $0x888] sm:$0xff]
        %v1281 = vld [vmem:[%s178 + $0x890] sm:$0xff]
        %v1282 = vld [vmem:[%s178 + $0x898] sm:$0xff]
        %v1283 = vld [vmem:[%s178 + $0x8a0] sm:$0xff]
        %v1284 = vld [vmem:[%s178 + $0x8a8] sm:$0xff]
        %v1285 = vld [vmem:[%s178 + $0x8b0] sm:$0xff]
        %v1286 = vld [vmem:[%s178 + $0x8b8] sm:$0xff]
        %v1287 = vld [vmem:[%s178 + $0x8c0] sm:$0xff]
        %v1288 = vld [vmem:[%s178 + $0x8c8] sm:$0xff]
        %v1289 = vld [vmem:[%s178 + $0x8d0] sm:$0xff]
        %v1290 = vld [vmem:[%s178 + $0x8d8] sm:$0xff]
        %v1291 = vld [vmem:[%s178 + $0x8e0] sm:$0xff]
        %v1292 = vld [vmem:[%s178 + $0x8e8] sm:$0xff]
        %v1293 = vld [vmem:[%s178 + $0x8f0] sm:$0xff]
        %v1294 = vld [vmem:[%s178 + $0x8f8] sm:$0xff]
        %v1295 = vmul.f32 %v1007, 0.024
        %v1296 = vmul.f32 %v1008, 0.024
        %v1297 = vmul.f32 %v1009, 0.024
        %v1298 = vmul.f32 %v1010, 0.024
        %v1299 = vmul.f32 %v1011, 0.024
        %v1300 = vmul.f32 %v1012, 0.024
        %v1301 = vmul.f32 %v1013, 0.024
        %v1302 = vmul.f32 %v1014, 0.024
        %v1303 = vmul.f32 %v1015, 0.024
        %v1304 = vmul.f32 %v1016, 0.024
        %v1305 = vmul.f32 %v1017, 0.024
        %v1306 = vmul.f32 %v1018, 0.024
        %v1307 = vmul.f32 %v1019, 0.024
        %v1308 = vmul.f32 %v1020, 0.024
        %v1309 = vmul.f32 %v1021, 0.024
        %v1310 = vmul.f32 %v1022, 0.024
        %v1311 = vmul.f32 %v1023, 0.024
        %v1312 = vmul.f32 %v1024, 0.024
        %v1313 = vmul.f32 %v1025, 0.024
        %v1314 = vmul.f32 %v1026, 0.024
        %v1315 = vmul.f32 %v1027, 0.024
        %v1316 = vmul.f32 %v1028, 0.024
        %v1317 = vmul.f32 %v1029, 0.024
        %v1318 = vmul.f32 %v1030, 0.024
        %v1319 = vmul.f32 %v1031, 0.024
        %v1320 = vmul.f32 %v1032, 0.024
        %v1321 = vmul.f32 %v1033, 0.024
        %v1322 = vmul.f32 %v1034, 0.024
        %v1323 = vmul.f32 %v1035, 0.024
        %v1324 = vmul.f32 %v1036, 0.024
        %v1325 = vmul.f32 %v1037, 0.024
        %v1326 = vmul.f32 %v1038, 0.024
        %v1327 = vmul.f32 %v1039, 0.024
        %v1328 = vmul.f32 %v1040, 0.024
        %v1329 = vmul.f32 %v1041, 0.024
        %v1330 = vmul.f32 %v1042, 0.024
        %v1331 = vmul.f32 %v1043, 0.024
        %v1332 = vmul.f32 %v1044, 0.024
        %v1333 = vmul.f32 %v1045, 0.024
        %v1334 = vmul.f32 %v1046, 0.024
        %v1335 = vmul.f32 %v1047, 0.024
        %v1336 = vmul.f32 %v1048, 0.024
        %v1337 = vmul.f32 %v1049, 0.024
        %v1338 = vmul.f32 %v1050, 0.024
        %v1339 = vmul.f32 %v1051, 0.024
        %v1340 = vmul.f32 %v1052, 0.024
        %v1341 = vmul.f32 %v1053, 0.024
        %v1342 = vmul.f32 %v1054, 0.024
        %v1343 = vmul.f32 %v1055, 0.024
        %v1344 = vmul.f32 %v1056, 0.024
        %v1345 = vmul.f32 %v1057, 0.024
        %v1346 = vmul.f32 %v1058, 0.024
        %v1347 = vmul.f32 %v1059, 0.024
        %v1348 = vmul.f32 %v1060, 0.024
        %v1349 = vmul.f32 %v1061, 0.024
        %v1350 = vmul.f32 %v1062, 0.024
        %v1351 = vmul.f32 %v1063, 0.024
        %v1352 = vmul.f32 %v1064, 0.024
        %v1353 = vmul.f32 %v1065, 0.024
        %v1354 = vmul.f32 %v1066, 0.024
        %v1355 = vmul.f32 %v1067, 0.024
        %v1356 = vmul.f32 %v1068, 0.024
        %v1357 = vmul.f32 %v1069, 0.024
        %v1358 = vmul.f32 %v1070, 0.024
        %v1359 = vmul.f32 %v1071, 0.024
        %v1360 = vmul.f32 %v1072, 0.024
        %v1361 = vmul.f32 %v1073, 0.024
        %v1362 = vmul.f32 %v1074, 0.024
        %v1363 = vmul.f32 %v1075, 0.024
        %v1364 = vmul.f32 %v1076, 0.024
        %v1365 = vmul.f32 %v1077, 0.024
        %v1366 = vmul.f32 %v1078, 0.024
        %v1367 = vmul.f32 %v1079, 0.024
        %v1368 = vmul.f32 %v1080, 0.024
        %v1369 = vmul.f32 %v1081, 0.024
        %v1370 = vmul.f32 %v1082, 0.024
        %v1371 = vmul.f32 %v1083, 0.024
        %v1372 = vmul.f32 %v1084, 0.024
        %v1373 = vmul.f32 %v1085, 0.024
        %v1374 = vmul.f32 %v1086, 0.024
        %v1375 = vmul.f32 %v1087, 0.024
        %v1376 = vmul.f32 %v1088, 0.024
        %v1377 = vmul.f32 %v1089, 0.024
        %v1378 = vmul.f32 %v1090, 0.024
        %v1379 = vmul.f32 %v1091, 0.024
        %v1380 = vmul.f32 %v1092, 0.024
        %v1381 = vmul.f32 %v1093, 0.024
        %v1382 = vmul.f32 %v1094, 0.024
        %v1383 = vmul.f32 %v1095, 0.024
        %v1384 = vmul.f32 %v1096, 0.024
        %v1385 = vmul.f32 %v1097, 0.024
        %v1386 = vmul.f32 %v1098, 0.024
        %v1387 = vmul.f32 %v1099, 0.024
        %v1388 = vmul.f32 %v1100, 0.024
        %v1389 = vmul.f32 %v1101, 0.024
        %v1390 = vmul.f32 %v1102, 0.024
        %v1391 = vmul.f32 %v1103, 0.024
        %v1392 = vmul.f32 %v1104, 0.024
        %v1393 = vmul.f32 %v1105, 0.024
        %v1394 = vmul.f32 %v1106, 0.024
        %v1395 = vmul.f32 %v1107, 0.024
        %v1396 = vmul.f32 %v1108, 0.024
        %v1397 = vmul.f32 %v1109, 0.024
        %v1398 = vmul.f32 %v1110, 0.024
        %v1399 = vmul.f32 %v1111, 0.024
        %v1400 = vmul.f32 %v1112, 0.024
        %v1401 = vmul.f32 %v1113, 0.024
        %v1402 = vmul.f32 %v1114, 0.024
        %v1403 = vmul.f32 %v1115, 0.024
        %v1404 = vmul.f32 %v1116, 0.024
        %v1405 = vmul.f32 %v1117, 0.024
        %v1406 = vmul.f32 %v1118, 0.024
        %v1407 = vmul.f32 %v1119, 0.024
        %v1408 = vmul.f32 %v1120, 0.024
        %v1409 = vmul.f32 %v1121, 0.024
        %v1410 = vmul.f32 %v1122, 0.024
        %v1411 = vmul.f32 %v1123, 0.024
        %v1412 = vmul.f32 %v1124, 0.024
        %v1413 = vmul.f32 %v1125, 0.024
        %v1414 = vmul.f32 %v1126, 0.024
        %v1415 = vmul.f32 %v1127, 0.024
        %v1416 = vmul.f32 %v1128, 0.024
        %v1417 = vmul.f32 %v1129, 0.024
        %v1418 = vmul.f32 %v1130, 0.024
        %v1419 = vmul.f32 %v1131, 0.024
        %v1420 = vmul.f32 %v1132, 0.024
        %v1421 = vmul.f32 %v1133, 0.024
        %v1422 = vmul.f32 %v1134, 0.024
        %v1423 = vmul.f32 %v1135, 0.024
        %v1424 = vmul.f32 %v1136, 0.024
        %v1425 = vmul.f32 %v1137, 0.024
        %v1426 = vmul.f32 %v1138, 0.024
        %v1427 = vmul.f32 %v1139, 0.024
        %v1428 = vmul.f32 %v1140, 0.024
        %v1429 = vmul.f32 %v1141, 0.024
        %v1430 = vmul.f32 %v1142, 0.024
        %v1431 = vmul.f32 %v1143, 0.024
        %v1432 = vmul.f32 %v1144, 0.024
        %v1433 = vmul.f32 %v1145, 0.024
        %v1434 = vmul.f32 %v1146, 0.024
        %v1435 = vmul.f32 %v1147, 0.024
        %v1436 = vmul.f32 %v1148, 0.024
        %v1437 = vmul.f32 %v1149, 0.024
        %v1438 = vmul.f32 %v1150, 0.024
        %v1439 = vmul.f32 %v1151, 0.024
        %v1440 = vmul.f32 %v1152, 0.024
        %v1441 = vmul.f32 %v1153, 0.024
        %v1442 = vmul.f32 %v1154, 0.024
        %v1443 = vmul.f32 %v1155, 0.024
        %v1444 = vmul.f32 %v1156, 0.024
        %v1445 = vmul.f32 %v1157, 0.024
        %v1446 = vmul.f32 %v1158, 0.024
        %v1447 = vmul.f32 %v1159, 0.024
        %v1448 = vmul.f32 %v1160, 0.024
        %v1449 = vmul.f32 %v1161, 0.024
        %v1450 = vmul.f32 %v1162, 0.024
        %v1451 = vmul.f32 %v1163, 0.024
        %v1452 = vmul.f32 %v1164, 0.024
        %v1453 = vmul.f32 %v1165, 0.024
        %v1454 = vmul.f32 %v1166, 0.024
        %v1455 = vmul.f32 %v1167, 0.024
        %v1456 = vmul.f32 %v1168, 0.024
        %v1457 = vmul.f32 %v1169, 0.024
        %v1458 = vmul.f32 %v1170, 0.024
        %v1459 = vmul.f32 %v1171, 0.024
        %v1460 = vmul.f32 %v1172, 0.024
        %v1461 = vmul.f32 %v1173, 0.024
        %v1462 = vmul.f32 %v1174, 0.024
        %v1463 = vmul.f32 %v1175, 0.024
        %v1464 = vmul.f32 %v1176, 0.024
        %v1465 = vmul.f32 %v1177, 0.024
        %v1466 = vmul.f32 %v1178, 0.024
        %v1467 = vmul.f32 %v1179, 0.024
        %v1468 = vmul.f32 %v1180, 0.024
        %v1469 = vmul.f32 %v1181, 0.024
        %v1470 = vmul.f32 %v1182, 0.024
        %v1471 = vmul.f32 %v1183, 0.024
        %v1472 = vmul.f32 %v1184, 0.024
        %v1473 = vmul.f32 %v1185, 0.024
        %v1474 = vmul.f32 %v1186, 0.024
        %v1475 = vmul.f32 %v1187, 0.024
        %v1476 = vmul.f32 %v1188, 0.024
        %v1477 = vmul.f32 %v1189, 0.024
        %v1478 = vmul.f32 %v1190, 0.024
        %v1479 = vmul.f32 %v1191, 0.024
        %v1480 = vmul.f32 %v1192, 0.024
        %v1481 = vmul.f32 %v1193, 0.024
        %v1482 = vmul.f32 %v1194, 0.024
        %v1483 = vmul.f32 %v1195, 0.024
        %v1484 = vmul.f32 %v1196, 0.024
        %v1485 = vmul.f32 %v1197, 0.024
        %v1486 = vmul.f32 %v1198, 0.024
        %v1487 = vmul.f32 %v1199, 0.024
        %v1488 = vmul.f32 %v1200, 0.024
        %v1489 = vmul.f32 %v1201, 0.024
        %v1490 = vmul.f32 %v1202, 0.024
        %v1491 = vmul.f32 %v1203, 0.024
        %v1492 = vmul.f32 %v1204, 0.024
        %v1493 = vmul.f32 %v1205, 0.024
        %v1494 = vmul.f32 %v1206, 0.024
        %v1495 = vmul.f32 %v1207, 0.024
        %v1496 = vmul.f32 %v1208, 0.024
        %v1497 = vmul.f32 %v1209, 0.024
        %v1498 = vmul.f32 %v1210, 0.024
        %v1499 = vmul.f32 %v1211, 0.024
        %v1500 = vmul.f32 %v1212, 0.024
        %v1501 = vmul.f32 %v1213, 0.024
        %v1502 = vmul.f32 %v1214, 0.024
        %v1503 = vmul.f32 %v1215, 0.024
        %v1504 = vmul.f32 %v1216, 0.024
        %v1505 = vmul.f32 %v1217, 0.024
        %v1506 = vmul.f32 %v1218, 0.024
        %v1507 = vmul.f32 %v1219, 0.024
        %v1508 = vmul.f32 %v1220, 0.024
        %v1509 = vmul.f32 %v1221, 0.024
        %v1510 = vmul.f32 %v1222, 0.024
        %v1511 = vmul.f32 %v1223, 0.024
        %v1512 = vmul.f32 %v1224, 0.024
        %v1513 = vmul.f32 %v1225, 0.024
        %v1514 = vmul.f32 %v1226, 0.024
        %v1515 = vmul.f32 %v1227, 0.024
        %v1516 = vmul.f32 %v1228, 0.024
        %v1517 = vmul.f32 %v1229, 0.024
        %v1518 = vmul.f32 %v1230, 0.024
        %v1519 = vmul.f32 %v1231, 0.024
        %v1520 = vmul.f32 %v1232, 0.024
        %v1521 = vmul.f32 %v1233, 0.024
        %v1522 = vmul.f32 %v1234, 0.024
        %v1523 = vmul.f32 %v1235, 0.024
        %v1524 = vmul.f32 %v1236, 0.024
        %v1525 = vmul.f32 %v1237, 0.024
        %v1526 = vmul.f32 %v1238, 0.024
        %v1527 = vmul.f32 %v1239, 0.024
        %v1528 = vmul.f32 %v1240, 0.024
        %v1529 = vmul.f32 %v1241, 0.024
        %v1530 = vmul.f32 %v1242, 0.024
        %v1531 = vmul.f32 %v1243, 0.024
        %v1532 = vmul.f32 %v1244, 0.024
        %v1533 = vmul.f32 %v1245, 0.024
        %v1534 = vmul.f32 %v1246, 0.024
        %v1535 = vmul.f32 %v1247, 0.024
        %v1536 = vmul.f32 %v1248, 0.024
        %v1537 = vmul.f32 %v1249, 0.024
        %v1538 = vmul.f32 %v1250, 0.024
        %v1539 = vmul.f32 %v1251, 0.024
        %v1540 = vmul.f32 %v1252, 0.024
        %v1541 = vmul.f32 %v1253, 0.024
        %v1542 = vmul.f32 %v1254, 0.024
        %v1543 = vmul.f32 %v1255, 0.024
        %v1544 = vmul.f32 %v1256, 0.024
        %v1545 = vmul.f32 %v1257, 0.024
        %v1546 = vmul.f32 %v1258, 0.024
        %v1547 = vmul.f32 %v1259, 0.024
        %v1548 = vmul.f32 %v1260, 0.024
        %v1549 = vmul.f32 %v1261, 0.024
        %v1550 = vmul.f32 %v1262, 0.024
        %v1551 = vmul.f32 %v1263, 0.024
        %v1552 = vmul.f32 %v1264, 0.024
        %v1553 = vmul.f32 %v1265, 0.024
        %v1554 = vmul.f32 %v1266, 0.024
        %v1555 = vmul.f32 %v1267, 0.024
        %v1556 = vmul.f32 %v1268, 0.024
        %v1557 = vmul.f32 %v1269, 0.024
        %v1558 = vmul.f32 %v1270, 0.024
        %v1559 = vmul.f32 %v1271, 0.024
        %v1560 = vmul.f32 %v1272, 0.024
        %v1561 = vmul.f32 %v1273, 0.024
        %v1562 = vmul.f32 %v1274, 0.024
        %v1563 = vmul.f32 %v1275, 0.024
        %v1564 = vmul.f32 %v1276, 0.024
        %v1565 = vmul.f32 %v1277, 0.024
        %v1566 = vmul.f32 %v1278, 0.024
        %v1567 = vmul.f32 %v1279, 0.024
        %v1568 = vmul.f32 %v1280, 0.024
        %v1569 = vmul.f32 %v1281, 0.024
        %v1570 = vmul.f32 %v1282, 0.024
        %v1571 = vmul.f32 %v1283, 0.024
        %v1572 = vmul.f32 %v1284, 0.024
        %v1573 = vmul.f32 %v1285, 0.024
        %v1574 = vmul.f32 %v1286, 0.024
        %v1575 = vmul.f32 %v1287, 0.024
        %v1576 = vmul.f32 %v1288, 0.024
        %v1577 = vmul.f32 %v1289, 0.024
        %v1578 = vmul.f32 %v1290, 0.024
        %v1579 = vmul.f32 %v1291, 0.024
        %v1580 = vmul.f32 %v1292, 0.024
        %v1581 = vmul.f32 %v1293, 0.024
        %v1582 = vmul.f32 %v1294, 0.024
        %v1583 = vadd.f32 %v719, %v1295
        %v1584 = vadd.f32 %v720, %v1296
        %v1585 = vadd.f32 %v721, %v1297
        %v1586 = vadd.f32 %v722, %v1298
        %v1587 = vadd.f32 %v723, %v1299
        %v1588 = vadd.f32 %v724, %v1300
        %v1589 = vadd.f32 %v725, %v1301
        %v1590 = vadd.f32 %v726, %v1302
        %v1591 = vadd.f32 %v727, %v1303
        %v1592 = vadd.f32 %v728, %v1304
        %v1593 = vadd.f32 %v729, %v1305
        %v1594 = vadd.f32 %v730, %v1306
        %v1595 = vadd.f32 %v731, %v1307
        %v1596 = vadd.f32 %v732, %v1308
        %v1597 = vadd.f32 %v733, %v1309
        %v1598 = vadd.f32 %v734, %v1310
        %v1599 = vadd.f32 %v735, %v1311
        %v1600 = vadd.f32 %v736, %v1312
        %v1601 = vadd.f32 %v737, %v1313
        %v1602 = vadd.f32 %v738, %v1314
        %v1603 = vadd.f32 %v739, %v1315
        %v1604 = vadd.f32 %v740, %v1316
        %v1605 = vadd.f32 %v741, %v1317
        %v1606 = vadd.f32 %v742, %v1318
        %v1607 = vadd.f32 %v743, %v1319
        %v1608 = vadd.f32 %v744, %v1320
        %v1609 = vadd.f32 %v745, %v1321
        %v1610 = vadd.f32 %v746, %v1322
        %v1611 = vadd.f32 %v747, %v1323
        %v1612 = vadd.f32 %v748, %v1324
        %v1613 = vadd.f32 %v749, %v1325
        %v1614 = vadd.f32 %v750, %v1326
        %v1615 = vadd.f32 %v751, %v1327
        %v1616 = vadd.f32 %v752, %v1328
        %v1617 = vadd.f32 %v753, %v1329
        %v1618 = vadd.f32 %v754, %v1330
        %v1619 = vadd.f32 %v755, %v1331
        %v1620 = vadd.f32 %v756, %v1332
        %v1621 = vadd.f32 %v757, %v1333
        %v1622 = vadd.f32 %v758, %v1334
        %v1623 = vadd.f32 %v759, %v1335
        %v1624 = vadd.f32 %v760, %v1336
        %v1625 = vadd.f32 %v761, %v1337
        %v1626 = vadd.f32 %v762, %v1338
        %v1627 = vadd.f32 %v763, %v1339
        %v1628 = vadd.f32 %v764, %v1340
        %v1629 = vadd.f32 %v765, %v1341
        %v1630 = vadd.f32 %v766, %v1342
        %v1631 = vadd.f32 %v767, %v1343
        %v1632 = vadd.f32 %v768, %v1344
        %v1633 = vadd.f32 %v769, %v1345
        %v1634 = vadd.f32 %v770, %v1346
        %v1635 = vadd.f32 %v771, %v1347
        %v1636 = vadd.f32 %v772, %v1348
        %v1637 = vadd.f32 %v773, %v1349
        %v1638 = vadd.f32 %v774, %v1350
        %v1639 = vadd.f32 %v775, %v1351
        %v1640 = vadd.f32 %v776, %v1352
        %v1641 = vadd.f32 %v777, %v1353
        %v1642 = vadd.f32 %v778, %v1354
        %v1643 = vadd.f32 %v779, %v1355
        %v1644 = vadd.f32 %v780, %v1356
        %v1645 = vadd.f32 %v781, %v1357
        %v1646 = vadd.f32 %v782, %v1358
        %v1647 = vadd.f32 %v783, %v1359
        %v1648 = vadd.f32 %v784, %v1360
        %v1649 = vadd.f32 %v785, %v1361
        %v1650 = vadd.f32 %v786, %v1362
        %v1651 = vadd.f32 %v787, %v1363
        %v1652 = vadd.f32 %v788, %v1364
        %v1653 = vadd.f32 %v789, %v1365
        %v1654 = vadd.f32 %v790, %v1366
        %v1655 = vadd.f32 %v791, %v1367
        %v1656 = vadd.f32 %v792, %v1368
        %v1657 = vadd.f32 %v793, %v1369
        %v1658 = vadd.f32 %v794, %v1370
        %v1659 = vadd.f32 %v795, %v1371
        %v1660 = vadd.f32 %v796, %v1372
        %v1661 = vadd.f32 %v797, %v1373
        %v1662 = vadd.f32 %v798, %v1374
        %v1663 = vadd.f32 %v799, %v1375
        %v1664 = vadd.f32 %v800, %v1376
        %v1665 = vadd.f32 %v801, %v1377
        %v1666 = vadd.f32 %v802, %v1378
        %v1667 = vadd.f32 %v803, %v1379
        %v1668 = vadd.f32 %v804, %v1380
        %v1669 = vadd.f32 %v805, %v1381
        %v1670 = vadd.f32 %v806, %v1382
        %v1671 = vadd.f32 %v807, %v1383
        %v1672 = vadd.f32 %v808, %v1384
        %v1673 = vadd.f32 %v809, %v1385
        %v1674 = vadd.f32 %v810, %v1386
        %v1675 = vadd.f32 %v811, %v1387
        %v1676 = vadd.f32 %v812, %v1388
        %v1677 = vadd.f32 %v813, %v1389
        %v1678 = vadd.f32 %v814, %v1390
        %v1679 = vadd.f32 %v815, %v1391
        %v1680 = vadd.f32 %v816, %v1392
        %v1681 = vadd.f32 %v817, %v1393
        %v1682 = vadd.f32 %v818, %v1394
        %v1683 = vadd.f32 %v819, %v1395
        %v1684 = vadd.f32 %v820, %v1396
        %v1685 = vadd.f32 %v821, %v1397
        %v1686 = vadd.f32 %v822, %v1398
        %v1687 = vadd.f32 %v823, %v1399
        %v1688 = vadd.f32 %v824, %v1400
        %v1689 = vadd.f32 %v825, %v1401
        %v1690 = vadd.f32 %v826, %v1402
        %v1691 = vadd.f32 %v827, %v1403
        %v1692 = vadd.f32 %v828, %v1404
        %v1693 = vadd.f32 %v829, %v1405
        %v1694 = vadd.f32 %v830, %v1406
        %v1695 = vadd.f32 %v831, %v1407
        %v1696 = vadd.f32 %v832, %v1408
        %v1697 = vadd.f32 %v833, %v1409
        %v1698 = vadd.f32 %v834, %v1410
        %v1699 = vadd.f32 %v835, %v1411
        %v1700 = vadd.f32 %v836, %v1412
        %v1701 = vadd.f32 %v837, %v1413
        %v1702 = vadd.f32 %v838, %v1414
        %v1703 = vadd.f32 %v839, %v1415
        %v1704 = vadd.f32 %v840, %v1416
        %v1705 = vadd.f32 %v841, %v1417
        %v1706 = vadd.f32 %v842, %v1418
        %v1707 = vadd.f32 %v843, %v1419
        %v1708 = vadd.f32 %v844, %v1420
        %v1709 = vadd.f32 %v845, %v1421
        %v1710 = vadd.f32 %v846, %v1422
        %v1711 = vadd.f32 %v847, %v1423
        %v1712 = vadd.f32 %v848, %v1424
        %v1713 = vadd.f32 %v849, %v1425
        %v1714 = vadd.f32 %v850, %v1426
        %v1715 = vadd.f32 %v851, %v1427
        %v1716 = vadd.f32 %v852, %v1428
        %v1717 = vadd.f32 %v853, %v1429
        %v1718 = vadd.f32 %v854, %v1430
        %v1719 = vadd.f32 %v855, %v1431
        %v1720 = vadd.f32 %v856, %v1432
        %v1721 = vadd.f32 %v857, %v1433
        %v1722 = vadd.f32 %v858, %v1434
        %v1723 = vadd.f32 %v859, %v1435
        %v1724 = vadd.f32 %v860, %v1436
        %v1725 = vadd.f32 %v861, %v1437
        %v1726 = vadd.f32 %v862, %v1438
        %v1727 = vadd.f32 %v863, %v1439
        %v1728 = vadd.f32 %v864, %v1440
        %v1729 = vadd.f32 %v865, %v1441
        %v1730 = vadd.f32 %v866, %v1442
        %v1731 = vadd.f32 %v867, %v1443
        %v1732 = vadd.f32 %v868, %v1444
        %v1733 = vadd.f32 %v869, %v1445
        %v1734 = vadd.f32 %v870, %v1446
        %v1735 = vadd.f32 %v871, %v1447
        %v1736 = vadd.f32 %v872, %v1448
        %v1737 = vadd.f32 %v873, %v1449
        %v1738 = vadd.f32 %v874, %v1450
        %v1739 = vadd.f32 %v875, %v1451
        %v1740 = vadd.f32 %v876, %v1452
        %v1741 = vadd.f32 %v877, %v1453
        %v1742 = vadd.f32 %v878, %v1454
        %v1743 = vadd.f32 %v879, %v1455
        %v1744 = vadd.f32 %v880, %v1456
        %v1745 = vadd.f32 %v881, %v1457
        %v1746 = vadd.f32 %v882, %v1458
        %v1747 = vadd.f32 %v883, %v1459
        %v1748 = vadd.f32 %v884, %v1460
        %v1749 = vadd.f32 %v885, %v1461
        %v1750 = vadd.f32 %v886, %v1462
        %v1751 = vadd.f32 %v887, %v1463
        %v1752 = vadd.f32 %v888, %v1464
        %v1753 = vadd.f32 %v889, %v1465
        %v1754 = vadd.f32 %v890, %v1466
        %v1755 = vadd.f32 %v891, %v1467
        %v1756 = vadd.f32 %v892, %v1468
        %v1757 = vadd.f32 %v893, %v1469
        %v1758 = vadd.f32 %v894, %v1470
        %v1759 = vadd.f32 %v895, %v1471
        %v1760 = vadd.f32 %v896, %v1472
        %v1761 = vadd.f32 %v897, %v1473
        %v1762 = vadd.f32 %v898, %v1474
        %v1763 = vadd.f32 %v899, %v1475
        %v1764 = vadd.f32 %v900, %v1476
        %v1765 = vadd.f32 %v901, %v1477
        %v1766 = vadd.f32 %v902, %v1478
        %v1767 = vadd.f32 %v903, %v1479
        %v1768 = vadd.f32 %v904, %v1480
        %v1769 = vadd.f32 %v905, %v1481
        %v1770 = vadd.f32 %v906, %v1482
        %v1771 = vadd.f32 %v907, %v1483
        %v1772 = vadd.f32 %v908, %v1484
        %v1773 = vadd.f32 %v909, %v1485
        %v1774 = vadd.f32 %v910, %v1486
        %v1775 = vadd.f32 %v911, %v1487
        %v1776 = vadd.f32 %v912, %v1488
        %v1777 = vadd.f32 %v913, %v1489
        %v1778 = vadd.f32 %v914, %v1490
        %v1779 = vadd.f32 %v915, %v1491
        %v1780 = vadd.f32 %v916, %v1492
        %v1781 = vadd.f32 %v917, %v1493
        %v1782 = vadd.f32 %v918, %v1494
        %v1783 = vadd.f32 %v919, %v1495
        %v1784 = vadd.f32 %v920, %v1496
        %v1785 = vadd.f32 %v921, %v1497
        %v1786 = vadd.f32 %v922, %v1498
        %v1787 = vadd.f32 %v923, %v1499
        %v1788 = vadd.f32 %v924, %v1500
        %v1789 = vadd.f32 %v925, %v1501
        %v1790 = vadd.f32 %v926, %v1502
        %v1791 = vadd.f32 %v927, %v1503
        %v1792 = vadd.f32 %v928, %v1504
        %v1793 = vadd.f32 %v929, %v1505
        %v1794 = vadd.f32 %v930, %v1506
        %v1795 = vadd.f32 %v931, %v1507
        %v1796 = vadd.f32 %v932, %v1508
        %v1797 = vadd.f32 %v933, %v1509
        %v1798 = vadd.f32 %v934, %v1510
        %v1799 = vadd.f32 %v935, %v1511
        %v1800 = vadd.f32 %v936, %v1512
        %v1801 = vadd.f32 %v937, %v1513
        %v1802 = vadd.f32 %v938, %v1514
        %v1803 = vadd.f32 %v939, %v1515
        %v1804 = vadd.f32 %v940, %v1516
        %v1805 = vadd.f32 %v941, %v1517
        %v1806 = vadd.f32 %v942, %v1518
        %v1807 = vadd.f32 %v943, %v1519
        %v1808 = vadd.f32 %v944, %v1520
        %v1809 = vadd.f32 %v945, %v1521
        %v1810 = vadd.f32 %v946, %v1522
        %v1811 = vadd.f32 %v947, %v1523
        %v1812 = vadd.f32 %v948, %v1524
        %v1813 = vadd.f32 %v949, %v1525
        %v1814 = vadd.f32 %v950, %v1526
        %v1815 = vadd.f32 %v951, %v1527
        %v1816 = vadd.f32 %v952, %v1528
        %v1817 = vadd.f32 %v953, %v1529
        %v1818 = vadd.f32 %v954, %v1530
        %v1819 = vadd.f32 %v955, %v1531
        %v1820 = vadd.f32 %v956, %v1532
        %v1821 = vadd.f32 %v957, %v1533
        %v1822 = vadd.f32 %v958, %v1534
        %v1823 = vadd.f32 %v959, %v1535
        %v1824 = vadd.f32 %v960, %v1536
        %v1825 = vadd.f32 %v961, %v1537
        %v1826 = vadd.f32 %v962, %v1538
        %v1827 = vadd.f32 %v963, %v1539
        %v1828 = vadd.f32 %v964, %v1540
        %v1829 = vadd.f32 %v965, %v1541
        %v1830 = vadd.f32 %v966, %v1542
        %v1831 = vadd.f32 %v967, %v1543
        %v1832 = vadd.f32 %v968, %v1544
        %v1833 = vadd.f32 %v969, %v1545
        %v1834 = vadd.f32 %v970, %v1546
        %v1835 = vadd.f32 %v971, %v1547
        %v1836 = vadd.f32 %v972, %v1548
        %v1837 = vadd.f32 %v973, %v1549
        %v1838 = vadd.f32 %v974, %v1550
        %v1839 = vadd.f32 %v975, %v1551
        %v1840 = vadd.f32 %v976, %v1552
        %v1841 = vadd.f32 %v977, %v1553
        %v1842 = vadd.f32 %v978, %v1554
        %v1843 = vadd.f32 %v979, %v1555
        %v1844 = vadd.f32 %v980, %v1556
        %v1845 = vadd.f32 %v981, %v1557
        %v1846 = vadd.f32 %v982, %v1558
        %v1847 = vadd.f32 %v983, %v1559
        %v1848 = vadd.f32 %v984, %v1560
        %v1849 = vadd.f32 %v985, %v1561
        %v1850 = vadd.f32 %v986, %v1562
        %v1851 = vadd.f32 %v987, %v1563
        %v1852 = vadd.f32 %v988, %v1564
        %v1853 = vadd.f32 %v989, %v1565
        %v1854 = vadd.f32 %v990, %v1566
        %v1855 = vadd.f32 %v991, %v1567
        %v1856 = vadd.f32 %v992, %v1568
        %v1857 = vadd.f32 %v993, %v1569
        %v1858 = vadd.f32 %v994, %v1570
        %v1859 = vadd.f32 %v995, %v1571
        %v1860 = vadd.f32 %v996, %v1572
        %v1861 = vadd.f32 %v997, %v1573
        %v1862 = vadd.f32 %v998, %v1574
        %v1863 = vadd.f32 %v999, %v1575
        %v1864 = vadd.f32 %v1000, %v1576
        %v1865 = vadd.f32 %v1001, %v1577
        %v1866 = vadd.f32 %v1002, %v1578
        %v1867 = vadd.f32 %v1003, %v1579
        %v1868 = vadd.f32 %v1004, %v1580
        %v1869 = vadd.f32 %v1005, %v1581
        %v1870 = vadd.f32 %v1006, %v1582
        %1871 = vst [vmem:[%s203 + $0x148] sm:$0xff] %v1583
        %1872 = vst [vmem:[%s203 + $0x150] sm:$0xff] %v1584
        %1873 = vst [vmem:[%s203 + $0x158] sm:$0xff] %v1585
        %1874 = vst [vmem:[%s203 + $0x170] sm:$0xff] %v1586
        %1875 = vst [vmem:[%s203 + $0x178] sm:$0xff] %v1587
        %1876 = vst [vmem:[%s203 + $0x180] sm:$0xff] %v1588
        %1877 = vst [vmem:[%s203 + $0x198] sm:$0xff] %v1589
        %1878 = vst [vmem:[%s203 + $0x1a0] sm:$0xff] %v1590
        %1879 = vst [vmem:[%s203 + $0x1a8] sm:$0xff] %v1591
        %1880 = vst [vmem:[%s203 + $0x1c0] sm:$0xff] %v1592
        %1881 = vst [vmem:[%s203 + $0x1c8] sm:$0xff] %v1593
        %1882 = vst [vmem:[%s203 + $0x1d0] sm:$0xff] %v1594
        %1883 = vst [vmem:[%s203 + $0x1e8] sm:$0xff] %v1595
        %1884 = vst [vmem:[%s203 + $0x1f0] sm:$0xff] %v1596
        %1885 = vst [vmem:[%s203 + $0x1f8] sm:$0xff] %v1597
        %1886 = vst [vmem:[%s203 + $0x210] sm:$0xff] %v1598
        %1887 = vst [vmem:[%s203 + $0x218] sm:$0xff] %v1599
        %1888 = vst [vmem:[%s203 + $0x220] sm:$0xff] %v1600
        %1889 = vst [vmem:[%s203 + $0x238] sm:$0xff] %v1601
        %1890 = vst [vmem:[%s203 + $0x240] sm:$0xff] %v1602
        %1891 = vst [vmem:[%s203 + $0x248] sm:$0xff] %v1603
        %1892 = vst [vmem:[%s203 + $0x260] sm:$0xff] %v1604
        %1893 = vst [vmem:[%s203 + $0x268] sm:$0xff] %v1605
        %1894 = vst [vmem:[%s203 + $0x270] sm:$0xff] %v1606
        %1895 = vst [vmem:[%s203 + $0x288] sm:$0xff] %v1607
        %1896 = vst [vmem:[%s203 + $0x290] sm:$0xff] %v1608
        %1897 = vst [vmem:[%s203 + $0x298] sm:$0xff] %v1609
        %1898 = vst [vmem:[%s203 + $0x2b0] sm:$0xff] %v1610
        %1899 = vst [vmem:[%s203 + $0x2b8] sm:$0xff] %v1611
        %1900 = vst [vmem:[%s203 + $0x2c0] sm:$0xff] %v1612
        %1901 = vst [vmem:[%s203 + $0x2d8] sm:$0xff] %v1613
        %1902 = vst [vmem:[%s203 + $0x2e0] sm:$0xff] %v1614
        %1903 = vst [vmem:[%s203 + $0x2e8] sm:$0xff] %v1615
        %1904 = vst [vmem:[%s203 + $0x300] sm:$0xff] %v1616
        %1905 = vst [vmem:[%s203 + $0x308] sm:$0xff] %v1617
        %1906 = vst [vmem:[%s203 + $0x310] sm:$0xff] %v1618
        %1907 = vst [vmem:[%s203 + $0x328] sm:$0xff] %v1619
        %1908 = vst [vmem:[%s203 + $0x330] sm:$0xff] %v1620
        %1909 = vst [vmem:[%s203 + $0x338] sm:$0xff] %v1621
        %1910 = vst [vmem:[%s203 + $0x350] sm:$0xff] %v1622
        %1911 = vst [vmem:[%s203 + $0x358] sm:$0xff] %v1623
        %1912 = vst [vmem:[%s203 + $0x360] sm:$0xff] %v1624
        %1913 = vst [vmem:[%s203 + $0x378] sm:$0xff] %v1625
        %1914 = vst [vmem:[%s203 + $0x380] sm:$0xff] %v1626
        %1915 = vst [vmem:[%s203 + $0x388] sm:$0xff] %v1627
        %1916 = vst [vmem:[%s203 + $0x3a0] sm:$0xff] %v1628
        %1917 = vst [vmem:[%s203 + $0x3a8] sm:$0xff] %v1629
        %1918 = vst [vmem:[%s203 + $0x3b0] sm:$0xff] %v1630
        %1919 = vst [vmem:[%s203 + $0x3c8] sm:$0xff] %v1631
        %1920 = vst [vmem:[%s203 + $0x3d0] sm:$0xff] %v1632
        %1921 = vst [vmem:[%s203 + $0x3d8] sm:$0xff] %v1633
        %1922 = vst [vmem:[%s203 + $0x3f0] sm:$0xff] %v1634
        %1923 = vst [vmem:[%s203 + $0x3f8] sm:$0xff] %v1635
        %1924 = vst [vmem:[%s203 + $0x400] sm:$0xff] %v1636
        %1925 = vst [vmem:[%s203 + $0x418] sm:$0xff] %v1637
        %1926 = vst [vmem:[%s203 + $0x420] sm:$0xff] %v1638
        %1927 = vst [vmem:[%s203 + $0x428] sm:$0xff] %v1639
        %1928 = vst [vmem:[%s203 + $0x440] sm:$0xff] %v1640
        %1929 = vst [vmem:[%s203 + $0x448] sm:$0xff] %v1641
        %1930 = vst [vmem:[%s203 + $0x450] sm:$0xff] %v1642
        %1931 = vst [vmem:[%s203 + $0x468] sm:$0xff] %v1643
        %1932 = vst [vmem:[%s203 + $0x470] sm:$0xff] %v1644
        %1933 = vst [vmem:[%s203 + $0x478] sm:$0xff] %v1645
        %1934 = vst [vmem:[%s203 + $0x490] sm:$0xff] %v1646
        %1935 = vst [vmem:[%s203 + $0x498] sm:$0xff] %v1647
        %1936 = vst [vmem:[%s203 + $0x4a0] sm:$0xff] %v1648
        %1937 = vst [vmem:[%s203 + $0x4b8] sm:$0xff] %v1649
        %1938 = vst [vmem:[%s203 + $0x4c0] sm:$0xff] %v1650
        %1939 = vst [vmem:[%s203 + $0x4c8] sm:$0xff] %v1651
        %1940 = vst [vmem:[%s203 + $0x4e0] sm:$0xff] %v1652
        %1941 = vst [vmem:[%s203 + $0x4e8] sm:$0xff] %v1653
        %1942 = vst [vmem:[%s203 + $0x4f0] sm:$0xff] %v1654
        %1943 = vst [vmem:[%s203 + $0x788] sm:$0xff] %v1655
        %1944 = vst [vmem:[%s203 + $0x790] sm:$0xff] %v1656
        %1945 = vst [vmem:[%s203 + $0x798] sm:$0xff] %v1657
        %1946 = vst [vmem:[%s203 + $0x7b0] sm:$0xff] %v1658
        %1947 = vst [vmem:[%s203 + $0x7b8] sm:$0xff] %v1659
        %1948 = vst [vmem:[%s203 + $0x7c0] sm:$0xff] %v1660
        %1949 = vst [vmem:[%s203 + $0x7d8] sm:$0xff] %v1661
        %1950 = vst [vmem:[%s203 + $0x7e0] sm:$0xff] %v1662
        %1951 = vst [vmem:[%s203 + $0x7e8] sm:$0xff] %v1663
        %1952 = vst [vmem:[%s203 + $0x800] sm:$0xff] %v1664
        %1953 = vst [vmem:[%s203 + $0x808] sm:$0xff] %v1665
        %1954 = vst [vmem:[%s203 + $0x810] sm:$0xff] %v1666
        %1955 = vst [vmem:[%s203 + $0x828] sm:$0xff] %v1667
        %1956 = vst [vmem:[%s203 + $0x830] sm:$0xff] %v1668
        %1957 = vst [vmem:[%s203 + $0x838] sm:$0xff] %v1669
        %1958 = vst [vmem:[%s203 + $0x850] sm:$0xff] %v1670
        %1959 = vst [vmem:[%s203 + $0x858] sm:$0xff] %v1671
        %1960 = vst [vmem:[%s203 + $0x860] sm:$0xff] %v1672
        %1961 = vst [vmem:[%s203 + $0x878] sm:$0xff] %v1673
        %1962 = vst [vmem:[%s203 + $0x880] sm:$0xff] %v1674
        %1963 = vst [vmem:[%s203 + $0x888] sm:$0xff] %v1675
        %1964 = vst [vmem:[%s203 + $0x8a0] sm:$0xff] %v1676
        %1965 = vst [vmem:[%s203 + $0x8a8] sm:$0xff] %v1677
        %1966 = vst [vmem:[%s203 + $0x8b0] sm:$0xff] %v1678
        %1967 = vst [vmem:[%s203 + $0x8c8] sm:$0xff] %v1679
        %1968 = vst [vmem:[%s203 + $0x8d0] sm:$0xff] %v1680
        %1969 = vst [vmem:[%s203 + $0x8d8] sm:$0xff] %v1681
        %1970 = vst [vmem:[%s203 + $0x8f0] sm:$0xff] %v1682
        %1971 = vst [vmem:[%s203 + $0x8f8] sm:$0xff] %v1683
        %1972 = vst [vmem:[%s203 + $0x900] sm:$0xff] %v1684
        %1973 = vst [vmem:[%s203 + $0x918] sm:$0xff] %v1685
        %1974 = vst [vmem:[%s203 + $0x920] sm:$0xff] %v1686
        %1975 = vst [vmem:[%s203 + $0x928] sm:$0xff] %v1687
        %1976 = vst [vmem:[%s203 + $0x940] sm:$0xff] %v1688
        %1977 = vst [vmem:[%s203 + $0x948] sm:$0xff] %v1689
        %1978 = vst [vmem:[%s203 + $0x950] sm:$0xff] %v1690
        %1979 = vst [vmem:[%s203 + $0x968] sm:$0xff] %v1691
        %1980 = vst [vmem:[%s203 + $0x970] sm:$0xff] %v1692
        %1981 = vst [vmem:[%s203 + $0x978] sm:$0xff] %v1693
        %1982 = vst [vmem:[%s203 + $0x990] sm:$0xff] %v1694
        %1983 = vst [vmem:[%s203 + $0x998] sm:$0xff] %v1695
        %1984 = vst [vmem:[%s203 + $0x9a0] sm:$0xff] %v1696
        %1985 = vst [vmem:[%s203 + $0x9b8] sm:$0xff] %v1697
        %1986 = vst [vmem:[%s203 + $0x9c0] sm:$0xff] %v1698
        %1987 = vst [vmem:[%s203 + $0x9c8] sm:$0xff] %v1699
        %1988 = vst [vmem:[%s203 + $0x9e0] sm:$0xff] %v1700
        %1989 = vst [vmem:[%s203 + $0x9e8] sm:$0xff] %v1701
        %1990 = vst [vmem:[%s203 + $0x9f0] sm:$0xff] %v1702
        %1991 = vst [vmem:[%s203 + $0xa08] sm:$0xff] %v1703
        %1992 = vst [vmem:[%s203 + $0xa10] sm:$0xff] %v1704
        %1993 = vst [vmem:[%s203 + $0xa18] sm:$0xff] %v1705
        %1994 = vst [vmem:[%s203 + $0xa30] sm:$0xff] %v1706
        %1995 = vst [vmem:[%s203 + $0xa38] sm:$0xff] %v1707
        %1996 = vst [vmem:[%s203 + $0xa40] sm:$0xff] %v1708
        %1997 = vst [vmem:[%s203 + $0xa58] sm:$0xff] %v1709
        %1998 = vst [vmem:[%s203 + $0xa60] sm:$0xff] %v1710
        %1999 = vst [vmem:[%s203 + $0xa68] sm:$0xff] %v1711
        %2000 = vst [vmem:[%s203 + $0xa80] sm:$0xff] %v1712
        %2001 = vst [vmem:[%s203 + $0xa88] sm:$0xff] %v1713
        %2002 = vst [vmem:[%s203 + $0xa90] sm:$0xff] %v1714
        %2003 = vst [vmem:[%s203 + $0xaa8] sm:$0xff] %v1715
        %2004 = vst [vmem:[%s203 + $0xab0] sm:$0xff] %v1716
        %2005 = vst [vmem:[%s203 + $0xab8] sm:$0xff] %v1717
        %2006 = vst [vmem:[%s203 + $0xad0] sm:$0xff] %v1718
        %2007 = vst [vmem:[%s203 + $0xad8] sm:$0xff] %v1719
        %2008 = vst [vmem:[%s203 + $0xae0] sm:$0xff] %v1720
        %2009 = vst [vmem:[%s203 + $0xaf8] sm:$0xff] %v1721
        %2010 = vst [vmem:[%s203 + $0xb00] sm:$0xff] %v1722
        %2011 = vst [vmem:[%s203 + $0xb08] sm:$0xff] %v1723
        %2012 = vst [vmem:[%s203 + $0xb20] sm:$0xff] %v1724
        %2013 = vst [vmem:[%s203 + $0xb28] sm:$0xff] %v1725
        %2014 = vst [vmem:[%s203 + $0xb30] sm:$0xff] %v1726
        %2015 = vst [vmem:[%s203 + $0xdc8] sm:$0xff] %v1727
        %2016 = vst [vmem:[%s203 + $0xdd0] sm:$0xff] %v1728
        %2017 = vst [vmem:[%s203 + $0xdd8] sm:$0xff] %v1729
        %2018 = vst [vmem:[%s203 + $0xdf0] sm:$0xff] %v1730
        %2019 = vst [vmem:[%s203 + $0xdf8] sm:$0xff] %v1731
        %2020 = vst [vmem:[%s203 + $0xe00] sm:$0xff] %v1732
        %2021 = vst [vmem:[%s203 + $0xe18] sm:$0xff] %v1733
        %2022 = vst [vmem:[%s203 + $0xe20] sm:$0xff] %v1734
        %2023 = vst [vmem:[%s203 + $0xe28] sm:$0xff] %v1735
        %2024 = vst [vmem:[%s203 + $0xe40] sm:$0xff] %v1736
        %2025 = vst [vmem:[%s203 + $0xe48] sm:$0xff] %v1737
        %2026 = vst [vmem:[%s203 + $0xe50] sm:$0xff] %v1738
        %2027 = vst [vmem:[%s203 + $0xe68] sm:$0xff] %v1739
        %2028 = vst [vmem:[%s203 + $0xe70] sm:$0xff] %v1740
        %2029 = vst [vmem:[%s203 + $0xe78] sm:$0xff] %v1741
        %2030 = vst [vmem:[%s203 + $0xe90] sm:$0xff] %v1742
        %2031 = vst [vmem:[%s203 + $0xe98] sm:$0xff] %v1743
        %2032 = vst [vmem:[%s203 + $0xea0] sm:$0xff] %v1744
        %2033 = vst [vmem:[%s203 + $0xeb8] sm:$0xff] %v1745
        %2034 = vst [vmem:[%s203 + $0xec0] sm:$0xff] %v1746
        %2035 = vst [vmem:[%s203 + $0xec8] sm:$0xff] %v1747
        %2036 = vst [vmem:[%s203 + $0xee0] sm:$0xff] %v1748
        %2037 = vst [vmem:[%s203 + $0xee8] sm:$0xff] %v1749
        %2038 = vst [vmem:[%s203 + $0xef0] sm:$0xff] %v1750
        %2039 = vst [vmem:[%s203 + $0xf08] sm:$0xff] %v1751
        %2040 = vst [vmem:[%s203 + $0xf10] sm:$0xff] %v1752
        %2041 = vst [vmem:[%s203 + $0xf18] sm:$0xff] %v1753
        %2042 = vst [vmem:[%s203 + $0xf30] sm:$0xff] %v1754
        %2043 = vst [vmem:[%s203 + $0xf38] sm:$0xff] %v1755
        %2044 = vst [vmem:[%s203 + $0xf40] sm:$0xff] %v1756
        %2045 = vst [vmem:[%s203 + $0xf58] sm:$0xff] %v1757
        %2046 = vst [vmem:[%s203 + $0xf60] sm:$0xff] %v1758
        %2047 = vst [vmem:[%s203 + $0xf68] sm:$0xff] %v1759
        %2048 = vst [vmem:[%s203 + $0xf80] sm:$0xff] %v1760
        %2049 = vst [vmem:[%s203 + $0xf88] sm:$0xff] %v1761
        %2050 = vst [vmem:[%s203 + $0xf90] sm:$0xff] %v1762
        %2051 = vst [vmem:[%s203 + $0xfa8] sm:$0xff] %v1763
        %2052 = vst [vmem:[%s203 + $0xfb0] sm:$0xff] %v1764
        %2053 = vst [vmem:[%s203 + $0xfb8] sm:$0xff] %v1765
        %2054 = vst [vmem:[%s203 + $0xfd0] sm:$0xff] %v1766
        %2055 = vst [vmem:[%s203 + $0xfd8] sm:$0xff] %v1767
        %2056 = vst [vmem:[%s203 + $0xfe0] sm:$0xff] %v1768
        %2057 = vst [vmem:[%s203 + $0xff8] sm:$0xff] %v1769
        %2058 = vst [vmem:[%s203 + $0x1000] sm:$0xff] %v1770
        %2059 = vst [vmem:[%s203 + $0x1008] sm:$0xff] %v1771
        %2060 = vst [vmem:[%s203 + $0x1020] sm:$0xff] %v1772
        %2061 = vst [vmem:[%s203 + $0x1028] sm:$0xff] %v1773
        %2062 = vst [vmem:[%s203 + $0x1030] sm:$0xff] %v1774
        %2063 = vst [vmem:[%s203 + $0x1048] sm:$0xff] %v1775
        %2064 = vst [vmem:[%s203 + $0x1050] sm:$0xff] %v1776
        %2065 = vst [vmem:[%s203 + $0x1058] sm:$0xff] %v1777
        %2066 = vst [vmem:[%s203 + $0x1070] sm:$0xff] %v1778
        %2067 = vst [vmem:[%s203 + $0x1078] sm:$0xff] %v1779
        %2068 = vst [vmem:[%s203 + $0x1080] sm:$0xff] %v1780
        %2069 = vst [vmem:[%s203 + $0x1098] sm:$0xff] %v1781
        %2070 = vst [vmem:[%s203 + $0x10a0] sm:$0xff] %v1782
        %2071 = vst [vmem:[%s203 + $0x10a8] sm:$0xff] %v1783
        %2072 = vst [vmem:[%s203 + $0x10c0] sm:$0xff] %v1784
        %2073 = vst [vmem:[%s203 + $0x10c8] sm:$0xff] %v1785
        %2074 = vst [vmem:[%s203 + $0x10d0] sm:$0xff] %v1786
        %2075 = vst [vmem:[%s203 + $0x10e8] sm:$0xff] %v1787
        %2076 = vst [vmem:[%s203 + $0x10f0] sm:$0xff] %v1788
        %2077 = vst [vmem:[%s203 + $0x10f8] sm:$0xff] %v1789
        %2078 = vst [vmem:[%s203 + $0x1110] sm:$0xff] %v1790
        %2079 = vst [vmem:[%s203 + $0x1118] sm:$0xff] %v1791
        %2080 = vst [vmem:[%s203 + $0x1120] sm:$0xff] %v1792
        %2081 = vst [vmem:[%s203 + $0x1138] sm:$0xff] %v1793
        %2082 = vst [vmem:[%s203 + $0x1140] sm:$0xff] %v1794
        %2083 = vst [vmem:[%s203 + $0x1148] sm:$0xff] %v1795
        %2084 = vst [vmem:[%s203 + $0x1160] sm:$0xff] %v1796
        %2085 = vst [vmem:[%s203 + $0x1168] sm:$0xff] %v1797
        %2086 = vst [vmem:[%s203 + $0x1170] sm:$0xff] %v1798
        %2087 = vst [vmem:[%s203 + $0x1408] sm:$0xff] %v1799
        %2088 = vst [vmem:[%s203 + $0x1410] sm:$0xff] %v1800
        %2089 = vst [vmem:[%s203 + $0x1418] sm:$0xff] %v1801
        %2090 = vst [vmem:[%s203 + $0x1430] sm:$0xff] %v1802
        %2091 = vst [vmem:[%s203 + $0x1438] sm:$0xff] %v1803
        %2092 = vst [vmem:[%s203 + $0x1440] sm:$0xff] %v1804
        %2093 = vst [vmem:[%s203 + $0x1458] sm:$0xff] %v1805
        %2094 = vst [vmem:[%s203 + $0x1460] sm:$0xff] %v1806
        %2095 = vst [vmem:[%s203 + $0x1468] sm:$0xff] %v1807
        %2096 = vst [vmem:[%s203 + $0x1480] sm:$0xff] %v1808
        %2097 = vst [vmem:[%s203 + $0x1488] sm:$0xff] %v1809
        %2098 = vst [vmem:[%s203 + $0x1490] sm:$0xff] %v1810
        %2099 = vst [vmem:[%s203 + $0x14a8] sm:$0xff] %v1811
        %2100 = vst [vmem:[%s203 + $0x14b0] sm:$0xff] %v1812
        %2101 = vst [vmem:[%s203 + $0x14b8] sm:$0xff] %v1813
        %2102 = vst [vmem:[%s203 + $0x14d0] sm:$0xff] %v1814
        %2103 = vst [vmem:[%s203 + $0x14d8] sm:$0xff] %v1815
        %2104 = vst [vmem:[%s203 + $0x14e0] sm:$0xff] %v1816
        %2105 = vst [vmem:[%s203 + $0x14f8] sm:$0xff] %v1817
        %2106 = vst [vmem:[%s203 + $0x1500] sm:$0xff] %v1818
        %2107 = vst [vmem:[%s203 + $0x1508] sm:$0xff] %v1819
        %2108 = vst [vmem:[%s203 + $0x1520] sm:$0xff] %v1820
        %2109 = vst [vmem:[%s203 + $0x1528] sm:$0xff] %v1821
        %2110 = vst [vmem:[%s203 + $0x1530] sm:$0xff] %v1822
        %2111 = vst [vmem:[%s203 + $0x1548] sm:$0xff] %v1823
        %2112 = vst [vmem:[%s203 + $0x1550] sm:$0xff] %v1824
        %2113 = vst [vmem:[%s203 + $0x1558] sm:$0xff] %v1825
        %2114 = vst [vmem:[%s203 + $0x1570] sm:$0xff] %v1826
        %2115 = vst [vmem:[%s203 + $0x1578] sm:$0xff] %v1827
        %2116 = vst [vmem:[%s203 + $0x1580] sm:$0xff] %v1828
        %2117 = vst [vmem:[%s203 + $0x1598] sm:$0xff] %v1829
        %2118 = vst [vmem:[%s203 + $0x15a0] sm:$0xff] %v1830
        %2119 = vst [vmem:[%s203 + $0x15a8] sm:$0xff] %v1831
        %2120 = vst [vmem:[%s203 + $0x15c0] sm:$0xff] %v1832
        %2121 = vst [vmem:[%s203 + $0x15c8] sm:$0xff] %v1833
        %2122 = vst [vmem:[%s203 + $0x15d0] sm:$0xff] %v1834
        %2123 = vst [vmem:[%s203 + $0x15e8] sm:$0xff] %v1835
        %2124 = vst [vmem:[%s203 + $0x15f0] sm:$0xff] %v1836
        %2125 = vst [vmem:[%s203 + $0x15f8] sm:$0xff] %v1837
        %2126 = vst [vmem:[%s203 + $0x1610] sm:$0xff] %v1838
        %2127 = vst [vmem:[%s203 + $0x1618] sm:$0xff] %v1839
        %2128 = vst [vmem:[%s203 + $0x1620] sm:$0xff] %v1840
        %2129 = vst [vmem:[%s203 + $0x1638] sm:$0xff] %v1841
        %2130 = vst [vmem:[%s203 + $0x1640] sm:$0xff] %v1842
        %2131 = vst [vmem:[%s203 + $0x1648] sm:$0xff] %v1843
        %2132 = vst [vmem:[%s203 + $0x1660] sm:$0xff] %v1844
        %2133 = vst [vmem:[%s203 + $0x1668] sm:$0xff] %v1845
        %2134 = vst [vmem:[%s203 + $0x1670] sm:$0xff] %v1846
        %2135 = vst [vmem:[%s203 + $0x1688] sm:$0xff] %v1847
        %2136 = vst [vmem:[%s203 + $0x1690] sm:$0xff] %v1848
        %2137 = vst [vmem:[%s203 + $0x1698] sm:$0xff] %v1849
        %2138 = vst [vmem:[%s203 + $0x16b0] sm:$0xff] %v1850
        %2139 = vst [vmem:[%s203 + $0x16b8] sm:$0xff] %v1851
        %2140 = vst [vmem:[%s203 + $0x16c0] sm:$0xff] %v1852
        %2141 = vst [vmem:[%s203 + $0x16d8] sm:$0xff] %v1853
        %2142 = vst [vmem:[%s203 + $0x16e0] sm:$0xff] %v1854
        %2143 = vst [vmem:[%s203 + $0x16e8] sm:$0xff] %v1855
        %2144 = vst [vmem:[%s203 + $0x1700] sm:$0xff] %v1856
        %2145 = vst [vmem:[%s203 + $0x1708] sm:$0xff] %v1857
        %2146 = vst [vmem:[%s203 + $0x1710] sm:$0xff] %v1858
        %2147 = vst [vmem:[%s203 + $0x1728] sm:$0xff] %v1859
        %2148 = vst [vmem:[%s203 + $0x1730] sm:$0xff] %v1860
        %2149 = vst [vmem:[%s203 + $0x1738] sm:$0xff] %v1861
        %2150 = vst [vmem:[%s203 + $0x1750] sm:$0xff] %v1862
        %2151 = vst [vmem:[%s203 + $0x1758] sm:$0xff] %v1863
        %2152 = vst [vmem:[%s203 + $0x1760] sm:$0xff] %v1864
        %2153 = vst [vmem:[%s203 + $0x1778] sm:$0xff] %v1865
        %2154 = vst [vmem:[%s203 + $0x1780] sm:$0xff] %v1866
        %2155 = vst [vmem:[%s203 + $0x1788] sm:$0xff] %v1867
        %2156 = vst [vmem:[%s203 + $0x17a0] sm:$0xff] %v1868
        %2157 = vst [vmem:[%s203 + $0x17a8] sm:$0xff] %v1869
        %2158 = vst [vmem:[%s203 + $0x17b0] sm:$0xff] %v1870
        %s2159 = sand.u32 %s82, 1
        %s2160 = scalar_lea.sflag [#allocation4], %s2159
        %s2161 = sand.u32 %s82, 1
        %s2162 = smul.addr %s2161, 6400
        %s2163 = scalar_lea.vmem [#allocation7], %s2162
        // Predicated region
        $region37: #{tpu_custom_call.1} parent=27 // pred_check
          %p2164 = pneg %p92
        $region38: #{tpu_custom_call.1} parent=27 // pred_check_branch
          %2166 = sbr.rel (%p2164) target = $region40
        $region39: #{tpu_custom_call.1} parent=27 // pred_region
          %s2167 = smul.u32 4, %s22
          %s2169 = ssub.s32 102400, 102400
          %2170 = vsyncadd %s2160, %s2169
          %s2171 = smul.addr %s2167, 200
          %s2172 = smul.addr %s2171, 128
          %s2173 = scalar_lea.hbm %s2, %s2172
          %s2174 = sshll.u32 %s2163, 4
          %s2175 = int_to_ptr.vmem [resolvable:$true] %s2174
          %2180 = dma.vmem_to_hbm [thread:$0]  %s2175, 102400, %s2173, %s2160, 640, 640, 40
        $region40: #{tpu_custom_call.1} parent=27 // pred_fallthru
          _
      $region28: #{tpu_custom_call.1} parent=5 // pred_fallthru
        _
      %p2181 = scmp.le.s32.totalorder 2, %s17
      // Predicated region
      $region41: #{tpu_custom_call.1} parent=5 // pred_check
        %p2182 = pneg %p2181
      $region42: #{tpu_custom_call.1} parent=5 // pred_check_branch
        %2184 = sbr.rel (%p2182) target = $region44
      $region43: #{tpu_custom_call.1} parent=5 // pred_region
        %s2185 = ssub.s32 %s17, 2
        // Predicated region
        $region45: #{tpu_custom_call.1} parent=43 // pred_check
          %p2186 = pneg %p98
        $region46: #{tpu_custom_call.1} parent=43 // pred_check_branch
          %2188 = sbr.rel (%p2186) target = $region48
        $region47: #{tpu_custom_call.1} parent=43 // pred_region
          %s2189 = sand.u32 %s83, 1
          %s2190 = scalar_lea.sflag [#allocation4], %s2189
          %s2191 = sand.u32 %s83, 1
          %s2192 = smul.addr %s2191, 6400
          %s2193 = scalar_lea.vmem [#allocation7], %s2192
          %2194 = dma.done %s2190, 102400
        $region48: #{tpu_custom_call.1} parent=43 // pred_fallthru
          _
      $region44: #{tpu_custom_call.1} parent=5 // pred_fallthru
        _
    $region6: #{tpu_custom_call.1} parent=1 // loop_footer
      %s21 = sadd.s32 1, %s17
    $region7: #{tpu_custom_call.1} parent=1 // loop_footer_branch
      %16 = sbr.rel target = $region3
    $region8: #{tpu_custom_call.1} parent=1 // loop_exit
      _
    %2195 = vsyncpa [#allocation3], 1
    %s2196 = scalar_lea.sflag [#allocation3], 1
    %2197 = vsyncpa %s2196, 1
    %2198 = vsyncpa [#allocation6], 1
    %s2199 = scalar_lea.sflag [#allocation6], 1
    %2200 = vsyncpa %s2199, 1
    %2201 = vsyncpa [#allocation4], 1
    %s2202 = scalar_lea.sflag [#allocation4], 1
    %2203 = vsyncpa %s2202, 1

</llo_original>
